<compile_context>
chip_gen: v5e
topology: v5e:2x2
jax: 0.10.0
libtpu: 0.0.40
codegen_flags: <defaults>
</compile_context>

<pallas_src>
import numpy as np
import jax
import jax.numpy as jnp
from jax.experimental import pallas as pl
from jax.experimental.pallas import tpu as pltpu

L = 16                              # l in the PyTorch module
OUT_C = 64                          # conv1 output channels
POOL_H = (L - 1) // 2               # 7 : maxpool(2,2) output spatial size
CONV_ROWS = 2 * POOL_H              # 14: conv rows actually consumed by the pool
CONV_COLS = 2 * POOL_H              # 14: conv cols actually consumed by the pool
WIDE = CONV_COLS * OUT_C            # 896 = 7*128 : lane width of the conv matmul
POS = POOL_H * POOL_H               # 49 pooled spatial positions
PAD_POS = 52                        # pad 49 -> 52 so 52*64 = 3328 = 13*256
FLAT = OUT_C * POS                  # 3136
FLAT_PAD = PAD_POS * OUT_C          # 3328


# ----------------------------------------------------------------------------
# Fused kernel: conv + pool + ReLU + fc1 + ReLU + fc2 for one batch tile of BT
# ----------------------------------------------------------------------------
def fused_net_kernel(x_ref, m_ref, bc_ref, w1_ref, b1_ref, w2_ref, b2_ref,
                     o_ref, flat_ref):
    # x_ref : (14*BT, 32) bf16, row = i*BT + b, cols = [x[b,i,0:16], x[b,i+1,0:16]]
    # m     : (32, 896)   bf16 width-conv matrix, lane index = j*64 + c
    # bc    : (1, 64)     f32 conv bias
    # w1    : (3328, 64)  bf16 fc1 weight, row = (hh*7+ww)*64 + c (zero-padded tail)
    # b1    : (1, 64)     f32 fc1 bias
    # w2    : (64, 128)   bf16 fc2 weight (padded to 128 output lanes)
    # b2    : (1, 128)    f32 fc2 bias (padded)
    # o_ref : (BT, 128)   f32 (real logits in columns 0..1)
    # flat_ref : (BT, 3328) f32 scratch — flattened pooled activations
    bt = o_ref.shape[0]

    # Single K=32 width-conv matmul on the MXU:
    #   h[i*BT + b, j*64 + c] = conv[b, c, i, j]  (no bias), i,j in 0..13
    h = jnp.dot(x_ref[...], m_ref[...], preferred_element_type=jnp.float32)

    bias_b = jnp.broadcast_to(bc_ref[...], (bt, OUT_C))        # hoisted broadcast

    # Zero the padded tail of the flat activations (positions 48..51); position 48
    # is overwritten with real data below, 49..51 stay zero (match zero w1 rows).
    flat_ref[:, (POS - 1) * OUT_C:] = jnp.zeros(
        (bt, FLAT_PAD - (POS - 1) * OUT_C), jnp.float32)

    for ii in range(POOL_H):                                   # pooled row
        r0 = (2 * ii) * bt
        # height pool: max of two adjacent conv-row blocks (BT, 896)
        vrow = jnp.maximum(h[r0:r0 + bt, :], h[r0 + bt:r0 + 2 * bt, :])
        for jj in range(POOL_H):                               # pooled column
            c0 = (2 * jj) * OUT_C
            g = jnp.maximum(vrow[:, c0:c0 + OUT_C],
                            vrow[:, c0 + OUT_C:c0 + 2 * OUT_C])   # width pool
            g = jnp.maximum(g + bias_b, 0.0)                      # bias + ReLU once
            p = ii * POOL_H + jj
            flat_ref[:, p * OUT_C:(p + 1) * OUT_C] = g

    # fc1 as one K=3328 bf16 matmul (13 full-depth K=256 MXU passes).
    acc = jnp.dot(flat_ref[...].astype(jnp.bfloat16), w1_ref[...],
                  preferred_element_type=jnp.float32)          # (BT, 64)
    z = jnp.maximum(acc + b1_ref[...], 0.0)                    # fc1 bias + ReLU
    o_ref[...] = jnp.dot(z.astype(jnp.bfloat16), w2_ref[...],
                         preferred_element_type=jnp.float32) + b2_ref[...]


# ----------------------------------------------------------------------------
# Wrapper: layout plumbing + parameter re-layout only
# ----------------------------------------------------------------------------
def net_forward(x_nchw, params):
    conv_w, conv_b, fc1_w, fc1_b, fc2_w, fc2_b = params
    n = x_nchw.shape[0]

    # Batch tiling: BT images per grid step (128 keeps the tile well inside v7x's
    # 64 MiB VMEM; v5e/v6e could use 256).
    bt = 128 if n >= 128 else ((n + 7) // 8) * 8
    n_pad = ((n + bt - 1) // bt) * bt
    n_tiles = n_pad // bt

    # Input layout: (N,1,16,16) -> conv-row-pair rows of 32 = [x[b,i,:], x[b,i+1,:]]
    # for i = 0..13, then per-tile row-major (i*BT + b, k) slab, cast to bf16.
    x = x_nchw[:, 0].astype(jnp.float32)                       # (N, 16, 16)
    x = jnp.pad(x, ((0, n_pad - n), (0, 0), (0, 0)))
    xp = jnp.concatenate([x[:, 0:CONV_ROWS, :], x[:, 1:CONV_ROWS + 1, :]],
                         axis=-1)                              # (n_pad, 14, 32)
    x2d = (xp.reshape(n_tiles, bt, CONV_ROWS, 2 * L)
             .transpose(0, 2, 1, 3)                            # (tile, i, b, k)
             .reshape(n_tiles * CONV_ROWS * bt, 2 * L)
             .astype(jnp.bfloat16))

    # conv weights (64,1,2,2) -> single width-conv matrix M (32, 896):
    #   M[di*16 + jp, j*64 + c] = w[c,di,0]*[jp==j] + w[c,di,1]*[jp==j+1]
    w4 = conv_w.reshape(OUT_C, 2, 2).astype(jnp.float32)       # [c, di, dj]
    e0 = jnp.eye(L, CONV_COLS, dtype=jnp.float32)              # jp == j
    e1 = jnp.eye(L, CONV_COLS, k=-1, dtype=jnp.float32)        # jp == j + 1
    m_rows = []
    for di in range(2):
        m_di = (e0[:, :, None] * w4[:, di, 0][None, None, :]
                + e1[:, :, None] * w4[:, di, 1][None, None, :]).reshape(L, WIDE)
        m_rows.append(m_di)
    m = jnp.concatenate(m_rows, axis=0).astype(jnp.bfloat16)   # (32, 896)
    bc = conv_b.reshape(1, OUT_C).astype(jnp.float32)

    # fc1 weight (64, 3136) with PyTorch (c,h,w) flatten -> (3328, 64),
    # row index = (hh*7+ww)*64 + c, zero-padded rows 3136..3327.
    w1_flat = (fc1_w.reshape(OUT_C, OUT_C, POOL_H, POOL_H)     # [o, c, hh, ww]
                    .transpose(2, 3, 1, 0)                     # [hh, ww, c, o]
                    .reshape(FLAT, OUT_C))
    w1_flat = jnp.pad(w1_flat, ((0, FLAT_PAD - FLAT), (0, 0))).astype(jnp.bfloat16)
    b1 = fc1_b.reshape(1, OUT_C).astype(jnp.float32)
    w2_k = jnp.pad(fc2_w.T, ((0, 0), (0, 128 - 2))).astype(jnp.bfloat16)  # (64,128)
    b2 = jnp.pad(fc2_b.reshape(1, 2), ((0, 0), (0, 128 - 2))).astype(jnp.float32)

    flops = n_pad * (2 * CONV_ROWS * (2 * L) * WIDE
                     + 2 * FLAT_PAD * OUT_C + 2 * OUT_C * 128)
    bytes_accessed = (n_pad * (CONV_ROWS * 2 * L * 2 + 128 * 4)
                      + n_tiles * (2 * L * WIDE * 2
                                   + FLAT_PAD * OUT_C * 2
                                   + OUT_C * 128 * 2
                                   + (OUT_C + OUT_C + 128) * 4))

    out_pad = pl.pallas_call(
        fused_net_kernel,
        out_shape=jax.ShapeDtypeStruct((n_pad, 128), jnp.float32),
        grid=(n_tiles,),
        in_specs=[
            pl.BlockSpec((CONV_ROWS * bt, 2 * L), lambda t: (t, 0)),
            pl.BlockSpec((2 * L, WIDE), lambda t: (0, 0)),
            pl.BlockSpec((1, OUT_C), lambda t: (0, 0)),
            pl.BlockSpec((FLAT_PAD, OUT_C), lambda t: (0, 0)),
            pl.BlockSpec((1, OUT_C), lambda t: (0, 0)),
            pl.BlockSpec((OUT_C, 128), lambda t: (0, 0)),
            pl.BlockSpec((1, 128), lambda t: (0, 0)),
        ],
        out_specs=pl.BlockSpec((bt, 128), lambda t: (t, 0)),
        scratch_shapes=[pltpu.VMEM((bt, FLAT_PAD), jnp.float32)],
        compiler_params=pltpu.CompilerParams(
            dimension_semantics=("parallel",),
            vmem_limit_bytes=32 * 1024 * 1024),
        cost_estimate=pl.CostEstimate(flops=int(flops), transcendentals=0,
                                      bytes_accessed=int(bytes_accessed)),
    )(x2d, m, bc, w1_flat, b1, w2_k, b2)

    return out_pad[:n, :2]


# ----------------------------------------------------------------------------
# Pure-JAX reference mirroring the PyTorch forward (NCHW, (c,h,w) flatten)
# ----------------------------------------------------------------------------
def reference_forward(x_nchw, params):
    conv_w, conv_b, fc1_w, fc1_b, fc2_w, fc2_b = params
    n = x_nchw.shape[0]
    x = x_nchw[:, 0]                                           # (N, 16, 16)
    ch = L - 1                                                 # 15 conv output size
    taps = [x[:, di:di + ch, dj:dj + ch] for di in range(2) for dj in range(2)]
    p = jnp.stack(taps, axis=-1)                               # (N, 15, 15, 4)
    conv = jnp.einsum('nijt,ct->ncij', p, conv_w.reshape(OUT_C, 4)) \
        + conv_b[None, :, None, None]
    c = conv[:, :, :2 * POOL_H, :2 * POOL_H] \
        .reshape(n, OUT_C, POOL_H, 2, POOL_H, 2).max(axis=(3, 5))
    h = jnp.maximum(c, 0.0)
    flat = h.reshape(n, FLAT)                                  # (c, h, w) flatten
    h1 = jnp.maximum(flat @ fc1_w.T + fc1_b, 0.0)
    return h1 @ fc2_w.T + fc2_b


if __name__ == "__main__":
    key = jax.random.PRNGKey(0)
    ks = jax.random.split(key, 7)
    conv_w = 0.2 * jax.random.normal(ks[0], (OUT_C, 1, 2, 2), jnp.float32)
    conv_b = 0.1 * jax.random.normal(ks[1], (OUT_C,), jnp.float32)
    fc1_w = 0.02 * jax.random.normal(ks[2], (OUT_C, FLAT), jnp.float32)
    fc1_b = 0.1 * jax.random.normal(ks[3], (OUT_C,), jnp.float32)
    fc2_w = 0.1 * jax.random.normal(ks[4], (2, OUT_C), jnp.float32)
    fc2_b = 0.1 * jax.random.normal(ks[5], (2,), jnp.float32)
    params = (conv_w, conv_b, fc1_w, fc1_b, fc2_w, fc2_b)

    x = jax.random.normal(ks[6], (2, 1, L, L), jnp.float32)    # NCHW like PyTorch

    out = jax.block_until_ready(net_forward(x, params))
    ref = jax.block_until_ready(reference_forward(x, params))

    assert out.shape == (2, 2), out.shape
    # conv/fc paths run in bf16 on the MXU (f32 accumulation); within 1e-2 tolerance.
    assert np.allclose(np.asarray(out), np.asarray(ref), rtol=1e-2, atol=1e-2), (out, ref)

    print("KERNEL_OK")
</pallas_src>

<mosaic_0001>
module attributes {stable_mosaic.version = 11 : i64} {
  func.func @fused_net_kernel(%arg0: i32, %arg1: memref<112x32xbf16, #tpu.memory_space<vmem>>, %arg2: memref<32x896xbf16, #tpu.memory_space<vmem>>, %arg3: memref<1x64xf32, #tpu.memory_space<vmem>>, %arg4: memref<3328x64xbf16, #tpu.memory_space<vmem>>, %arg5: memref<1x64xf32, #tpu.memory_space<vmem>>, %arg6: memref<64x128xbf16, #tpu.memory_space<vmem>>, %arg7: memref<1x128xf32, #tpu.memory_space<vmem>>, %arg8: memref<8x128xf32, #tpu.memory_space<vmem>>, %arg9: memref<8x3328xf32, #tpu.memory_space<vmem>>) attributes {dimension_semantics = [#tpu.dimension_semantics<parallel>], iteration_bounds = array<i64: 1>, scalar_prefetch = 0 : i64, scratch_operands = 1 : i64, tpu.core_type = #tpu.core_type<tc>, window_params = [{transform_indices = @transform_0, window_bounds = array<i64: 112, 32>}, {pipeline_mode = #tpu.pipeline_mode<synchronous>, transform_indices = @transform_1, window_bounds = array<i64: 32, 896>}, {pipeline_mode = #tpu.pipeline_mode<synchronous>, transform_indices = @transform_2, window_bounds = array<i64: 1, 64>}, {pipeline_mode = #tpu.pipeline_mode<synchronous>, transform_indices = @transform_3, window_bounds = array<i64: 3328, 64>}, {pipeline_mode = #tpu.pipeline_mode<synchronous>, transform_indices = @transform_4, window_bounds = array<i64: 1, 64>}, {pipeline_mode = #tpu.pipeline_mode<synchronous>, transform_indices = @transform_5, window_bounds = array<i64: 64, 128>}, {pipeline_mode = #tpu.pipeline_mode<synchronous>, transform_indices = @transform_6, window_bounds = array<i64: 1, 128>}, {transform_indices = @transform_7, window_bounds = array<i64: 8, 128>}]} {
    %c0 = arith.constant 0 : index
    %c0_0 = arith.constant 0 : index
    %0 = vector.load %arg1[%c0, %c0_0] : memref<112x32xbf16, #tpu.memory_space<vmem>>, vector<112x32xbf16>
    %c0_1 = arith.constant 0 : index
    %c0_2 = arith.constant 0 : index
    %1 = vector.load %arg2[%c0_1, %c0_2] : memref<32x896xbf16, #tpu.memory_space<vmem>>, vector<32x896xbf16>
    %cst = arith.constant dense<0.000000e+00> : vector<112x896xf32>
    %2 = tpu.matmul %0, %1, %cst {dimension_numbers = #tpu.dot_dimension_numbers<[1], [0], [0], [1], [0, 0, 1, 1], [], []>} : vector<112x32xbf16>, vector<32x896xbf16>, vector<112x896xf32> -> vector<112x896xf32>
    %c0_3 = arith.constant 0 : index
    %c0_4 = arith.constant 0 : index
    %3 = vector.load %arg3[%c0_3, %c0_4] : memref<1x64xf32, #tpu.memory_space<vmem>>, vector<1x64xf32>
    %4 = vector.shape_cast %3 : vector<1x64xf32> to vector<1x64xf32>
    %5 = vector.broadcast %4 : vector<1x64xf32> to vector<8x64xf32>
    %cst_5 = arith.constant 0.000000e+00 : f32
    %6 = vector.broadcast %cst_5 : f32 to vector<8x256xf32>
    %c0_6 = arith.constant 0 : index
    %c3072 = arith.constant 3072 : index
    %7 = vector.load %arg9[%c0_6, %c3072] : memref<8x3328xf32, #tpu.memory_space<vmem>>, vector<8x256xf32>
    tpu.vector_store %arg9[%c0_6, %c3072], %6 {strides = array<i32>} : memref<8x3328xf32, #tpu.memory_space<vmem>>, vector<8x256xf32>,
    %8 = vector.extract_strided_slice %2 {offsets = [0, 0], sizes = [8, 896], strides = [1, 1]} : vector<112x896xf32> to vector<8x896xf32>
    %9 = vector.extract_strided_slice %2 {offsets = [8, 0], sizes = [8, 896], strides = [1, 1]} : vector<112x896xf32> to vector<8x896xf32>
    %10 = arith.maximumf %8, %9 : vector<8x896xf32>
    %11 = vector.extract_strided_slice %10 {offsets = [0, 0], sizes = [8, 64], strides = [1, 1]} : vector<8x896xf32> to vector<8x64xf32>
    %12 = vector.extract_strided_slice %10 {offsets = [0, 64], sizes = [8, 64], strides = [1, 1]} : vector<8x896xf32> to vector<8x64xf32>
    %13 = arith.maximumf %11, %12 : vector<8x64xf32>
    %14 = arith.addf %13, %5 : vector<8x64xf32>
    %cst_7 = arith.constant 0.000000e+00 : f32
    %15 = vector.broadcast %cst_7 : f32 to vector<8x64xf32>
    %16 = arith.maximumf %14, %15 : vector<8x64xf32>
    %c0_8 = arith.constant 0 : index
    %c0_9 = arith.constant 0 : index
    %17 = vector.load %arg9[%c0_8, %c0_9] : memref<8x3328xf32, #tpu.memory_space<vmem>>, vector<8x64xf32>
    tpu.vector_store %arg9[%c0_8, %c0_9], %16 {strides = array<i32>} : memref<8x3328xf32, #tpu.memory_space<vmem>>, vector<8x64xf32>,
    %18 = vector.extract_strided_slice %10 {offsets = [0, 128], sizes = [8, 64], strides = [1, 1]} : vector<8x896xf32> to vector<8x64xf32>
    %19 = vector.extract_strided_slice %10 {offsets = [0, 192], sizes = [8, 64], strides = [1, 1]} : vector<8x896xf32> to vector<8x64xf32>
    %20 = arith.maximumf %18, %19 : vector<8x64xf32>
    %21 = arith.addf %20, %5 : vector<8x64xf32>
    %cst_10 = arith.constant 0.000000e+00 : f32
    %22 = vector.broadcast %cst_10 : f32 to vector<8x64xf32>
    %23 = arith.maximumf %21, %22 : vector<8x64xf32>
    %c0_11 = arith.constant 0 : index
    %c64 = arith.constant 64 : index
    %24 = vector.load %arg9[%c0_11, %c64] : memref<8x3328xf32, #tpu.memory_space<vmem>>, vector<8x64xf32>
    tpu.vector_store %arg9[%c0_11, %c64], %23 {strides = array<i32>} : memref<8x3328xf32, #tpu.memory_space<vmem>>, vector<8x64xf32>,
    %25 = vector.extract_strided_slice %10 {offsets = [0, 256], sizes = [8, 64], strides = [1, 1]} : vector<8x896xf32> to vector<8x64xf32>
    %26 = vector.extract_strided_slice %10 {offsets = [0, 320], sizes = [8, 64], strides = [1, 1]} : vector<8x896xf32> to vector<8x64xf32>
    %27 = arith.maximumf %25, %26 : vector<8x64xf32>
    %28 = arith.addf %27, %5 : vector<8x64xf32>
    %cst_12 = arith.constant 0.000000e+00 : f32
    %29 = vector.broadcast %cst_12 : f32 to vector<8x64xf32>
    %30 = arith.maximumf %28, %29 : vector<8x64xf32>
    %c0_13 = arith.constant 0 : index
    %c128 = arith.constant 128 : index
    %31 = vector.load %arg9[%c0_13, %c128] : memref<8x3328xf32, #tpu.memory_space<vmem>>, vector<8x64xf32>
    tpu.vector_store %arg9[%c0_13, %c128], %30 {strides = array<i32>} : memref<8x3328xf32, #tpu.memory_space<vmem>>, vector<8x64xf32>,
    %32 = vector.extract_strided_slice %10 {offsets = [0, 384], sizes = [8, 64], strides = [1, 1]} : vector<8x896xf32> to vector<8x64xf32>
    %33 = vector.extract_strided_slice %10 {offsets = [0, 448], sizes = [8, 64], strides = [1, 1]} : vector<8x896xf32> to vector<8x64xf32>
    %34 = arith.maximumf %32, %33 : vector<8x64xf32>
    %35 = arith.addf %34, %5 : vector<8x64xf32>
    %cst_14 = arith.constant 0.000000e+00 : f32
    %36 = vector.broadcast %cst_14 : f32 to vector<8x64xf32>
    %37 = arith.maximumf %35, %36 : vector<8x64xf32>
    %c0_15 = arith.constant 0 : index
    %c192 = arith.constant 192 : index
    %38 = vector.load %arg9[%c0_15, %c192] : memref<8x3328xf32, #tpu.memory_space<vmem>>, vector<8x64xf32>
    tpu.vector_store %arg9[%c0_15, %c192], %37 {strides = array<i32>} : memref<8x3328xf32, #tpu.memory_space<vmem>>, vector<8x64xf32>,
    %39 = vector.extract_strided_slice %10 {offsets = [0, 512], sizes = [8, 64], strides = [1, 1]} : vector<8x896xf32> to vector<8x64xf32>
    %40 = vector.extract_strided_slice %10 {offsets = [0, 576], sizes = [8, 64], strides = [1, 1]} : vector<8x896xf32> to vector<8x64xf32>
    %41 = arith.maximumf %39, %40 : vector<8x64xf32>
    %42 = arith.addf %41, %5 : vector<8x64xf32>
    %cst_16 = arith.constant 0.000000e+00 : f32
    %43 = vector.broadcast %cst_16 : f32 to vector<8x64xf32>
    %44 = arith.maximumf %42, %43 : vector<8x64xf32>
    %c0_17 = arith.constant 0 : index
    %c256 = arith.constant 256 : index
    %45 = vector.load %arg9[%c0_17, %c256] : memref<8x3328xf32, #tpu.memory_space<vmem>>, vector<8x64xf32>
    tpu.vector_store %arg9[%c0_17, %c256], %44 {strides = array<i32>} : memref<8x3328xf32, #tpu.memory_space<vmem>>, vector<8x64xf32>,
    %46 = vector.extract_strided_slice %10 {offsets = [0, 640], sizes = [8, 64], strides = [1, 1]} : vector<8x896xf32> to vector<8x64xf32>
    %47 = vector.extract_strided_slice %10 {offsets = [0, 704], sizes = [8, 64], strides = [1, 1]} : vector<8x896xf32> to vector<8x64xf32>
    %48 = arith.maximumf %46, %47 : vector<8x64xf32>
    %49 = arith.addf %48, %5 : vector<8x64xf32>
    %cst_18 = arith.constant 0.000000e+00 : f32
    %50 = vector.broadcast %cst_18 : f32 to vector<8x64xf32>
    %51 = arith.maximumf %49, %50 : vector<8x64xf32>
    %c0_19 = arith.constant 0 : index
    %c320 = arith.constant 320 : index
    %52 = vector.load %arg9[%c0_19, %c320] : memref<8x3328xf32, #tpu.memory_space<vmem>>, vector<8x64xf32>
    tpu.vector_store %arg9[%c0_19, %c320], %51 {strides = array<i32>} : memref<8x3328xf32, #tpu.memory_space<vmem>>, vector<8x64xf32>,
    %53 = vector.extract_strided_slice %10 {offsets = [0, 768], sizes = [8, 64], strides = [1, 1]} : vector<8x896xf32> to vector<8x64xf32>
    %54 = vector.extract_strided_slice %10 {offsets = [0, 832], sizes = [8, 64], strides = [1, 1]} : vector<8x896xf32> to vector<8x64xf32>
    %55 = arith.maximumf %53, %54 : vector<8x64xf32>
    %56 = arith.addf %55, %5 : vector<8x64xf32>
    %cst_20 = arith.constant 0.000000e+00 : f32
    %57 = vector.broadcast %cst_20 : f32 to vector<8x64xf32>
    %58 = arith.maximumf %56, %57 : vector<8x64xf32>
    %c0_21 = arith.constant 0 : index
    %c384 = arith.constant 384 : index
    %59 = vector.load %arg9[%c0_21, %c384] : memref<8x3328xf32, #tpu.memory_space<vmem>>, vector<8x64xf32>
    tpu.vector_store %arg9[%c0_21, %c384], %58 {strides = array<i32>} : memref<8x3328xf32, #tpu.memory_space<vmem>>, vector<8x64xf32>,
    %60 = vector.extract_strided_slice %2 {offsets = [16, 0], sizes = [8, 896], strides = [1, 1]} : vector<112x896xf32> to vector<8x896xf32>
    %61 = vector.extract_strided_slice %2 {offsets = [24, 0], sizes = [8, 896], strides = [1, 1]} : vector<112x896xf32> to vector<8x896xf32>
    %62 = arith.maximumf %60, %61 : vector<8x896xf32>
    %63 = vector.extract_strided_slice %62 {offsets = [0, 0], sizes = [8, 64], strides = [1, 1]} : vector<8x896xf32> to vector<8x64xf32>
    %64 = vector.extract_strided_slice %62 {offsets = [0, 64], sizes = [8, 64], strides = [1, 1]} : vector<8x896xf32> to vector<8x64xf32>
    %65 = arith.maximumf %63, %64 : vector<8x64xf32>
    %66 = arith.addf %65, %5 : vector<8x64xf32>
    %cst_22 = arith.constant 0.000000e+00 : f32
    %67 = vector.broadcast %cst_22 : f32 to vector<8x64xf32>
    %68 = arith.maximumf %66, %67 : vector<8x64xf32>
    %c0_23 = arith.constant 0 : index
    %c448 = arith.constant 448 : index
    %69 = vector.load %arg9[%c0_23, %c448] : memref<8x3328xf32, #tpu.memory_space<vmem>>, vector<8x64xf32>
    tpu.vector_store %arg9[%c0_23, %c448], %68 {strides = array<i32>} : memref<8x3328xf32, #tpu.memory_space<vmem>>, vector<8x64xf32>,
    %70 = vector.extract_strided_slice %62 {offsets = [0, 128], sizes = [8, 64], strides = [1, 1]} : vector<8x896xf32> to vector<8x64xf32>
    %71 = vector.extract_strided_slice %62 {offsets = [0, 192], sizes = [8, 64], strides = [1, 1]} : vector<8x896xf32> to vector<8x64xf32>
    %72 = arith.maximumf %70, %71 : vector<8x64xf32>
    %73 = arith.addf %72, %5 : vector<8x64xf32>
    %cst_24 = arith.constant 0.000000e+00 : f32
    %74 = vector.broadcast %cst_24 : f32 to vector<8x64xf32>
    %75 = arith.maximumf %73, %74 : vector<8x64xf32>
    %c0_25 = arith.constant 0 : index
    %c512 = arith.constant 512 : index
    %76 = vector.load %arg9[%c0_25, %c512] : memref<8x3328xf32, #tpu.memory_space<vmem>>, vector<8x64xf32>
    tpu.vector_store %arg9[%c0_25, %c512], %75 {strides = array<i32>} : memref<8x3328xf32, #tpu.memory_space<vmem>>, vector<8x64xf32>,
    %77 = vector.extract_strided_slice %62 {offsets = [0, 256], sizes = [8, 64], strides = [1, 1]} : vector<8x896xf32> to vector<8x64xf32>
    %78 = vector.extract_strided_slice %62 {offsets = [0, 320], sizes = [8, 64], strides = [1, 1]} : vector<8x896xf32> to vector<8x64xf32>
    %79 = arith.maximumf %77, %78 : vector<8x64xf32>
    %80 = arith.addf %79, %5 : vector<8x64xf32>
    %cst_26 = arith.constant 0.000000e+00 : f32
    %81 = vector.broadcast %cst_26 : f32 to vector<8x64xf32>
    %82 = arith.maximumf %80, %81 : vector<8x64xf32>
    %c0_27 = arith.constant 0 : index
    %c576 = arith.constant 576 : index
    %83 = vector.load %arg9[%c0_27, %c576] : memref<8x3328xf32, #tpu.memory_space<vmem>>, vector<8x64xf32>
    tpu.vector_store %arg9[%c0_27, %c576], %82 {strides = array<i32>} : memref<8x3328xf32, #tpu.memory_space<vmem>>, vector<8x64xf32>,
    %84 = vector.extract_strided_slice %62 {offsets = [0, 384], sizes = [8, 64], strides = [1, 1]} : vector<8x896xf32> to vector<8x64xf32>
    %85 = vector.extract_strided_slice %62 {offsets = [0, 448], sizes = [8, 64], strides = [1, 1]} : vector<8x896xf32> to vector<8x64xf32>
    %86 = arith.maximumf %84, %85 : vector<8x64xf32>
    %87 = arith.addf %86, %5 : vector<8x64xf32>
    %cst_28 = arith.constant 0.000000e+00 : f32
    %88 = vector.broadcast %cst_28 : f32 to vector<8x64xf32>
    %89 = arith.maximumf %87, %88 : vector<8x64xf32>
    %c0_29 = arith.constant 0 : index
    %c640 = arith.constant 640 : index
    %90 = vector.load %arg9[%c0_29, %c640] : memref<8x3328xf32, #tpu.memory_space<vmem>>, vector<8x64xf32>
    tpu.vector_store %arg9[%c0_29, %c640], %89 {strides = array<i32>} : memref<8x3328xf32, #tpu.memory_space<vmem>>, vector<8x64xf32>,
    %91 = vector.extract_strided_slice %62 {offsets = [0, 512], sizes = [8, 64], strides = [1, 1]} : vector<8x896xf32> to vector<8x64xf32>
    %92 = vector.extract_strided_slice %62 {offsets = [0, 576], sizes = [8, 64], strides = [1, 1]} : vector<8x896xf32> to vector<8x64xf32>
    %93 = arith.maximumf %91, %92 : vector<8x64xf32>
    %94 = arith.addf %93, %5 : vector<8x64xf32>
    %cst_30 = arith.constant 0.000000e+00 : f32
    %95 = vector.broadcast %cst_30 : f32 to vector<8x64xf32>
    %96 = arith.maximumf %94, %95 : vector<8x64xf32>
    %c0_31 = arith.constant 0 : index
    %c704 = arith.constant 704 : index
    %97 = vector.load %arg9[%c0_31, %c704] : memref<8x3328xf32, #tpu.memory_space<vmem>>, vector<8x64xf32>
    tpu.vector_store %arg9[%c0_31, %c704], %96 {strides = array<i32>} : memref<8x3328xf32, #tpu.memory_space<vmem>>, vector<8x64xf32>,
    %98 = vector.extract_strided_slice %62 {offsets = [0, 640], sizes = [8, 64], strides = [1, 1]} : vector<8x896xf32> to vector<8x64xf32>
    %99 = vector.extract_strided_slice %62 {offsets = [0, 704], sizes = [8, 64], strides = [1, 1]} : vector<8x896xf32> to vector<8x64xf32>
    %100 = arith.maximumf %98, %99 : vector<8x64xf32>
    %101 = arith.addf %100, %5 : vector<8x64xf32>
    %cst_32 = arith.constant 0.000000e+00 : f32
    %102 = vector.broadcast %cst_32 : f32 to vector<8x64xf32>
    %103 = arith.maximumf %101, %102 : vector<8x64xf32>
    %c0_33 = arith.constant 0 : index
    %c768 = arith.constant 768 : index
    %104 = vector.load %arg9[%c0_33, %c768] : memref<8x3328xf32, #tpu.memory_space<vmem>>, vector<8x64xf32>
    tpu.vector_store %arg9[%c0_33, %c768], %103 {strides = array<i32>} : memref<8x3328xf32, #tpu.memory_space<vmem>>, vector<8x64xf32>,
    %105 = vector.extract_strided_slice %62 {offsets = [0, 768], sizes = [8, 64], strides = [1, 1]} : vector<8x896xf32> to vector<8x64xf32>
    %106 = vector.extract_strided_slice %62 {offsets = [0, 832], sizes = [8, 64], strides = [1, 1]} : vector<8x896xf32> to vector<8x64xf32>
    %107 = arith.maximumf %105, %106 : vector<8x64xf32>
    %108 = arith.addf %107, %5 : vector<8x64xf32>
    %cst_34 = arith.constant 0.000000e+00 : f32
    %109 = vector.broadcast %cst_34 : f32 to vector<8x64xf32>
    %110 = arith.maximumf %108, %109 : vector<8x64xf32>
    %c0_35 = arith.constant 0 : index
    %c832 = arith.constant 832 : index
    %111 = vector.load %arg9[%c0_35, %c832] : memref<8x3328xf32, #tpu.memory_space<vmem>>, vector<8x64xf32>
    tpu.vector_store %arg9[%c0_35, %c832], %110 {strides = array<i32>} : memref<8x3328xf32, #tpu.memory_space<vmem>>, vector<8x64xf32>,
    %112 = vector.extract_strided_slice %2 {offsets = [32, 0], sizes = [8, 896], strides = [1, 1]} : vector<112x896xf32> to vector<8x896xf32>
    %113 = vector.extract_strided_slice %2 {offsets = [40, 0], sizes = [8, 896], strides = [1, 1]} : vector<112x896xf32> to vector<8x896xf32>
    %114 = arith.maximumf %112, %113 : vector<8x896xf32>
    %115 = vector.extract_strided_slice %114 {offsets = [0, 0], sizes = [8, 64], strides = [1, 1]} : vector<8x896xf32> to vector<8x64xf32>
    %116 = vector.extract_strided_slice %114 {offsets = [0, 64], sizes = [8, 64], strides = [1, 1]} : vector<8x896xf32> to vector<8x64xf32>
    %117 = arith.maximumf %115, %116 : vector<8x64xf32>
    %118 = arith.addf %117, %5 : vector<8x64xf32>
    %cst_36 = arith.constant 0.000000e+00 : f32
    %119 = vector.broadcast %cst_36 : f32 to vector<8x64xf32>
    %120 = arith.maximumf %118, %119 : vector<8x64xf32>
    %c0_37 = arith.constant 0 : index
    %c896 = arith.constant 896 : index
    %121 = vector.load %arg9[%c0_37, %c896] : memref<8x3328xf32, #tpu.memory_space<vmem>>, vector<8x64xf32>
    tpu.vector_store %arg9[%c0_37, %c896], %120 {strides = array<i32>} : memref<8x3328xf32, #tpu.memory_space<vmem>>, vector<8x64xf32>,
    %122 = vector.extract_strided_slice %114 {offsets = [0, 128], sizes = [8, 64], strides = [1, 1]} : vector<8x896xf32> to vector<8x64xf32>
    %123 = vector.extract_strided_slice %114 {offsets = [0, 192], sizes = [8, 64], strides = [1, 1]} : vector<8x896xf32> to vector<8x64xf32>
    %124 = arith.maximumf %122, %123 : vector<8x64xf32>
    %125 = arith.addf %124, %5 : vector<8x64xf32>
    %cst_38 = arith.constant 0.000000e+00 : f32
    %126 = vector.broadcast %cst_38 : f32 to vector<8x64xf32>
    %127 = arith.maximumf %125, %126 : vector<8x64xf32>
    %c0_39 = arith.constant 0 : index
    %c960 = arith.constant 960 : index
    %128 = vector.load %arg9[%c0_39, %c960] : memref<8x3328xf32, #tpu.memory_space<vmem>>, vector<8x64xf32>
    tpu.vector_store %arg9[%c0_39, %c960], %127 {strides = array<i32>} : memref<8x3328xf32, #tpu.memory_space<vmem>>, vector<8x64xf32>,
    %129 = vector.extract_strided_slice %114 {offsets = [0, 256], sizes = [8, 64], strides = [1, 1]} : vector<8x896xf32> to vector<8x64xf32>
    %130 = vector.extract_strided_slice %114 {offsets = [0, 320], sizes = [8, 64], strides = [1, 1]} : vector<8x896xf32> to vector<8x64xf32>
    %131 = arith.maximumf %129, %130 : vector<8x64xf32>
    %132 = arith.addf %131, %5 : vector<8x64xf32>
    %cst_40 = arith.constant 0.000000e+00 : f32
    %133 = vector.broadcast %cst_40 : f32 to vector<8x64xf32>
    %134 = arith.maximumf %132, %133 : vector<8x64xf32>
    %c0_41 = arith.constant 0 : index
    %c1024 = arith.constant 1024 : index
    %135 = vector.load %arg9[%c0_41, %c1024] : memref<8x3328xf32, #tpu.memory_space<vmem>>, vector<8x64xf32>
    tpu.vector_store %arg9[%c0_41, %c1024], %134 {strides = array<i32>} : memref<8x3328xf32, #tpu.memory_space<vmem>>, vector<8x64xf32>,
    %136 = vector.extract_strided_slice %114 {offsets = [0, 384], sizes = [8, 64], strides = [1, 1]} : vector<8x896xf32> to vector<8x64xf32>
    %137 = vector.extract_strided_slice %114 {offsets = [0, 448], sizes = [8, 64], strides = [1, 1]} : vector<8x896xf32> to vector<8x64xf32>
    %138 = arith.maximumf %136, %137 : vector<8x64xf32>
    %139 = arith.addf %138, %5 : vector<8x64xf32>
    %cst_42 = arith.constant 0.000000e+00 : f32
    %140 = vector.broadcast %cst_42 : f32 to vector<8x64xf32>
    %141 = arith.maximumf %139, %140 : vector<8x64xf32>
    %c0_43 = arith.constant 0 : index
    %c1088 = arith.constant 1088 : index
    %142 = vector.load %arg9[%c0_43, %c1088] : memref<8x3328xf32, #tpu.memory_space<vmem>>, vector<8x64xf32>
    tpu.vector_store %arg9[%c0_43, %c1088], %141 {strides = array<i32>} : memref<8x3328xf32, #tpu.memory_space<vmem>>, vector<8x64xf32>,
    %143 = vector.extract_strided_slice %114 {offsets = [0, 512], sizes = [8, 64], strides = [1, 1]} : vector<8x896xf32> to vector<8x64xf32>
    %144 = vector.extract_strided_slice %114 {offsets = [0, 576], sizes = [8, 64], strides = [1, 1]} : vector<8x896xf32> to vector<8x64xf32>
    %145 = arith.maximumf %143, %144 : vector<8x64xf32>
    %146 = arith.addf %145, %5 : vector<8x64xf32>
    %cst_44 = arith.constant 0.000000e+00 : f32
    %147 = vector.broadcast %cst_44 : f32 to vector<8x64xf32>
    %148 = arith.maximumf %146, %147 : vector<8x64xf32>
    %c0_45 = arith.constant 0 : index
    %c1152 = arith.constant 1152 : index
    %149 = vector.load %arg9[%c0_45, %c1152] : memref<8x3328xf32, #tpu.memory_space<vmem>>, vector<8x64xf32>
    tpu.vector_store %arg9[%c0_45, %c1152], %148 {strides = array<i32>} : memref<8x3328xf32, #tpu.memory_space<vmem>>, vector<8x64xf32>,
    %150 = vector.extract_strided_slice %114 {offsets = [0, 640], sizes = [8, 64], strides = [1, 1]} : vector<8x896xf32> to vector<8x64xf32>
    %151 = vector.extract_strided_slice %114 {offsets = [0, 704], sizes = [8, 64], strides = [1, 1]} : vector<8x896xf32> to vector<8x64xf32>
    %152 = arith.maximumf %150, %151 : vector<8x64xf32>
    %153 = arith.addf %152, %5 : vector<8x64xf32>
    %cst_46 = arith.constant 0.000000e+00 : f32
    %154 = vector.broadcast %cst_46 : f32 to vector<8x64xf32>
    %155 = arith.maximumf %153, %154 : vector<8x64xf32>
    %c0_47 = arith.constant 0 : index
    %c1216 = arith.constant 1216 : index
    %156 = vector.load %arg9[%c0_47, %c1216] : memref<8x3328xf32, #tpu.memory_space<vmem>>, vector<8x64xf32>
    tpu.vector_store %arg9[%c0_47, %c1216], %155 {strides = array<i32>} : memref<8x3328xf32, #tpu.memory_space<vmem>>, vector<8x64xf32>,
    %157 = vector.extract_strided_slice %114 {offsets = [0, 768], sizes = [8, 64], strides = [1, 1]} : vector<8x896xf32> to vector<8x64xf32>
    %158 = vector.extract_strided_slice %114 {offsets = [0, 832], sizes = [8, 64], strides = [1, 1]} : vector<8x896xf32> to vector<8x64xf32>
    %159 = arith.maximumf %157, %158 : vector<8x64xf32>
    %160 = arith.addf %159, %5 : vector<8x64xf32>
    %cst_48 = arith.constant 0.000000e+00 : f32
    %161 = vector.broadcast %cst_48 : f32 to vector<8x64xf32>
    %162 = arith.maximumf %160, %161 : vector<8x64xf32>
    %c0_49 = arith.constant 0 : index
    %c1280 = arith.constant 1280 : index
    %163 = vector.load %arg9[%c0_49, %c1280] : memref<8x3328xf32, #tpu.memory_space<vmem>>, vector<8x64xf32>
    tpu.vector_store %arg9[%c0_49, %c1280], %162 {strides = array<i32>} : memref<8x3328xf32, #tpu.memory_space<vmem>>, vector<8x64xf32>,
    %164 = vector.extract_strided_slice %2 {offsets = [48, 0], sizes = [8, 896], strides = [1, 1]} : vector<112x896xf32> to vector<8x896xf32>
    %165 = vector.extract_strided_slice %2 {offsets = [56, 0], sizes = [8, 896], strides = [1, 1]} : vector<112x896xf32> to vector<8x896xf32>
    %166 = arith.maximumf %164, %165 : vector<8x896xf32>
    %167 = vector.extract_strided_slice %166 {offsets = [0, 0], sizes = [8, 64], strides = [1, 1]} : vector<8x896xf32> to vector<8x64xf32>
    %168 = vector.extract_strided_slice %166 {offsets = [0, 64], sizes = [8, 64], strides = [1, 1]} : vector<8x896xf32> to vector<8x64xf32>
    %169 = arith.maximumf %167, %168 : vector<8x64xf32>
    %170 = arith.addf %169, %5 : vector<8x64xf32>
    %cst_50 = arith.constant 0.000000e+00 : f32
    %171 = vector.broadcast %cst_50 : f32 to vector<8x64xf32>
    %172 = arith.maximumf %170, %171 : vector<8x64xf32>
    %c0_51 = arith.constant 0 : index
    %c1344 = arith.constant 1344 : index
    %173 = vector.load %arg9[%c0_51, %c1344] : memref<8x3328xf32, #tpu.memory_space<vmem>>, vector<8x64xf32>
    tpu.vector_store %arg9[%c0_51, %c1344], %172 {strides = array<i32>} : memref<8x3328xf32, #tpu.memory_space<vmem>>, vector<8x64xf32>,
    %174 = vector.extract_strided_slice %166 {offsets = [0, 128], sizes = [8, 64], strides = [1, 1]} : vector<8x896xf32> to vector<8x64xf32>
    %175 = vector.extract_strided_slice %166 {offsets = [0, 192], sizes = [8, 64], strides = [1, 1]} : vector<8x896xf32> to vector<8x64xf32>
    %176 = arith.maximumf %174, %175 : vector<8x64xf32>
    %177 = arith.addf %176, %5 : vector<8x64xf32>
    %cst_52 = arith.constant 0.000000e+00 : f32
    %178 = vector.broadcast %cst_52 : f32 to vector<8x64xf32>
    %179 = arith.maximumf %177, %178 : vector<8x64xf32>
    %c0_53 = arith.constant 0 : index
    %c1408 = arith.constant 1408 : index
    %180 = vector.load %arg9[%c0_53, %c1408] : memref<8x3328xf32, #tpu.memory_space<vmem>>, vector<8x64xf32>
    tpu.vector_store %arg9[%c0_53, %c1408], %179 {strides = array<i32>} : memref<8x3328xf32, #tpu.memory_space<vmem>>, vector<8x64xf32>,
    %181 = vector.extract_strided_slice %166 {offsets = [0, 256], sizes = [8, 64], strides = [1, 1]} : vector<8x896xf32> to vector<8x64xf32>
    %182 = vector.extract_strided_slice %166 {offsets = [0, 320], sizes = [8, 64], strides = [1, 1]} : vector<8x896xf32> to vector<8x64xf32>
    %183 = arith.maximumf %181, %182 : vector<8x64xf32>
    %184 = arith.addf %183, %5 : vector<8x64xf32>
    %cst_54 = arith.constant 0.000000e+00 : f32
    %185 = vector.broadcast %cst_54 : f32 to vector<8x64xf32>
    %186 = arith.maximumf %184, %185 : vector<8x64xf32>
    %c0_55 = arith.constant 0 : index
    %c1472 = arith.constant 1472 : index
    %187 = vector.load %arg9[%c0_55, %c1472] : memref<8x3328xf32, #tpu.memory_space<vmem>>, vector<8x64xf32>
    tpu.vector_store %arg9[%c0_55, %c1472], %186 {strides = array<i32>} : memref<8x3328xf32, #tpu.memory_space<vmem>>, vector<8x64xf32>,
    %188 = vector.extract_strided_slice %166 {offsets = [0, 384], sizes = [8, 64], strides = [1, 1]} : vector<8x896xf32> to vector<8x64xf32>
    %189 = vector.extract_strided_slice %166 {offsets = [0, 448], sizes = [8, 64], strides = [1, 1]} : vector<8x896xf32> to vector<8x64xf32>
    %190 = arith.maximumf %188, %189 : vector<8x64xf32>
    %191 = arith.addf %190, %5 : vector<8x64xf32>
    %cst_56 = arith.constant 0.000000e+00 : f32
    %192 = vector.broadcast %cst_56 : f32 to vector<8x64xf32>
    %193 = arith.maximumf %191, %192 : vector<8x64xf32>
    %c0_57 = arith.constant 0 : index
    %c1536 = arith.constant 1536 : index
    %194 = vector.load %arg9[%c0_57, %c1536] : memref<8x3328xf32, #tpu.memory_space<vmem>>, vector<8x64xf32>
    tpu.vector_store %arg9[%c0_57, %c1536], %193 {strides = array<i32>} : memref<8x3328xf32, #tpu.memory_space<vmem>>, vector<8x64xf32>,
    %195 = vector.extract_strided_slice %166 {offsets = [0, 512], sizes = [8, 64], strides = [1, 1]} : vector<8x896xf32> to vector<8x64xf32>
    %196 = vector.extract_strided_slice %166 {offsets = [0, 576], sizes = [8, 64], strides = [1, 1]} : vector<8x896xf32> to vector<8x64xf32>
    %197 = arith.maximumf %195, %196 : vector<8x64xf32>
    %198 = arith.addf %197, %5 : vector<8x64xf32>
    %cst_58 = arith.constant 0.000000e+00 : f32
    %199 = vector.broadcast %cst_58 : f32 to vector<8x64xf32>
    %200 = arith.maximumf %198, %199 : vector<8x64xf32>
    %c0_59 = arith.constant 0 : index
    %c1600 = arith.constant 1600 : index
    %201 = vector.load %arg9[%c0_59, %c1600] : memref<8x3328xf32, #tpu.memory_space<vmem>>, vector<8x64xf32>
    tpu.vector_store %arg9[%c0_59, %c1600], %200 {strides = array<i32>} : memref<8x3328xf32, #tpu.memory_space<vmem>>, vector<8x64xf32>,
    %202 = vector.extract_strided_slice %166 {offsets = [0, 640], sizes = [8, 64], strides = [1, 1]} : vector<8x896xf32> to vector<8x64xf32>
    %203 = vector.extract_strided_slice %166 {offsets = [0, 704], sizes = [8, 64], strides = [1, 1]} : vector<8x896xf32> to vector<8x64xf32>
    %204 = arith.maximumf %202, %203 : vector<8x64xf32>
    %205 = arith.addf %204, %5 : vector<8x64xf32>
    %cst_60 = arith.constant 0.000000e+00 : f32
    %206 = vector.broadcast %cst_60 : f32 to vector<8x64xf32>
    %207 = arith.maximumf %205, %206 : vector<8x64xf32>
    %c0_61 = arith.constant 0 : index
    %c1664 = arith.constant 1664 : index
    %208 = vector.load %arg9[%c0_61, %c1664] : memref<8x3328xf32, #tpu.memory_space<vmem>>, vector<8x64xf32>
    tpu.vector_store %arg9[%c0_61, %c1664], %207 {strides = array<i32>} : memref<8x3328xf32, #tpu.memory_space<vmem>>, vector<8x64xf32>,
    %209 = vector.extract_strided_slice %166 {offsets = [0, 768], sizes = [8, 64], strides = [1, 1]} : vector<8x896xf32> to vector<8x64xf32>
    %210 = vector.extract_strided_slice %166 {offsets = [0, 832], sizes = [8, 64], strides = [1, 1]} : vector<8x896xf32> to vector<8x64xf32>
    %211 = arith.maximumf %209, %210 : vector<8x64xf32>
    %212 = arith.addf %211, %5 : vector<8x64xf32>
    %cst_62 = arith.constant 0.000000e+00 : f32
    %213 = vector.broadcast %cst_62 : f32 to vector<8x64xf32>
    %214 = arith.maximumf %212, %213 : vector<8x64xf32>
    %c0_63 = arith.constant 0 : index
    %c1728 = arith.constant 1728 : index
    %215 = vector.load %arg9[%c0_63, %c1728] : memref<8x3328xf32, #tpu.memory_space<vmem>>, vector<8x64xf32>
    tpu.vector_store %arg9[%c0_63, %c1728], %214 {strides = array<i32>} : memref<8x3328xf32, #tpu.memory_space<vmem>>, vector<8x64xf32>,
    %216 = vector.extract_strided_slice %2 {offsets = [64, 0], sizes = [8, 896], strides = [1, 1]} : vector<112x896xf32> to vector<8x896xf32>
    %217 = vector.extract_strided_slice %2 {offsets = [72, 0], sizes = [8, 896], strides = [1, 1]} : vector<112x896xf32> to vector<8x896xf32>
    %218 = arith.maximumf %216, %217 : vector<8x896xf32>
    %219 = vector.extract_strided_slice %218 {offsets = [0, 0], sizes = [8, 64], strides = [1, 1]} : vector<8x896xf32> to vector<8x64xf32>
    %220 = vector.extract_strided_slice %218 {offsets = [0, 64], sizes = [8, 64], strides = [1, 1]} : vector<8x896xf32> to vector<8x64xf32>
    %221 = arith.maximumf %219, %220 : vector<8x64xf32>
    %222 = arith.addf %221, %5 : vector<8x64xf32>
    %cst_64 = arith.constant 0.000000e+00 : f32
    %223 = vector.broadcast %cst_64 : f32 to vector<8x64xf32>
    %224 = arith.maximumf %222, %223 : vector<8x64xf32>
    %c0_65 = arith.constant 0 : index
    %c1792 = arith.constant 1792 : index
    %225 = vector.load %arg9[%c0_65, %c1792] : memref<8x3328xf32, #tpu.memory_space<vmem>>, vector<8x64xf32>
    tpu.vector_store %arg9[%c0_65, %c1792], %224 {strides = array<i32>} : memref<8x3328xf32, #tpu.memory_space<vmem>>, vector<8x64xf32>,
    %226 = vector.extract_strided_slice %218 {offsets = [0, 128], sizes = [8, 64], strides = [1, 1]} : vector<8x896xf32> to vector<8x64xf32>
    %227 = vector.extract_strided_slice %218 {offsets = [0, 192], sizes = [8, 64], strides = [1, 1]} : vector<8x896xf32> to vector<8x64xf32>
    %228 = arith.maximumf %226, %227 : vector<8x64xf32>
    %229 = arith.addf %228, %5 : vector<8x64xf32>
    %cst_66 = arith.constant 0.000000e+00 : f32
    %230 = vector.broadcast %cst_66 : f32 to vector<8x64xf32>
    %231 = arith.maximumf %229, %230 : vector<8x64xf32>
    %c0_67 = arith.constant 0 : index
    %c1856 = arith.constant 1856 : index
    %232 = vector.load %arg9[%c0_67, %c1856] : memref<8x3328xf32, #tpu.memory_space<vmem>>, vector<8x64xf32>
    tpu.vector_store %arg9[%c0_67, %c1856], %231 {strides = array<i32>} : memref<8x3328xf32, #tpu.memory_space<vmem>>, vector<8x64xf32>,
    %233 = vector.extract_strided_slice %218 {offsets = [0, 256], sizes = [8, 64], strides = [1, 1]} : vector<8x896xf32> to vector<8x64xf32>
    %234 = vector.extract_strided_slice %218 {offsets = [0, 320], sizes = [8, 64], strides = [1, 1]} : vector<8x896xf32> to vector<8x64xf32>
    %235 = arith.maximumf %233, %234 : vector<8x64xf32>
    %236 = arith.addf %235, %5 : vector<8x64xf32>
    %cst_68 = arith.constant 0.000000e+00 : f32
    %237 = vector.broadcast %cst_68 : f32 to vector<8x64xf32>
    %238 = arith.maximumf %236, %237 : vector<8x64xf32>
    %c0_69 = arith.constant 0 : index
    %c1920 = arith.constant 1920 : index
    %239 = vector.load %arg9[%c0_69, %c1920] : memref<8x3328xf32, #tpu.memory_space<vmem>>, vector<8x64xf32>
    tpu.vector_store %arg9[%c0_69, %c1920], %238 {strides = array<i32>} : memref<8x3328xf32, #tpu.memory_space<vmem>>, vector<8x64xf32>,
    %240 = vector.extract_strided_slice %218 {offsets = [0, 384], sizes = [8, 64], strides = [1, 1]} : vector<8x896xf32> to vector<8x64xf32>
    %241 = vector.extract_strided_slice %218 {offsets = [0, 448], sizes = [8, 64], strides = [1, 1]} : vector<8x896xf32> to vector<8x64xf32>
    %242 = arith.maximumf %240, %241 : vector<8x64xf32>
    %243 = arith.addf %242, %5 : vector<8x64xf32>
    %cst_70 = arith.constant 0.000000e+00 : f32
    %244 = vector.broadcast %cst_70 : f32 to vector<8x64xf32>
    %245 = arith.maximumf %243, %244 : vector<8x64xf32>
    %c0_71 = arith.constant 0 : index
    %c1984 = arith.constant 1984 : index
    %246 = vector.load %arg9[%c0_71, %c1984] : memref<8x3328xf32, #tpu.memory_space<vmem>>, vector<8x64xf32>
    tpu.vector_store %arg9[%c0_71, %c1984], %245 {strides = array<i32>} : memref<8x3328xf32, #tpu.memory_space<vmem>>, vector<8x64xf32>,
    %247 = vector.extract_strided_slice %218 {offsets = [0, 512], sizes = [8, 64], strides = [1, 1]} : vector<8x896xf32> to vector<8x64xf32>
    %248 = vector.extract_strided_slice %218 {offsets = [0, 576], sizes = [8, 64], strides = [1, 1]} : vector<8x896xf32> to vector<8x64xf32>
    %249 = arith.maximumf %247, %248 : vector<8x64xf32>
    %250 = arith.addf %249, %5 : vector<8x64xf32>
    %cst_72 = arith.constant 0.000000e+00 : f32
    %251 = vector.broadcast %cst_72 : f32 to vector<8x64xf32>
    %252 = arith.maximumf %250, %251 : vector<8x64xf32>
    %c0_73 = arith.constant 0 : index
    %c2048 = arith.constant 2048 : index
    %253 = vector.load %arg9[%c0_73, %c2048] : memref<8x3328xf32, #tpu.memory_space<vmem>>, vector<8x64xf32>
    tpu.vector_store %arg9[%c0_73, %c2048], %252 {strides = array<i32>} : memref<8x3328xf32, #tpu.memory_space<vmem>>, vector<8x64xf32>,
    %254 = vector.extract_strided_slice %218 {offsets = [0, 640], sizes = [8, 64], strides = [1, 1]} : vector<8x896xf32> to vector<8x64xf32>
    %255 = vector.extract_strided_slice %218 {offsets = [0, 704], sizes = [8, 64], strides = [1, 1]} : vector<8x896xf32> to vector<8x64xf32>
    %256 = arith.maximumf %254, %255 : vector<8x64xf32>
    %257 = arith.addf %256, %5 : vector<8x64xf32>
    %cst_74 = arith.constant 0.000000e+00 : f32
    %258 = vector.broadcast %cst_74 : f32 to vector<8x64xf32>
    %259 = arith.maximumf %257, %258 : vector<8x64xf32>
    %c0_75 = arith.constant 0 : index
    %c2112 = arith.constant 2112 : index
    %260 = vector.load %arg9[%c0_75, %c2112] : memref<8x3328xf32, #tpu.memory_space<vmem>>, vector<8x64xf32>
    tpu.vector_store %arg9[%c0_75, %c2112], %259 {strides = array<i32>} : memref<8x3328xf32, #tpu.memory_space<vmem>>, vector<8x64xf32>,
    %261 = vector.extract_strided_slice %218 {offsets = [0, 768], sizes = [8, 64], strides = [1, 1]} : vector<8x896xf32> to vector<8x64xf32>
    %262 = vector.extract_strided_slice %218 {offsets = [0, 832], sizes = [8, 64], strides = [1, 1]} : vector<8x896xf32> to vector<8x64xf32>
    %263 = arith.maximumf %261, %262 : vector<8x64xf32>
    %264 = arith.addf %263, %5 : vector<8x64xf32>
    %cst_76 = arith.constant 0.000000e+00 : f32
    %265 = vector.broadcast %cst_76 : f32 to vector<8x64xf32>
    %266 = arith.maximumf %264, %265 : vector<8x64xf32>
    %c0_77 = arith.constant 0 : index
    %c2176 = arith.constant 2176 : index
    %267 = vector.load %arg9[%c0_77, %c2176] : memref<8x3328xf32, #tpu.memory_space<vmem>>, vector<8x64xf32>
    tpu.vector_store %arg9[%c0_77, %c2176], %266 {strides = array<i32>} : memref<8x3328xf32, #tpu.memory_space<vmem>>, vector<8x64xf32>,
    %268 = vector.extract_strided_slice %2 {offsets = [80, 0], sizes = [8, 896], strides = [1, 1]} : vector<112x896xf32> to vector<8x896xf32>
    %269 = vector.extract_strided_slice %2 {offsets = [88, 0], sizes = [8, 896], strides = [1, 1]} : vector<112x896xf32> to vector<8x896xf32>
    %270 = arith.maximumf %268, %269 : vector<8x896xf32>
    %271 = vector.extract_strided_slice %270 {offsets = [0, 0], sizes = [8, 64], strides = [1, 1]} : vector<8x896xf32> to vector<8x64xf32>
    %272 = vector.extract_strided_slice %270 {offsets = [0, 64], sizes = [8, 64], strides = [1, 1]} : vector<8x896xf32> to vector<8x64xf32>
    %273 = arith.maximumf %271, %272 : vector<8x64xf32>
    %274 = arith.addf %273, %5 : vector<8x64xf32>
    %cst_78 = arith.constant 0.000000e+00 : f32
    %275 = vector.broadcast %cst_78 : f32 to vector<8x64xf32>
    %276 = arith.maximumf %274, %275 : vector<8x64xf32>
    %c0_79 = arith.constant 0 : index
    %c2240 = arith.constant 2240 : index
    %277 = vector.load %arg9[%c0_79, %c2240] : memref<8x3328xf32, #tpu.memory_space<vmem>>, vector<8x64xf32>
    tpu.vector_store %arg9[%c0_79, %c2240], %276 {strides = array<i32>} : memref<8x3328xf32, #tpu.memory_space<vmem>>, vector<8x64xf32>,
    %278 = vector.extract_strided_slice %270 {offsets = [0, 128], sizes = [8, 64], strides = [1, 1]} : vector<8x896xf32> to vector<8x64xf32>
    %279 = vector.extract_strided_slice %270 {offsets = [0, 192], sizes = [8, 64], strides = [1, 1]} : vector<8x896xf32> to vector<8x64xf32>
    %280 = arith.maximumf %278, %279 : vector<8x64xf32>
    %281 = arith.addf %280, %5 : vector<8x64xf32>
    %cst_80 = arith.constant 0.000000e+00 : f32
    %282 = vector.broadcast %cst_80 : f32 to vector<8x64xf32>
    %283 = arith.maximumf %281, %282 : vector<8x64xf32>
    %c0_81 = arith.constant 0 : index
    %c2304 = arith.constant 2304 : index
    %284 = vector.load %arg9[%c0_81, %c2304] : memref<8x3328xf32, #tpu.memory_space<vmem>>, vector<8x64xf32>
    tpu.vector_store %arg9[%c0_81, %c2304], %283 {strides = array<i32>} : memref<8x3328xf32, #tpu.memory_space<vmem>>, vector<8x64xf32>,
    %285 = vector.extract_strided_slice %270 {offsets = [0, 256], sizes = [8, 64], strides = [1, 1]} : vector<8x896xf32> to vector<8x64xf32>
    %286 = vector.extract_strided_slice %270 {offsets = [0, 320], sizes = [8, 64], strides = [1, 1]} : vector<8x896xf32> to vector<8x64xf32>
    %287 = arith.maximumf %285, %286 : vector<8x64xf32>
    %288 = arith.addf %287, %5 : vector<8x64xf32>
    %cst_82 = arith.constant 0.000000e+00 : f32
    %289 = vector.broadcast %cst_82 : f32 to vector<8x64xf32>
    %290 = arith.maximumf %288, %289 : vector<8x64xf32>
    %c0_83 = arith.constant 0 : index
    %c2368 = arith.constant 2368 : index
    %291 = vector.load %arg9[%c0_83, %c2368] : memref<8x3328xf32, #tpu.memory_space<vmem>>, vector<8x64xf32>
    tpu.vector_store %arg9[%c0_83, %c2368], %290 {strides = array<i32>} : memref<8x3328xf32, #tpu.memory_space<vmem>>, vector<8x64xf32>,
    %292 = vector.extract_strided_slice %270 {offsets = [0, 384], sizes = [8, 64], strides = [1, 1]} : vector<8x896xf32> to vector<8x64xf32>
    %293 = vector.extract_strided_slice %270 {offsets = [0, 448], sizes = [8, 64], strides = [1, 1]} : vector<8x896xf32> to vector<8x64xf32>
    %294 = arith.maximumf %292, %293 : vector<8x64xf32>
    %295 = arith.addf %294, %5 : vector<8x64xf32>
    %cst_84 = arith.constant 0.000000e+00 : f32
    %296 = vector.broadcast %cst_84 : f32 to vector<8x64xf32>
    %297 = arith.maximumf %295, %296 : vector<8x64xf32>
    %c0_85 = arith.constant 0 : index
    %c2432 = arith.constant 2432 : index
    %298 = vector.load %arg9[%c0_85, %c2432] : memref<8x3328xf32, #tpu.memory_space<vmem>>, vector<8x64xf32>
    tpu.vector_store %arg9[%c0_85, %c2432], %297 {strides = array<i32>} : memref<8x3328xf32, #tpu.memory_space<vmem>>, vector<8x64xf32>,
    %299 = vector.extract_strided_slice %270 {offsets = [0, 512], sizes = [8, 64], strides = [1, 1]} : vector<8x896xf32> to vector<8x64xf32>
    %300 = vector.extract_strided_slice %270 {offsets = [0, 576], sizes = [8, 64], strides = [1, 1]} : vector<8x896xf32> to vector<8x64xf32>
    %301 = arith.maximumf %299, %300 : vector<8x64xf32>
    %302 = arith.addf %301, %5 : vector<8x64xf32>
    %cst_86 = arith.constant 0.000000e+00 : f32
    %303 = vector.broadcast %cst_86 : f32 to vector<8x64xf32>
    %304 = arith.maximumf %302, %303 : vector<8x64xf32>
    %c0_87 = arith.constant 0 : index
    %c2496 = arith.constant 2496 : index
    %305 = vector.load %arg9[%c0_87, %c2496] : memref<8x3328xf32, #tpu.memory_space<vmem>>, vector<8x64xf32>
    tpu.vector_store %arg9[%c0_87, %c2496], %304 {strides = array<i32>} : memref<8x3328xf32, #tpu.memory_space<vmem>>, vector<8x64xf32>,
    %306 = vector.extract_strided_slice %270 {offsets = [0, 640], sizes = [8, 64], strides = [1, 1]} : vector<8x896xf32> to vector<8x64xf32>
    %307 = vector.extract_strided_slice %270 {offsets = [0, 704], sizes = [8, 64], strides = [1, 1]} : vector<8x896xf32> to vector<8x64xf32>
    %308 = arith.maximumf %306, %307 : vector<8x64xf32>
    %309 = arith.addf %308, %5 : vector<8x64xf32>
    %cst_88 = arith.constant 0.000000e+00 : f32
    %310 = vector.broadcast %cst_88 : f32 to vector<8x64xf32>
    %311 = arith.maximumf %309, %310 : vector<8x64xf32>
    %c0_89 = arith.constant 0 : index
    %c2560 = arith.constant 2560 : index
    %312 = vector.load %arg9[%c0_89, %c2560] : memref<8x3328xf32, #tpu.memory_space<vmem>>, vector<8x64xf32>
    tpu.vector_store %arg9[%c0_89, %c2560], %311 {strides = array<i32>} : memref<8x3328xf32, #tpu.memory_space<vmem>>, vector<8x64xf32>,
    %313 = vector.extract_strided_slice %270 {offsets = [0, 768], sizes = [8, 64], strides = [1, 1]} : vector<8x896xf32> to vector<8x64xf32>
    %314 = vector.extract_strided_slice %270 {offsets = [0, 832], sizes = [8, 64], strides = [1, 1]} : vector<8x896xf32> to vector<8x64xf32>
    %315 = arith.maximumf %313, %314 : vector<8x64xf32>
    %316 = arith.addf %315, %5 : vector<8x64xf32>
    %cst_90 = arith.constant 0.000000e+00 : f32
    %317 = vector.broadcast %cst_90 : f32 to vector<8x64xf32>
    %318 = arith.maximumf %316, %317 : vector<8x64xf32>
    %c0_91 = arith.constant 0 : index
    %c2624 = arith.constant 2624 : index
    %319 = vector.load %arg9[%c0_91, %c2624] : memref<8x3328xf32, #tpu.memory_space<vmem>>, vector<8x64xf32>
    tpu.vector_store %arg9[%c0_91, %c2624], %318 {strides = array<i32>} : memref<8x3328xf32, #tpu.memory_space<vmem>>, vector<8x64xf32>,
    %320 = vector.extract_strided_slice %2 {offsets = [96, 0], sizes = [8, 896], strides = [1, 1]} : vector<112x896xf32> to vector<8x896xf32>
    %321 = vector.extract_strided_slice %2 {offsets = [104, 0], sizes = [8, 896], strides = [1, 1]} : vector<112x896xf32> to vector<8x896xf32>
    %322 = arith.maximumf %320, %321 : vector<8x896xf32>
    %323 = vector.extract_strided_slice %322 {offsets = [0, 0], sizes = [8, 64], strides = [1, 1]} : vector<8x896xf32> to vector<8x64xf32>
    %324 = vector.extract_strided_slice %322 {offsets = [0, 64], sizes = [8, 64], strides = [1, 1]} : vector<8x896xf32> to vector<8x64xf32>
    %325 = arith.maximumf %323, %324 : vector<8x64xf32>
    %326 = arith.addf %325, %5 : vector<8x64xf32>
    %cst_92 = arith.constant 0.000000e+00 : f32
    %327 = vector.broadcast %cst_92 : f32 to vector<8x64xf32>
    %328 = arith.maximumf %326, %327 : vector<8x64xf32>
    %c0_93 = arith.constant 0 : index
    %c2688 = arith.constant 2688 : index
    %329 = vector.load %arg9[%c0_93, %c2688] : memref<8x3328xf32, #tpu.memory_space<vmem>>, vector<8x64xf32>
    tpu.vector_store %arg9[%c0_93, %c2688], %328 {strides = array<i32>} : memref<8x3328xf32, #tpu.memory_space<vmem>>, vector<8x64xf32>,
    %330 = vector.extract_strided_slice %322 {offsets = [0, 128], sizes = [8, 64], strides = [1, 1]} : vector<8x896xf32> to vector<8x64xf32>
    %331 = vector.extract_strided_slice %322 {offsets = [0, 192], sizes = [8, 64], strides = [1, 1]} : vector<8x896xf32> to vector<8x64xf32>
    %332 = arith.maximumf %330, %331 : vector<8x64xf32>
    %333 = arith.addf %332, %5 : vector<8x64xf32>
    %cst_94 = arith.constant 0.000000e+00 : f32
    %334 = vector.broadcast %cst_94 : f32 to vector<8x64xf32>
    %335 = arith.maximumf %333, %334 : vector<8x64xf32>
    %c0_95 = arith.constant 0 : index
    %c2752 = arith.constant 2752 : index
    %336 = vector.load %arg9[%c0_95, %c2752] : memref<8x3328xf32, #tpu.memory_space<vmem>>, vector<8x64xf32>
    tpu.vector_store %arg9[%c0_95, %c2752], %335 {strides = array<i32>} : memref<8x3328xf32, #tpu.memory_space<vmem>>, vector<8x64xf32>,
    %337 = vector.extract_strided_slice %322 {offsets = [0, 256], sizes = [8, 64], strides = [1, 1]} : vector<8x896xf32> to vector<8x64xf32>
    %338 = vector.extract_strided_slice %322 {offsets = [0, 320], sizes = [8, 64], strides = [1, 1]} : vector<8x896xf32> to vector<8x64xf32>
    %339 = arith.maximumf %337, %338 : vector<8x64xf32>
    %340 = arith.addf %339, %5 : vector<8x64xf32>
    %cst_96 = arith.constant 0.000000e+00 : f32
    %341 = vector.broadcast %cst_96 : f32 to vector<8x64xf32>
    %342 = arith.maximumf %340, %341 : vector<8x64xf32>
    %c0_97 = arith.constant 0 : index
    %c2816 = arith.constant 2816 : index
    %343 = vector.load %arg9[%c0_97, %c2816] : memref<8x3328xf32, #tpu.memory_space<vmem>>, vector<8x64xf32>
    tpu.vector_store %arg9[%c0_97, %c2816], %342 {strides = array<i32>} : memref<8x3328xf32, #tpu.memory_space<vmem>>, vector<8x64xf32>,
    %344 = vector.extract_strided_slice %322 {offsets = [0, 384], sizes = [8, 64], strides = [1, 1]} : vector<8x896xf32> to vector<8x64xf32>
    %345 = vector.extract_strided_slice %322 {offsets = [0, 448], sizes = [8, 64], strides = [1, 1]} : vector<8x896xf32> to vector<8x64xf32>
    %346 = arith.maximumf %344, %345 : vector<8x64xf32>
    %347 = arith.addf %346, %5 : vector<8x64xf32>
    %cst_98 = arith.constant 0.000000e+00 : f32
    %348 = vector.broadcast %cst_98 : f32 to vector<8x64xf32>
    %349 = arith.maximumf %347, %348 : vector<8x64xf32>
    %c0_99 = arith.constant 0 : index
    %c2880 = arith.constant 2880 : index
    %350 = vector.load %arg9[%c0_99, %c2880] : memref<8x3328xf32, #tpu.memory_space<vmem>>, vector<8x64xf32>
    tpu.vector_store %arg9[%c0_99, %c2880], %349 {strides = array<i32>} : memref<8x3328xf32, #tpu.memory_space<vmem>>, vector<8x64xf32>,
    %351 = vector.extract_strided_slice %322 {offsets = [0, 512], sizes = [8, 64], strides = [1, 1]} : vector<8x896xf32> to vector<8x64xf32>
    %352 = vector.extract_strided_slice %322 {offsets = [0, 576], sizes = [8, 64], strides = [1, 1]} : vector<8x896xf32> to vector<8x64xf32>
    %353 = arith.maximumf %351, %352 : vector<8x64xf32>
    %354 = arith.addf %353, %5 : vector<8x64xf32>
    %cst_100 = arith.constant 0.000000e+00 : f32
    %355 = vector.broadcast %cst_100 : f32 to vector<8x64xf32>
    %356 = arith.maximumf %354, %355 : vector<8x64xf32>
    %c0_101 = arith.constant 0 : index
    %c2944 = arith.constant 2944 : index
    %357 = vector.load %arg9[%c0_101, %c2944] : memref<8x3328xf32, #tpu.memory_space<vmem>>, vector<8x64xf32>
    tpu.vector_store %arg9[%c0_101, %c2944], %356 {strides = array<i32>} : memref<8x3328xf32, #tpu.memory_space<vmem>>, vector<8x64xf32>,
    %358 = vector.extract_strided_slice %322 {offsets = [0, 640], sizes = [8, 64], strides = [1, 1]} : vector<8x896xf32> to vector<8x64xf32>
    %359 = vector.extract_strided_slice %322 {offsets = [0, 704], sizes = [8, 64], strides = [1, 1]} : vector<8x896xf32> to vector<8x64xf32>
    %360 = arith.maximumf %358, %359 : vector<8x64xf32>
    %361 = arith.addf %360, %5 : vector<8x64xf32>
    %cst_102 = arith.constant 0.000000e+00 : f32
    %362 = vector.broadcast %cst_102 : f32 to vector<8x64xf32>
    %363 = arith.maximumf %361, %362 : vector<8x64xf32>
    %c0_103 = arith.constant 0 : index
    %c3008 = arith.constant 3008 : index
    %364 = vector.load %arg9[%c0_103, %c3008] : memref<8x3328xf32, #tpu.memory_space<vmem>>, vector<8x64xf32>
    tpu.vector_store %arg9[%c0_103, %c3008], %363 {strides = array<i32>} : memref<8x3328xf32, #tpu.memory_space<vmem>>, vector<8x64xf32>,
    %365 = vector.extract_strided_slice %322 {offsets = [0, 768], sizes = [8, 64], strides = [1, 1]} : vector<8x896xf32> to vector<8x64xf32>
    %366 = vector.extract_strided_slice %322 {offsets = [0, 832], sizes = [8, 64], strides = [1, 1]} : vector<8x896xf32> to vector<8x64xf32>
    %367 = arith.maximumf %365, %366 : vector<8x64xf32>
    %368 = arith.addf %367, %5 : vector<8x64xf32>
    %cst_104 = arith.constant 0.000000e+00 : f32
    %369 = vector.broadcast %cst_104 : f32 to vector<8x64xf32>
    %370 = arith.maximumf %368, %369 : vector<8x64xf32>
    %c0_105 = arith.constant 0 : index
    %c3072_106 = arith.constant 3072 : index
    %371 = vector.load %arg9[%c0_105, %c3072_106] : memref<8x3328xf32, #tpu.memory_space<vmem>>, vector<8x64xf32>
    tpu.vector_store %arg9[%c0_105, %c3072_106], %370 {strides = array<i32>} : memref<8x3328xf32, #tpu.memory_space<vmem>>, vector<8x64xf32>,
    %c0_107 = arith.constant 0 : index
    %c0_108 = arith.constant 0 : index
    %372 = vector.load %arg9[%c0_107, %c0_108] : memref<8x3328xf32, #tpu.memory_space<vmem>>, vector<8x3328xf32>
    %373 = arith.truncf %372 : vector<8x3328xf32> to vector<8x3328xbf16>
    %c0_109 = arith.constant 0 : index
    %c0_110 = arith.constant 0 : index
    %374 = vector.load %arg4[%c0_109, %c0_110] : memref<3328x64xbf16, #tpu.memory_space<vmem>>, vector<3328x64xbf16>
    %cst_111 = arith.constant dense<0.000000e+00> : vector<8x64xf32>
    %375 = tpu.matmul %373, %374, %cst_111 {dimension_numbers = #tpu.dot_dimension_numbers<[1], [0], [0], [1], [0, 0, 1, 1], [], []>} : vector<8x3328xbf16>, vector<3328x64xbf16>, vector<8x64xf32> -> vector<8x64xf32>
    %c0_112 = arith.constant 0 : index
    %c0_113 = arith.constant 0 : index
    %376 = vector.load %arg5[%c0_112, %c0_113] : memref<1x64xf32, #tpu.memory_space<vmem>>, vector<1x64xf32>
    %377 = vector.broadcast %376 : vector<1x64xf32> to vector<8x64xf32>
    %378 = arith.addf %375, %377 : vector<8x64xf32>
    %cst_114 = arith.constant 0.000000e+00 : f32
    %379 = vector.broadcast %cst_114 : f32 to vector<8x64xf32>
    %380 = arith.maximumf %378, %379 : vector<8x64xf32>
    %381 = arith.truncf %380 : vector<8x64xf32> to vector<8x64xbf16>
    %c0_115 = arith.constant 0 : index
    %c0_116 = arith.constant 0 : index
    %382 = vector.load %arg6[%c0_115, %c0_116] : memref<64x128xbf16, #tpu.memory_space<vmem>>, vector<64x128xbf16>
    %cst_117 = arith.constant dense<0.000000e+00> : vector<8x128xf32>
    %383 = tpu.matmul %381, %382, %cst_117 {dimension_numbers = #tpu.dot_dimension_numbers<[1], [0], [0], [1], [0, 0, 1, 1], [], []>} : vector<8x64xbf16>, vector<64x128xbf16>, vector<8x128xf32> -> vector<8x128xf32>
    %c0_118 = arith.constant 0 : index
    %c0_119 = arith.constant 0 : index
    %384 = vector.load %arg7[%c0_118, %c0_119] : memref<1x128xf32, #tpu.memory_space<vmem>>, vector<1x128xf32>
    %385 = vector.broadcast %384 : vector<1x128xf32> to vector<8x128xf32>
    %386 = arith.addf %383, %385 : vector<8x128xf32>
    %c0_120 = arith.constant 0 : index
    %c0_121 = arith.constant 0 : index
    %387 = vector.load %arg8[%c0_120, %c0_121] : memref<8x128xf32, #tpu.memory_space<vmem>>, vector<8x128xf32>
    tpu.vector_store %arg8[%c0_120, %c0_121], %386 {strides = array<i32>} : memref<8x128xf32, #tpu.memory_space<vmem>>, vector<8x128xf32>,
    return
  }
  func.func @transform_0(%arg0: i32) -> (i32, i32) {
    %c0_i32 = arith.constant 0 : i32
    %c0_i32_0 = arith.constant 0 : i32
    return %arg0, %c0_i32 : i32, i32
  }
  func.func @transform_1(%arg0: i32) -> (i32, i32) {
    %c0_i32 = arith.constant 0 : i32
    %c0_i32_0 = arith.constant 0 : i32
    %c0_i32_1 = arith.constant 0 : i32
    return %c0_i32, %c0_i32_0 : i32, i32
  }
  func.func @transform_2(%arg0: i32) -> (i32, i32) {
    %c0_i32 = arith.constant 0 : i32
    %c0_i32_0 = arith.constant 0 : i32
    %c0_i32_1 = arith.constant 0 : i32
    return %c0_i32, %c0_i32_0 : i32, i32
  }
  func.func @transform_3(%arg0: i32) -> (i32, i32) {
    %c0_i32 = arith.constant 0 : i32
    %c0_i32_0 = arith.constant 0 : i32
    %c0_i32_1 = arith.constant 0 : i32
    return %c0_i32, %c0_i32_0 : i32, i32
  }
  func.func @transform_4(%arg0: i32) -> (i32, i32) {
    %c0_i32 = arith.constant 0 : i32
    %c0_i32_0 = arith.constant 0 : i32
    %c0_i32_1 = arith.constant 0 : i32
    return %c0_i32, %c0_i32_0 : i32, i32
  }
  func.func @transform_5(%arg0: i32) -> (i32, i32) {
    %c0_i32 = arith.constant 0 : i32
    %c0_i32_0 = arith.constant 0 : i32
    %c0_i32_1 = arith.constant 0 : i32
    return %c0_i32, %c0_i32_0 : i32, i32
  }
  func.func @transform_6(%arg0: i32) -> (i32, i32) {
    %c0_i32 = arith.constant 0 : i32
    %c0_i32_0 = arith.constant 0 : i32
    %c0_i32_1 = arith.constant 0 : i32
    return %c0_i32, %c0_i32_0 : i32, i32
  }
  func.func @transform_7(%arg0: i32) -> (i32, i32) {
    %c0_i32 = arith.constant 0 : i32
    %c0_i32_0 = arith.constant 0 : i32
    return %arg0, %c0_i32 : i32, i32
  }
}

</mosaic_0001>

<llo_original>
// kernel: tpu_custom_call.1
$region0: #{tpu_custom_call.1}
  #allocation0 [shape = 'u32[]', space=smem, size = 0x4, offset = 0x4, fixed_abs, tag = 'smem constant byte address 0x4 - core index']
  #allocation1 [shape = 'u32[72,128]{1,0:T(1,128)}', space=vmem, size = 0x9000, scoped, tag = 'internal scratch']
  #allocation2 [shape = 'f32[8,3328]{1,0:T(8,128)}', space=vmem, size = 0x1a000, scoped, tag = 'scratch operand']
  %s0 = inlined_call_operand.vmem [shape: bf16[112,32], index: 0, kind: input, shape index: {}]
  %s1 = inlined_call_operand.vmem [shape: bf16[32,896], index: 1, kind: input, shape index: {}]
  %s2 = inlined_call_operand.vmem [shape: f32[1,64], index: 2, kind: input, shape index: {}]
  %s3 = inlined_call_operand.vmem [shape: bf16[3328,64], index: 3, kind: input, shape index: {}]
  %s4 = inlined_call_operand.vmem [shape: f32[1,64], index: 4, kind: input, shape index: {}]
  %s5 = inlined_call_operand.vmem [shape: bf16[64,128], index: 5, kind: input, shape index: {}]
  %s6 = inlined_call_operand.vmem [shape: f32[1,128], index: 6, kind: input, shape index: {}]
  %s7 = inlined_call_operand.hbm [shape: f32[8,128], index: 7, kind: output, shape index: {}]
  %s8 = sld [smem:[#allocation0]]
  $region38: #{tpu_custom_call.1} parent=0
    _
  %s10 = ssub.s32 1, %s8
  %s11 = scalar_select 0, %s10, %s8
  $region1: #{tpu_custom_call.1} parent=0
    #allocation3 [shape = 'u8[4096]{0}', space=vmem, size = 0x1000, scoped, tag = 'output window, operand 0, single buffered']
    #allocation4 [shape = 's32[1]{0}', space=sflag, size = 0x4, scoped, tag = 'scoped memory for tpu_custom_call.1']
    %12 = vsyncpa [#allocation4], 0
    // Predicated region
    $region2: #{tpu_custom_call.1} parent=1 // pred_check
      _
    $region3: #{tpu_custom_call.1} parent=1 // pred_check_branch
      %14 = sbr.rel (0) target = $region5
    $region4: #{tpu_custom_call.1} parent=1 // pred_region
      _
    $region5: #{tpu_custom_call.1} parent=1 // pred_fallthru
      _
    // Predicated region
    $region6: #{tpu_custom_call.1} parent=1 // pred_check
      _
    $region7: #{tpu_custom_call.1} parent=1 // pred_check_branch
      %16 = sbr.rel (0) target = $region9
    $region8: #{tpu_custom_call.1} parent=1 // pred_region
      _
    $region9: #{tpu_custom_call.1} parent=1 // pred_fallthru
      _
    // Predicated region
    $region10: #{tpu_custom_call.1} parent=1 // pred_check
      _
    $region11: #{tpu_custom_call.1} parent=1 // pred_check_branch
      %18 = sbr.rel (0) target = $region13
    $region12: #{tpu_custom_call.1} parent=1 // pred_region
      _
    $region13: #{tpu_custom_call.1} parent=1 // pred_fallthru
      _
    // Predicated region
    $region14: #{tpu_custom_call.1} parent=1 // pred_check
      _
    $region15: #{tpu_custom_call.1} parent=1 // pred_check_branch
      %20 = sbr.rel (0) target = $region17
    $region16: #{tpu_custom_call.1} parent=1 // pred_region
      _
    $region17: #{tpu_custom_call.1} parent=1 // pred_fallthru
      _
    // Predicated region
    $region18: #{tpu_custom_call.1} parent=1 // pred_check
      _
    $region19: #{tpu_custom_call.1} parent=1 // pred_check_branch
      %22 = sbr.rel (0) target = $region21
    $region20: #{tpu_custom_call.1} parent=1 // pred_region
      _
    $region21: #{tpu_custom_call.1} parent=1 // pred_fallthru
      _
    // Predicated region
    $region22: #{tpu_custom_call.1} parent=1 // pred_check
      _
    $region23: #{tpu_custom_call.1} parent=1 // pred_check_branch
      %24 = sbr.rel (0) target = $region25
    $region24: #{tpu_custom_call.1} parent=1 // pred_region
      _
    $region25: #{tpu_custom_call.1} parent=1 // pred_fallthru
      _
    // Predicated region
    $region26: #{tpu_custom_call.1} parent=1 // pred_check
      _
    $region27: #{tpu_custom_call.1} parent=1 // pred_check_branch
      %26 = sbr.rel (0) target = $region29
    $region28: #{tpu_custom_call.1} parent=1 // pred_region
      _
    $region29: #{tpu_custom_call.1} parent=1 // pred_fallthru
      _
    %v28 = vld [vmem:[%s0] sm:$0xf]
    %v29 = vld [vmem:[%s0 + $0x4] sm:$0xf]
    %v30 = vld [vmem:[%s0 + $0x8] sm:$0xf]
    %v31 = vld [vmem:[%s0 + $0xc] sm:$0xf]
    %v32 = vld [vmem:[%s0 + $0x10] sm:$0xf]
    %v33 = vld [vmem:[%s0 + $0x14] sm:$0xf]
    %v34 = vld [vmem:[%s0 + $0x18] sm:$0xf]
    %v35 = vld [vmem:[%s0 + $0x1c] sm:$0xf]
    %v36 = vld [vmem:[%s0 + $0x20] sm:$0xf]
    %v37 = vld [vmem:[%s0 + $0x24] sm:$0xf]
    %v38 = vld [vmem:[%s0 + $0x28] sm:$0xf]
    %v39 = vld [vmem:[%s0 + $0x2c] sm:$0xf]
    %v40 = vld [vmem:[%s0 + $0x30] sm:$0xf]
    %v41 = vld [vmem:[%s0 + $0x34] sm:$0xf]
    %v42 = vld [vmem:[%s1] sm:$0xff]
    %v43 = vld [vmem:[%s1 + $0x8] sm:$0xff]
    %v44 = vld [vmem:[%s1 + $0x10] sm:$0xff]
    %v45 = vld [vmem:[%s1 + $0x18] sm:$0xf]
    %v46 = vld [vmem:[%s1 + $0x1c] sm:$0xff]
    %v47 = vld [vmem:[%s1 + $0x24] sm:$0xff]
    %v48 = vld [vmem:[%s1 + $0x2c] sm:$0xff]
    %v49 = vld [vmem:[%s1 + $0x34] sm:$0xf]
    %v50 = vld [vmem:[%s1 + $0x38] sm:$0xff]
    %v51 = vld [vmem:[%s1 + $0x40] sm:$0xff]
    %v52 = vld [vmem:[%s1 + $0x48] sm:$0xff]
    %v53 = vld [vmem:[%s1 + $0x50] sm:$0xf]
    %v54 = vld [vmem:[%s1 + $0x54] sm:$0xff]
    %v55 = vld [vmem:[%s1 + $0x5c] sm:$0xff]
    %v56 = vld [vmem:[%s1 + $0x64] sm:$0xff]
    %v57 = vld [vmem:[%s1 + $0x6c] sm:$0xf]
    %v72 = vunpack.c.l.b16 %v28
    %v73 = vunpack.c.l.b16 %v29
    %v74 = vunpack.c.l.b16 %v30
    %v75 = vunpack.c.l.b16 %v31
    %v76 = vunpack.c.l.b16 %v32
    %v77 = vunpack.c.l.b16 %v33
    %v78 = vunpack.c.l.b16 %v34
    %v79 = vunpack.c.l.b16 %v35
    %v80 = vunpack.c.l.b16 %v36
    %v81 = vunpack.c.l.b16 %v37
    %v82 = vunpack.c.l.b16 %v38
    %v83 = vunpack.c.l.b16 %v39
    %v84 = vunpack.c.l.b16 %v40
    %v85 = vunpack.c.l.b16 %v41
    %v86 = vpack.c.b16 %v73, %v72
    %v87 = vpack.c.b16 %v75, %v74
    %v88 = vpack.c.b16 %v77, %v76
    %v89 = vpack.c.b16 %v79, %v78
    %v90 = vpack.c.b16 %v81, %v80
    %v91 = vpack.c.b16 %v83, %v82
    %v92 = vpack.c.b16 %v85, %v84
    %v109 = vunpack.c.l.b16 %v42
    %v110 = vunpack.c.h.b16 %v42
    %v111 = vunpack.c.l.b16 %v43
    %v112 = vunpack.c.h.b16 %v43
    %v113 = vunpack.c.l.b16 %v44
    %v114 = vunpack.c.h.b16 %v44
    %v115 = vunpack.c.l.b16 %v45
    %v116 = vunpack.c.l.b16 %v46
    %v117 = vunpack.c.h.b16 %v46
    %v118 = vunpack.c.l.b16 %v47
    %v119 = vunpack.c.h.b16 %v47
    %v120 = vunpack.c.l.b16 %v48
    %v121 = vunpack.c.h.b16 %v48
    %v122 = vunpack.c.l.b16 %v49
    %v123 = vunpack.c.l.b16 %v50
    %v124 = vunpack.c.h.b16 %v50
    %v125 = vunpack.c.l.b16 %v51
    %v126 = vunpack.c.h.b16 %v51
    %v127 = vunpack.c.l.b16 %v52
    %v128 = vunpack.c.h.b16 %v52
    %v129 = vunpack.c.l.b16 %v53
    %v130 = vunpack.c.l.b16 %v54
    %v131 = vunpack.c.h.b16 %v54
    %v132 = vunpack.c.l.b16 %v55
    %v133 = vunpack.c.h.b16 %v55
    %v134 = vunpack.c.l.b16 %v56
    %v135 = vunpack.c.h.b16 %v56
    %v136 = vunpack.c.l.b16 %v57
    %v137 = vpack.c.b16 %v116, %v109
    %v138 = vpack.c.b16 %v117, %v110
    %v139 = vpack.c.b16 %v118, %v111
    %v140 = vpack.c.b16 %v119, %v112
    %v141 = vpack.c.b16 %v120, %v113
    %v142 = vpack.c.b16 %v121, %v114
    %v143 = vpack.c.b16 %v122, %v115
    %v144 = vpack.c.b16 %v130, %v123
    %v145 = vpack.c.b16 %v131, %v124
    %v146 = vpack.c.b16 %v132, %v125
    %v147 = vpack.c.b16 %v133, %v126
    %v148 = vpack.c.b16 %v134, %v127
    %v149 = vpack.c.b16 %v135, %v128
    %v150 = vpack.c.b16 %v136, %v129
    %vm165 = vcmask 261120
    %v167 = vsel %vm165, %v86, 0
    %v170 = vsel %vm165, %v87, 0
    %v173 = vsel %vm165, %v88, 0
    %v176 = vsel %vm165, %v89, 0
    %v179 = vsel %vm165, %v90, 0
    %v182 = vsel %vm165, %v91, 0
    %v185 = vsel %vm165, %v92, 0
    %187 = vmatpush.bf16.msra.mxu0 0
    %188 = vmatpush.bf16.msra.mxu0 0
    %189 = vmatpush.bf16.msra.mxu0 0
    %190 = vmatpush.bf16.msra.mxu0 0
    %191 = vmatpush.bf16.msra.mxu0 0
    %192 = vmatpush.bf16.msra.mxu0 0
    %193 = vmatpush.bf16.msra.mxu0 %v144
    %194 = vmatpush.bf16.msra.mxu0 %v137
    %195 = vmatmul.bf16.gmra.mxu0 %v167
    %v196 = vpop.f32.mrf.mxu0
    %v197 = vadd.f32 0.0, %v196
    %v198 = vpop.f32.mrf.mxu0
    %v199 = vadd.f32 0.0, %v198
    %200 = vmatmul.bf16.gmra.mxu0 %v170
    %v201 = vpop.f32.mrf.mxu0
    %v202 = vadd.f32 0.0, %v201
    %v203 = vpop.f32.mrf.mxu0
    %v204 = vadd.f32 0.0, %v203
    %205 = vmatmul.bf16.gmra.mxu0 %v173
    %v206 = vpop.f32.mrf.mxu0
    %v207 = vadd.f32 0.0, %v206
    %v208 = vpop.f32.mrf.mxu0
    %v209 = vadd.f32 0.0, %v208
    %210 = vmatmul.bf16.gmra.mxu0 %v176
    %v211 = vpop.f32.mrf.mxu0
    %v212 = vadd.f32 0.0, %v211
    %v213 = vpop.f32.mrf.mxu0
    %v214 = vadd.f32 0.0, %v213
    %215 = vmatmul.bf16.gmra.mxu0 %v179
    %v216 = vpop.f32.mrf.mxu0
    %v217 = vadd.f32 0.0, %v216
    %v218 = vpop.f32.mrf.mxu0
    %v219 = vadd.f32 0.0, %v218
    %220 = vmatmul.bf16.gmra.mxu0 %v182
    %v221 = vpop.f32.mrf.mxu0
    %v222 = vadd.f32 0.0, %v221
    %v223 = vpop.f32.mrf.mxu0
    %v224 = vadd.f32 0.0, %v223
    %225 = vmatmul.bf16.gmra.mxu0 %v185
    %v226 = vpop.f32.mrf.mxu0
    %v227 = vadd.f32 0.0, %v226
    %v228 = vpop.f32.mrf.mxu0
    %v229 = vadd.f32 0.0, %v228
    %230 = vdwg.mxu0
    %231 = vmatpush.bf16.msra.mxu0 0
    %232 = vmatpush.bf16.msra.mxu0 0
    %233 = vmatpush.bf16.msra.mxu0 0
    %234 = vmatpush.bf16.msra.mxu0 0
    %235 = vmatpush.bf16.msra.mxu0 0
    %236 = vmatpush.bf16.msra.mxu0 0
    %237 = vmatpush.bf16.msra.mxu0 %v145
    %238 = vmatpush.bf16.msra.mxu0 %v138
    %239 = vmatmul.bf16.gmra.mxu0 %v167
    %v240 = vpop.f32.mrf.mxu0
    %v241 = vadd.f32 0.0, %v240
    %v242 = vpop.f32.mrf.mxu0
    %v243 = vadd.f32 0.0, %v242
    %244 = vmatmul.bf16.gmra.mxu0 %v170
    %v245 = vpop.f32.mrf.mxu0
    %v246 = vadd.f32 0.0, %v245
    %v247 = vpop.f32.mrf.mxu0
    %v248 = vadd.f32 0.0, %v247
    %249 = vmatmul.bf16.gmra.mxu0 %v173
    %v250 = vpop.f32.mrf.mxu0
    %v251 = vadd.f32 0.0, %v250
    %v252 = vpop.f32.mrf.mxu0
    %v253 = vadd.f32 0.0, %v252
    %254 = vmatmul.bf16.gmra.mxu0 %v176
    %v255 = vpop.f32.mrf.mxu0
    %v256 = vadd.f32 0.0, %v255
    %v257 = vpop.f32.mrf.mxu0
    %v258 = vadd.f32 0.0, %v257
    %259 = vmatmul.bf16.gmra.mxu0 %v179
    %v260 = vpop.f32.mrf.mxu0
    %v261 = vadd.f32 0.0, %v260
    %v262 = vpop.f32.mrf.mxu0
    %v263 = vadd.f32 0.0, %v262
    %264 = vmatmul.bf16.gmra.mxu0 %v182
    %v265 = vpop.f32.mrf.mxu0
    %v266 = vadd.f32 0.0, %v265
    %v267 = vpop.f32.mrf.mxu0
    %v268 = vadd.f32 0.0, %v267
    %269 = vmatmul.bf16.gmra.mxu0 %v185
    %v270 = vpop.f32.mrf.mxu0
    %v271 = vadd.f32 0.0, %v270
    %v272 = vpop.f32.mrf.mxu0
    %v273 = vadd.f32 0.0, %v272
    %274 = vdwg.mxu0
    %275 = vmatpush.bf16.msra.mxu0 0
    %276 = vmatpush.bf16.msra.mxu0 0
    %277 = vmatpush.bf16.msra.mxu0 0
    %278 = vmatpush.bf16.msra.mxu0 0
    %279 = vmatpush.bf16.msra.mxu0 0
    %280 = vmatpush.bf16.msra.mxu0 0
    %281 = vmatpush.bf16.msra.mxu0 %v146
    %282 = vmatpush.bf16.msra.mxu0 %v139
    %283 = vmatmul.bf16.gmra.mxu0 %v167
    %v284 = vpop.f32.mrf.mxu0
    %v285 = vadd.f32 0.0, %v284
    %v286 = vpop.f32.mrf.mxu0
    %v287 = vadd.f32 0.0, %v286
    %288 = vmatmul.bf16.gmra.mxu0 %v170
    %v289 = vpop.f32.mrf.mxu0
    %v290 = vadd.f32 0.0, %v289
    %v291 = vpop.f32.mrf.mxu0
    %v292 = vadd.f32 0.0, %v291
    %293 = vmatmul.bf16.gmra.mxu0 %v173
    %v294 = vpop.f32.mrf.mxu0
    %v295 = vadd.f32 0.0, %v294
    %v296 = vpop.f32.mrf.mxu0
    %v297 = vadd.f32 0.0, %v296
    %298 = vmatmul.bf16.gmra.mxu0 %v176
    %v299 = vpop.f32.mrf.mxu0
    %v300 = vadd.f32 0.0, %v299
    %v301 = vpop.f32.mrf.mxu0
    %v302 = vadd.f32 0.0, %v301
    %303 = vmatmul.bf16.gmra.mxu0 %v179
    %v304 = vpop.f32.mrf.mxu0
    %v305 = vadd.f32 0.0, %v304
    %v306 = vpop.f32.mrf.mxu0
    %v307 = vadd.f32 0.0, %v306
    %308 = vmatmul.bf16.gmra.mxu0 %v182
    %v309 = vpop.f32.mrf.mxu0
    %v310 = vadd.f32 0.0, %v309
    %v311 = vpop.f32.mrf.mxu0
    %v312 = vadd.f32 0.0, %v311
    %313 = vmatmul.bf16.gmra.mxu0 %v185
    %v314 = vpop.f32.mrf.mxu0
    %v315 = vadd.f32 0.0, %v314
    %v316 = vpop.f32.mrf.mxu0
    %v317 = vadd.f32 0.0, %v316
    %318 = vdwg.mxu0
    %319 = vmatpush.bf16.msra.mxu0 0
    %320 = vmatpush.bf16.msra.mxu0 0
    %321 = vmatpush.bf16.msra.mxu0 0
    %322 = vmatpush.bf16.msra.mxu0 0
    %323 = vmatpush.bf16.msra.mxu0 0
    %324 = vmatpush.bf16.msra.mxu0 0
    %325 = vmatpush.bf16.msra.mxu0 %v147
    %326 = vmatpush.bf16.msra.mxu0 %v140
    %327 = vmatmul.bf16.gmra.mxu0 %v167
    %v328 = vpop.f32.mrf.mxu0
    %v329 = vadd.f32 0.0, %v328
    %v330 = vpop.f32.mrf.mxu0
    %v331 = vadd.f32 0.0, %v330
    %332 = vmatmul.bf16.gmra.mxu0 %v170
    %v333 = vpop.f32.mrf.mxu0
    %v334 = vadd.f32 0.0, %v333
    %v335 = vpop.f32.mrf.mxu0
    %v336 = vadd.f32 0.0, %v335
    %337 = vmatmul.bf16.gmra.mxu0 %v173
    %v338 = vpop.f32.mrf.mxu0
    %v339 = vadd.f32 0.0, %v338
    %v340 = vpop.f32.mrf.mxu0
    %v341 = vadd.f32 0.0, %v340
    %342 = vmatmul.bf16.gmra.mxu0 %v176
    %v343 = vpop.f32.mrf.mxu0
    %v344 = vadd.f32 0.0, %v343
    %v345 = vpop.f32.mrf.mxu0
    %v346 = vadd.f32 0.0, %v345
    %347 = vmatmul.bf16.gmra.mxu0 %v179
    %v348 = vpop.f32.mrf.mxu0
    %v349 = vadd.f32 0.0, %v348
    %v350 = vpop.f32.mrf.mxu0
    %v351 = vadd.f32 0.0, %v350
    %352 = vmatmul.bf16.gmra.mxu0 %v182
    %v353 = vpop.f32.mrf.mxu0
    %v354 = vadd.f32 0.0, %v353
    %v355 = vpop.f32.mrf.mxu0
    %v356 = vadd.f32 0.0, %v355
    %357 = vmatmul.bf16.gmra.mxu0 %v185
    %v358 = vpop.f32.mrf.mxu0
    %v359 = vadd.f32 0.0, %v358
    %v360 = vpop.f32.mrf.mxu0
    %v361 = vadd.f32 0.0, %v360
    %362 = vdwg.mxu0
    %363 = vmatpush.bf16.msra.mxu0 0
    %364 = vmatpush.bf16.msra.mxu0 0
    %365 = vmatpush.bf16.msra.mxu0 0
    %366 = vmatpush.bf16.msra.mxu0 0
    %367 = vmatpush.bf16.msra.mxu0 0
    %368 = vmatpush.bf16.msra.mxu0 0
    %369 = vmatpush.bf16.msra.mxu0 %v148
    %370 = vmatpush.bf16.msra.mxu0 %v141
    %371 = vmatmul.bf16.gmra.mxu0 %v167
    %v372 = vpop.f32.mrf.mxu0
    %v373 = vadd.f32 0.0, %v372
    %v374 = vpop.f32.mrf.mxu0
    %v375 = vadd.f32 0.0, %v374
    %376 = vmatmul.bf16.gmra.mxu0 %v170
    %v377 = vpop.f32.mrf.mxu0
    %v378 = vadd.f32 0.0, %v377
    %v379 = vpop.f32.mrf.mxu0
    %v380 = vadd.f32 0.0, %v379
    %381 = vmatmul.bf16.gmra.mxu0 %v173
    %v382 = vpop.f32.mrf.mxu0
    %v383 = vadd.f32 0.0, %v382
    %v384 = vpop.f32.mrf.mxu0
    %v385 = vadd.f32 0.0, %v384
    %386 = vmatmul.bf16.gmra.mxu0 %v176
    %v387 = vpop.f32.mrf.mxu0
    %v388 = vadd.f32 0.0, %v387
    %v389 = vpop.f32.mrf.mxu0
    %v390 = vadd.f32 0.0, %v389
    %391 = vmatmul.bf16.gmra.mxu0 %v179
    %v392 = vpop.f32.mrf.mxu0
    %v393 = vadd.f32 0.0, %v392
    %v394 = vpop.f32.mrf.mxu0
    %v395 = vadd.f32 0.0, %v394
    %396 = vmatmul.bf16.gmra.mxu0 %v182
    %v397 = vpop.f32.mrf.mxu0
    %v398 = vadd.f32 0.0, %v397
    %v399 = vpop.f32.mrf.mxu0
    %v400 = vadd.f32 0.0, %v399
    %401 = vmatmul.bf16.gmra.mxu0 %v185
    %v402 = vpop.f32.mrf.mxu0
    %v403 = vadd.f32 0.0, %v402
    %v404 = vpop.f32.mrf.mxu0
    %v405 = vadd.f32 0.0, %v404
    %406 = vdwg.mxu0
    %407 = vmatpush.bf16.msra.mxu0 0
    %408 = vmatpush.bf16.msra.mxu0 0
    %409 = vmatpush.bf16.msra.mxu0 0
    %410 = vmatpush.bf16.msra.mxu0 0
    %411 = vmatpush.bf16.msra.mxu0 0
    %412 = vmatpush.bf16.msra.mxu0 0
    %413 = vmatpush.bf16.msra.mxu0 %v149
    %414 = vmatpush.bf16.msra.mxu0 %v142
    %415 = vmatmul.bf16.gmra.mxu0 %v167
    %v416 = vpop.f32.mrf.mxu0
    %v417 = vadd.f32 0.0, %v416
    %v418 = vpop.f32.mrf.mxu0
    %v419 = vadd.f32 0.0, %v418
    %420 = vmatmul.bf16.gmra.mxu0 %v170
    %v421 = vpop.f32.mrf.mxu0
    %v422 = vadd.f32 0.0, %v421
    %v423 = vpop.f32.mrf.mxu0
    %v424 = vadd.f32 0.0, %v423
    %425 = vmatmul.bf16.gmra.mxu0 %v173
    %v426 = vpop.f32.mrf.mxu0
    %v427 = vadd.f32 0.0, %v426
    %v428 = vpop.f32.mrf.mxu0
    %v429 = vadd.f32 0.0, %v428
    %430 = vmatmul.bf16.gmra.mxu0 %v176
    %v431 = vpop.f32.mrf.mxu0
    %v432 = vadd.f32 0.0, %v431
    %v433 = vpop.f32.mrf.mxu0
    %v434 = vadd.f32 0.0, %v433
    %435 = vmatmul.bf16.gmra.mxu0 %v179
    %v436 = vpop.f32.mrf.mxu0
    %v437 = vadd.f32 0.0, %v436
    %v438 = vpop.f32.mrf.mxu0
    %v439 = vadd.f32 0.0, %v438
    %440 = vmatmul.bf16.gmra.mxu0 %v182
    %v441 = vpop.f32.mrf.mxu0
    %v442 = vadd.f32 0.0, %v441
    %v443 = vpop.f32.mrf.mxu0
    %v444 = vadd.f32 0.0, %v443
    %445 = vmatmul.bf16.gmra.mxu0 %v185
    %v446 = vpop.f32.mrf.mxu0
    %v447 = vadd.f32 0.0, %v446
    %v448 = vpop.f32.mrf.mxu0
    %v449 = vadd.f32 0.0, %v448
    %450 = vdwg.mxu0
    %451 = vmatpush.bf16.msra.mxu0 0
    %452 = vmatpush.bf16.msra.mxu0 0
    %453 = vmatpush.bf16.msra.mxu0 0
    %454 = vmatpush.bf16.msra.mxu0 0
    %455 = vmatpush.bf16.msra.mxu0 0
    %456 = vmatpush.bf16.msra.mxu0 0
    %457 = vmatpush.bf16.msra.mxu0 %v150
    %458 = vmatpush.bf16.msra.mxu0 %v143
    %459 = vmatmul.bf16.gmra.mxu0 %v167
    %v460 = vpop.f32.mrf.mxu0
    %v461 = vadd.f32 0.0, %v460
    %v462 = vpop.f32.mrf.mxu0
    %v463 = vadd.f32 0.0, %v462
    %464 = vmatmul.bf16.gmra.mxu0 %v170
    %v465 = vpop.f32.mrf.mxu0
    %v466 = vadd.f32 0.0, %v465
    %v467 = vpop.f32.mrf.mxu0
    %v468 = vadd.f32 0.0, %v467
    %469 = vmatmul.bf16.gmra.mxu0 %v173
    %v470 = vpop.f32.mrf.mxu0
    %v471 = vadd.f32 0.0, %v470
    %v472 = vpop.f32.mrf.mxu0
    %v473 = vadd.f32 0.0, %v472
    %474 = vmatmul.bf16.gmra.mxu0 %v176
    %v475 = vpop.f32.mrf.mxu0
    %v476 = vadd.f32 0.0, %v475
    %v477 = vpop.f32.mrf.mxu0
    %v478 = vadd.f32 0.0, %v477
    %479 = vmatmul.bf16.gmra.mxu0 %v179
    %v480 = vpop.f32.mrf.mxu0
    %v481 = vadd.f32 0.0, %v480
    %v482 = vpop.f32.mrf.mxu0
    %v483 = vadd.f32 0.0, %v482
    %484 = vmatmul.bf16.gmra.mxu0 %v182
    %v485 = vpop.f32.mrf.mxu0
    %v486 = vadd.f32 0.0, %v485
    %v487 = vpop.f32.mrf.mxu0
    %v488 = vadd.f32 0.0, %v487
    %489 = vmatmul.bf16.gmra.mxu0 %v185
    %v490 = vpop.f32.mrf.mxu0
    %v491 = vadd.f32 0.0, %v490
    %v492 = vpop.f32.mrf.mxu0
    %v493 = vadd.f32 0.0, %v492
    %494 = vdwg.mxu0
    %v495 = vld [vmem:[%s2] sm:$0x1]
    %v497 = vperm.slane %v495, 0
    %499 = vst [vmem:[#allocation2 + $0xc0] sm:$0xff] 0.0
    %500 = vst [vmem:[#allocation2 + $0xc8] sm:$0xff] 0.0
    %v501 = vmax.f32 %v197, %v199
    %v502 = vmax.f32 %v241, %v243
    %v503 = vmax.f32 %v285, %v287
    %v504 = vmax.f32 %v329, %v331
    %v505 = vmax.f32 %v373, %v375
    %v506 = vmax.f32 %v417, %v419
    %v507 = vmax.f32 %v461, %v463
    %509 = vrot.lane.b32.xlu0 %v501, 64
    %v510 = vpop.permute.xlu0 %509
    %v512 = vmax.f32 %v501, %v510
    %v513 = vadd.f32 %v512, %v497
    %v514 = vmax.f32 %v513, 0.0
    %vm515 = vcmask 523264
    %516 = vst.msk [vmem:[#allocation2] sm:$0xff] %vm515, %v514
    %518 = vrot.lane.b32.xlu0 %v502, 64
    %v519 = vpop.permute.xlu0 %518
    %v521 = vmax.f32 %v502, %v519
    %v522 = vadd.f32 %v521, %v497
    %v523 = vmax.f32 %v522, 0.0
    %525 = vrot.lane.b32.xlu0 %v523, 64
    %v526 = vpop.permute.xlu0 %525
    %vm528 = vcmask 1048064
    %529 = vst.msk [vmem:[#allocation2] sm:$0xff] %vm528, %v526
    %531 = vrot.lane.b32.xlu0 %v503, 64
    %v532 = vpop.permute.xlu0 %531
    %v534 = vmax.f32 %v503, %v532
    %v535 = vadd.f32 %v534, %v497
    %v536 = vmax.f32 %v535, 0.0
    %537 = vst.msk [vmem:[#allocation2 + $0x8] sm:$0xff] %vm515, %v536
    %539 = vrot.lane.b32.xlu0 %v504, 64
    %v540 = vpop.permute.xlu0 %539
    %v542 = vmax.f32 %v504, %v540
    %v543 = vadd.f32 %v542, %v497
    %v544 = vmax.f32 %v543, 0.0
    %546 = vrot.lane.b32.xlu0 %v544, 64
    %v547 = vpop.permute.xlu0 %546
    %549 = vst.msk [vmem:[#allocation2 + $0x8] sm:$0xff] %vm528, %v547
    %551 = vrot.lane.b32.xlu0 %v505, 64
    %v552 = vpop.permute.xlu0 %551
    %v554 = vmax.f32 %v505, %v552
    %v555 = vadd.f32 %v554, %v497
    %v556 = vmax.f32 %v555, 0.0
    %557 = vst.msk [vmem:[#allocation2 + $0x10] sm:$0xff] %vm515, %v556
    %559 = vrot.lane.b32.xlu0 %v506, 64
    %v560 = vpop.permute.xlu0 %559
    %v562 = vmax.f32 %v506, %v560
    %v563 = vadd.f32 %v562, %v497
    %v564 = vmax.f32 %v563, 0.0
    %566 = vrot.lane.b32.xlu0 %v564, 64
    %v567 = vpop.permute.xlu0 %566
    %569 = vst.msk [vmem:[#allocation2 + $0x10] sm:$0xff] %vm528, %v567
    %571 = vrot.lane.b32.xlu0 %v507, 64
    %v572 = vpop.permute.xlu0 %571
    %v574 = vmax.f32 %v507, %v572
    %v575 = vadd.f32 %v574, %v497
    %v576 = vmax.f32 %v575, 0.0
    %577 = vst.msk [vmem:[#allocation2 + $0x18] sm:$0xff] %vm515, %v576
    %v578 = vmax.f32 %v202, %v204
    %v579 = vmax.f32 %v246, %v248
    %v580 = vmax.f32 %v290, %v292
    %v581 = vmax.f32 %v334, %v336
    %v582 = vmax.f32 %v378, %v380
    %v583 = vmax.f32 %v422, %v424
    %v584 = vmax.f32 %v466, %v468
    %586 = vrot.lane.b32.xlu0 %v578, 64
    %v587 = vpop.permute.xlu0 %586
    %v589 = vmax.f32 %v578, %v587
    %v590 = vadd.f32 %v589, %v497
    %v591 = vmax.f32 %v590, 0.0
    %593 = vrot.lane.b32.xlu0 %v591, 64
    %v594 = vpop.permute.xlu0 %593
    %596 = vst.msk [vmem:[#allocation2 + $0x18] sm:$0xff] %vm528, %v594
    %598 = vrot.lane.b32.xlu0 %v579, 64
    %v599 = vpop.permute.xlu0 %598
    %v601 = vmax.f32 %v579, %v599
    %v602 = vadd.f32 %v601, %v497
    %v603 = vmax.f32 %v602, 0.0
    %604 = vst.msk [vmem:[#allocation2 + $0x20] sm:$0xff] %vm515, %v603
    %606 = vrot.lane.b32.xlu0 %v580, 64
    %v607 = vpop.permute.xlu0 %606
    %v609 = vmax.f32 %v580, %v607
    %v610 = vadd.f32 %v609, %v497
    %v611 = vmax.f32 %v610, 0.0
    %613 = vrot.lane.b32.xlu0 %v611, 64
    %v614 = vpop.permute.xlu0 %613
    %616 = vst.msk [vmem:[#allocation2 + $0x20] sm:$0xff] %vm528, %v614
    %618 = vrot.lane.b32.xlu0 %v581, 64
    %v619 = vpop.permute.xlu0 %618
    %v621 = vmax.f32 %v581, %v619
    %v622 = vadd.f32 %v621, %v497
    %v623 = vmax.f32 %v622, 0.0
    %624 = vst.msk [vmem:[#allocation2 + $0x28] sm:$0xff] %vm515, %v623
    %626 = vrot.lane.b32.xlu0 %v582, 64
    %v627 = vpop.permute.xlu0 %626
    %v629 = vmax.f32 %v582, %v627
    %v630 = vadd.f32 %v629, %v497
    %v631 = vmax.f32 %v630, 0.0
    %633 = vrot.lane.b32.xlu0 %v631, 64
    %v634 = vpop.permute.xlu0 %633
    %636 = vst.msk [vmem:[#allocation2 + $0x28] sm:$0xff] %vm528, %v634
    %638 = vrot.lane.b32.xlu0 %v583, 64
    %v639 = vpop.permute.xlu0 %638
    %v641 = vmax.f32 %v583, %v639
    %v642 = vadd.f32 %v641, %v497
    %v643 = vmax.f32 %v642, 0.0
    %644 = vst.msk [vmem:[#allocation2 + $0x30] sm:$0xff] %vm515, %v643
    %646 = vrot.lane.b32.xlu0 %v584, 64
    %v647 = vpop.permute.xlu0 %646
    %v649 = vmax.f32 %v584, %v647
    %v650 = vadd.f32 %v649, %v497
    %v651 = vmax.f32 %v650, 0.0
    %653 = vrot.lane.b32.xlu0 %v651, 64
    %v654 = vpop.permute.xlu0 %653
    %656 = vst.msk [vmem:[#allocation2 + $0x30] sm:$0xff] %vm528, %v654
    %v657 = vmax.f32 %v207, %v209
    %v658 = vmax.f32 %v251, %v253
    %v659 = vmax.f32 %v295, %v297
    %v660 = vmax.f32 %v339, %v341
    %v661 = vmax.f32 %v383, %v385
    %v662 = vmax.f32 %v427, %v429
    %v663 = vmax.f32 %v471, %v473
    %665 = vrot.lane.b32.xlu0 %v657, 64
    %v666 = vpop.permute.xlu0 %665
    %v668 = vmax.f32 %v657, %v666
    %v669 = vadd.f32 %v668, %v497
    %v670 = vmax.f32 %v669, 0.0
    %671 = vst.msk [vmem:[#allocation2 + $0x38] sm:$0xff] %vm515, %v670
    %673 = vrot.lane.b32.xlu0 %v658, 64
    %v674 = vpop.permute.xlu0 %673
    %v676 = vmax.f32 %v658, %v674
    %v677 = vadd.f32 %v676, %v497
    %v678 = vmax.f32 %v677, 0.0
    %680 = vrot.lane.b32.xlu0 %v678, 64
    %v681 = vpop.permute.xlu0 %680
    %683 = vst.msk [vmem:[#allocation2 + $0x38] sm:$0xff] %vm528, %v681
    %685 = vrot.lane.b32.xlu0 %v659, 64
    %v686 = vpop.permute.xlu0 %685
    %v688 = vmax.f32 %v659, %v686
    %v689 = vadd.f32 %v688, %v497
    %v690 = vmax.f32 %v689, 0.0
    %691 = vst.msk [vmem:[#allocation2 + $0x40] sm:$0xff] %vm515, %v690
    %693 = vrot.lane.b32.xlu0 %v660, 64
    %v694 = vpop.permute.xlu0 %693
    %v696 = vmax.f32 %v660, %v694
    %v697 = vadd.f32 %v696, %v497
    %v698 = vmax.f32 %v697, 0.0
    %700 = vrot.lane.b32.xlu0 %v698, 64
    %v701 = vpop.permute.xlu0 %700
    %703 = vst.msk [vmem:[#allocation2 + $0x40] sm:$0xff] %vm528, %v701
    %705 = vrot.lane.b32.xlu0 %v661, 64
    %v706 = vpop.permute.xlu0 %705
    %v708 = vmax.f32 %v661, %v706
    %v709 = vadd.f32 %v708, %v497
    %v710 = vmax.f32 %v709, 0.0
    %711 = vst.msk [vmem:[#allocation2 + $0x48] sm:$0xff] %vm515, %v710
    %713 = vrot.lane.b32.xlu0 %v662, 64
    %v714 = vpop.permute.xlu0 %713
    %v716 = vmax.f32 %v662, %v714
    %v717 = vadd.f32 %v716, %v497
    %v718 = vmax.f32 %v717, 0.0
    %720 = vrot.lane.b32.xlu0 %v718, 64
    %v721 = vpop.permute.xlu0 %720
    %723 = vst.msk [vmem:[#allocation2 + $0x48] sm:$0xff] %vm528, %v721
    %725 = vrot.lane.b32.xlu0 %v663, 64
    %v726 = vpop.permute.xlu0 %725
    %v728 = vmax.f32 %v663, %v726
    %v729 = vadd.f32 %v728, %v497
    %v730 = vmax.f32 %v729, 0.0
    %731 = vst.msk [vmem:[#allocation2 + $0x50] sm:$0xff] %vm515, %v730
    %v732 = vmax.f32 %v212, %v214
    %v733 = vmax.f32 %v256, %v258
    %v734 = vmax.f32 %v300, %v302
    %v735 = vmax.f32 %v344, %v346
    %v736 = vmax.f32 %v388, %v390
    %v737 = vmax.f32 %v432, %v434
    %v738 = vmax.f32 %v476, %v478
    %740 = vrot.lane.b32.xlu0 %v732, 64
    %v741 = vpop.permute.xlu0 %740
    %v743 = vmax.f32 %v732, %v741
    %v744 = vadd.f32 %v743, %v497
    %v745 = vmax.f32 %v744, 0.0
    %747 = vrot.lane.b32.xlu0 %v745, 64
    %v748 = vpop.permute.xlu0 %747
    %750 = vst.msk [vmem:[#allocation2 + $0x50] sm:$0xff] %vm528, %v748
    %752 = vrot.lane.b32.xlu0 %v733, 64
    %v753 = vpop.permute.xlu0 %752
    %v755 = vmax.f32 %v733, %v753
    %v756 = vadd.f32 %v755, %v497
    %v757 = vmax.f32 %v756, 0.0
    %758 = vst.msk [vmem:[#allocation2 + $0x58] sm:$0xff] %vm515, %v757
    %760 = vrot.lane.b32.xlu0 %v734, 64
    %v761 = vpop.permute.xlu0 %760
    %v763 = vmax.f32 %v734, %v761
    %v764 = vadd.f32 %v763, %v497
    %v765 = vmax.f32 %v764, 0.0
    %767 = vrot.lane.b32.xlu0 %v765, 64
    %v768 = vpop.permute.xlu0 %767
    %770 = vst.msk [vmem:[#allocation2 + $0x58] sm:$0xff] %vm528, %v768
    %772 = vrot.lane.b32.xlu0 %v735, 64
    %v773 = vpop.permute.xlu0 %772
    %v775 = vmax.f32 %v735, %v773
    %v776 = vadd.f32 %v775, %v497
    %v777 = vmax.f32 %v776, 0.0
    %778 = vst.msk [vmem:[#allocation2 + $0x60] sm:$0xff] %vm515, %v777
    %780 = vrot.lane.b32.xlu0 %v736, 64
    %v781 = vpop.permute.xlu0 %780
    %v783 = vmax.f32 %v736, %v781
    %v784 = vadd.f32 %v783, %v497
    %v785 = vmax.f32 %v784, 0.0
    %787 = vrot.lane.b32.xlu0 %v785, 64
    %v788 = vpop.permute.xlu0 %787
    %790 = vst.msk [vmem:[#allocation2 + $0x60] sm:$0xff] %vm528, %v788
    %792 = vrot.lane.b32.xlu0 %v737, 64
    %v793 = vpop.permute.xlu0 %792
    %v795 = vmax.f32 %v737, %v793
    %v796 = vadd.f32 %v795, %v497
    %v797 = vmax.f32 %v796, 0.0
    %798 = vst.msk [vmem:[#allocation2 + $0x68] sm:$0xff] %vm515, %v797
    %800 = vrot.lane.b32.xlu0 %v738, 64
    %v801 = vpop.permute.xlu0 %800
    %v803 = vmax.f32 %v738, %v801
    %v804 = vadd.f32 %v803, %v497
    %v805 = vmax.f32 %v804, 0.0
    %807 = vrot.lane.b32.xlu0 %v805, 64
    %v808 = vpop.permute.xlu0 %807
    %810 = vst.msk [vmem:[#allocation2 + $0x68] sm:$0xff] %vm528, %v808
    %v811 = vmax.f32 %v217, %v219
    %v812 = vmax.f32 %v261, %v263
    %v813 = vmax.f32 %v305, %v307
    %v814 = vmax.f32 %v349, %v351
    %v815 = vmax.f32 %v393, %v395
    %v816 = vmax.f32 %v437, %v439
    %v817 = vmax.f32 %v481, %v483
    %819 = vrot.lane.b32.xlu0 %v811, 64
    %v820 = vpop.permute.xlu0 %819
    %v822 = vmax.f32 %v811, %v820
    %v823 = vadd.f32 %v822, %v497
    %v824 = vmax.f32 %v823, 0.0
    %825 = vst.msk [vmem:[#allocation2 + $0x70] sm:$0xff] %vm515, %v824
    %827 = vrot.lane.b32.xlu0 %v812, 64
    %v828 = vpop.permute.xlu0 %827
    %v830 = vmax.f32 %v812, %v828
    %v831 = vadd.f32 %v830, %v497
    %v832 = vmax.f32 %v831, 0.0
    %834 = vrot.lane.b32.xlu0 %v832, 64
    %v835 = vpop.permute.xlu0 %834
    %837 = vst.msk [vmem:[#allocation2 + $0x70] sm:$0xff] %vm528, %v835
    %839 = vrot.lane.b32.xlu0 %v813, 64
    %v840 = vpop.permute.xlu0 %839
    %v842 = vmax.f32 %v813, %v840
    %v843 = vadd.f32 %v842, %v497
    %v844 = vmax.f32 %v843, 0.0
    %845 = vst.msk [vmem:[#allocation2 + $0x78] sm:$0xff] %vm515, %v844
    %847 = vrot.lane.b32.xlu0 %v814, 64
    %v848 = vpop.permute.xlu0 %847
    %v850 = vmax.f32 %v814, %v848
    %v851 = vadd.f32 %v850, %v497
    %v852 = vmax.f32 %v851, 0.0
    %854 = vrot.lane.b32.xlu0 %v852, 64
    %v855 = vpop.permute.xlu0 %854
    %857 = vst.msk [vmem:[#allocation2 + $0x78] sm:$0xff] %vm528, %v855
    %859 = vrot.lane.b32.xlu0 %v815, 64
    %v860 = vpop.permute.xlu0 %859
    %v862 = vmax.f32 %v815, %v860
    %v863 = vadd.f32 %v862, %v497
    %v864 = vmax.f32 %v863, 0.0
    %865 = vst.msk [vmem:[#allocation2 + $0x80] sm:$0xff] %vm515, %v864
    %867 = vrot.lane.b32.xlu0 %v816, 64
    %v868 = vpop.permute.xlu0 %867
    %v870 = vmax.f32 %v816, %v868
    %v871 = vadd.f32 %v870, %v497
    %v872 = vmax.f32 %v871, 0.0
    %874 = vrot.lane.b32.xlu0 %v872, 64
    %v875 = vpop.permute.xlu0 %874
    %877 = vst.msk [vmem:[#allocation2 + $0x80] sm:$0xff] %vm528, %v875
    %879 = vrot.lane.b32.xlu0 %v817, 64
    %v880 = vpop.permute.xlu0 %879
    %v882 = vmax.f32 %v817, %v880
    %v883 = vadd.f32 %v882, %v497
    %v884 = vmax.f32 %v883, 0.0
    %885 = vst.msk [vmem:[#allocation2 + $0x88] sm:$0xff] %vm515, %v884
    %v886 = vmax.f32 %v222, %v224
    %v887 = vmax.f32 %v266, %v268
    %v888 = vmax.f32 %v310, %v312
    %v889 = vmax.f32 %v354, %v356
    %v890 = vmax.f32 %v398, %v400
    %v891 = vmax.f32 %v442, %v444
    %v892 = vmax.f32 %v486, %v488
    %894 = vrot.lane.b32.xlu0 %v886, 64
    %v895 = vpop.permute.xlu0 %894
    %v897 = vmax.f32 %v886, %v895
    %v898 = vadd.f32 %v897, %v497
    %v899 = vmax.f32 %v898, 0.0
    %901 = vrot.lane.b32.xlu0 %v899, 64
    %v902 = vpop.permute.xlu0 %901
    %904 = vst.msk [vmem:[#allocation2 + $0x88] sm:$0xff] %vm528, %v902
    %906 = vrot.lane.b32.xlu0 %v887, 64
    %v907 = vpop.permute.xlu0 %906
    %v909 = vmax.f32 %v887, %v907
    %v910 = vadd.f32 %v909, %v497
    %v911 = vmax.f32 %v910, 0.0
    %912 = vst.msk [vmem:[#allocation2 + $0x90] sm:$0xff] %vm515, %v911
    %914 = vrot.lane.b32.xlu0 %v888, 64
    %v915 = vpop.permute.xlu0 %914
    %v917 = vmax.f32 %v888, %v915
    %v918 = vadd.f32 %v917, %v497
    %v919 = vmax.f32 %v918, 0.0
    %921 = vrot.lane.b32.xlu0 %v919, 64
    %v922 = vpop.permute.xlu0 %921
    %924 = vst.msk [vmem:[#allocation2 + $0x90] sm:$0xff] %vm528, %v922
    %926 = vrot.lane.b32.xlu0 %v889, 64
    %v927 = vpop.permute.xlu0 %926
    %v929 = vmax.f32 %v889, %v927
    %v930 = vadd.f32 %v929, %v497
    %v931 = vmax.f32 %v930, 0.0
    %932 = vst.msk [vmem:[#allocation2 + $0x98] sm:$0xff] %vm515, %v931
    %934 = vrot.lane.b32.xlu0 %v890, 64
    %v935 = vpop.permute.xlu0 %934
    %v937 = vmax.f32 %v890, %v935
    %v938 = vadd.f32 %v937, %v497
    %v939 = vmax.f32 %v938, 0.0
    %941 = vrot.lane.b32.xlu0 %v939, 64
    %v942 = vpop.permute.xlu0 %941
    %944 = vst.msk [vmem:[#allocation2 + $0x98] sm:$0xff] %vm528, %v942
    %946 = vrot.lane.b32.xlu0 %v891, 64
    %v947 = vpop.permute.xlu0 %946
    %v949 = vmax.f32 %v891, %v947
    %v950 = vadd.f32 %v949, %v497
    %v951 = vmax.f32 %v950, 0.0
    %952 = vst.msk [vmem:[#allocation2 + $0xa0] sm:$0xff] %vm515, %v951
    %954 = vrot.lane.b32.xlu0 %v892, 64
    %v955 = vpop.permute.xlu0 %954
    %v957 = vmax.f32 %v892, %v955
    %v958 = vadd.f32 %v957, %v497
    %v959 = vmax.f32 %v958, 0.0
    %961 = vrot.lane.b32.xlu0 %v959, 64
    %v962 = vpop.permute.xlu0 %961
    %964 = vst.msk [vmem:[#allocation2 + $0xa0] sm:$0xff] %vm528, %v962
    %v965 = vmax.f32 %v227, %v229
    %v966 = vmax.f32 %v271, %v273
    %v967 = vmax.f32 %v315, %v317
    %v968 = vmax.f32 %v359, %v361
    %v969 = vmax.f32 %v403, %v405
    %v970 = vmax.f32 %v447, %v449
    %v971 = vmax.f32 %v491, %v493
    %973 = vrot.lane.b32.xlu0 %v965, 64
    %v974 = vpop.permute.xlu0 %973
    %v976 = vmax.f32 %v965, %v974
    %v977 = vadd.f32 %v976, %v497
    %v978 = vmax.f32 %v977, 0.0
    %979 = vst.msk [vmem:[#allocation2 + $0xa8] sm:$0xff] %vm515, %v978
    %981 = vrot.lane.b32.xlu0 %v966, 64
    %v982 = vpop.permute.xlu0 %981
    %v984 = vmax.f32 %v966, %v982
    %v985 = vadd.f32 %v984, %v497
    %v986 = vmax.f32 %v985, 0.0
    %988 = vrot.lane.b32.xlu0 %v986, 64
    %v989 = vpop.permute.xlu0 %988
    %991 = vst.msk [vmem:[#allocation2 + $0xa8] sm:$0xff] %vm528, %v989
    %993 = vrot.lane.b32.xlu0 %v967, 64
    %v994 = vpop.permute.xlu0 %993
    %v996 = vmax.f32 %v967, %v994
    %v997 = vadd.f32 %v996, %v497
    %v998 = vmax.f32 %v997, 0.0
    %999 = vst.msk [vmem:[#allocation2 + $0xb0] sm:$0xff] %vm515, %v998
    %1001 = vrot.lane.b32.xlu0 %v968, 64
    %v1002 = vpop.permute.xlu0 %1001
    %v1004 = vmax.f32 %v968, %v1002
    %v1005 = vadd.f32 %v1004, %v497
    %v1006 = vmax.f32 %v1005, 0.0
    %1008 = vrot.lane.b32.xlu0 %v1006, 64
    %v1009 = vpop.permute.xlu0 %1008
    %1011 = vst.msk [vmem:[#allocation2 + $0xb0] sm:$0xff] %vm528, %v1009
    %1013 = vrot.lane.b32.xlu0 %v969, 64
    %v1014 = vpop.permute.xlu0 %1013
    %v1016 = vmax.f32 %v969, %v1014
    %v1017 = vadd.f32 %v1016, %v497
    %v1018 = vmax.f32 %v1017, 0.0
    %1019 = vst.msk [vmem:[#allocation2 + $0xb8] sm:$0xff] %vm515, %v1018
    %1021 = vrot.lane.b32.xlu0 %v970, 64
    %v1022 = vpop.permute.xlu0 %1021
    %v1024 = vmax.f32 %v970, %v1022
    %v1025 = vadd.f32 %v1024, %v497
    %v1026 = vmax.f32 %v1025, 0.0
    %1028 = vrot.lane.b32.xlu0 %v1026, 64
    %v1029 = vpop.permute.xlu0 %1028
    %1031 = vst.msk [vmem:[#allocation2 + $0xb8] sm:$0xff] %vm528, %v1029
    %1033 = vrot.lane.b32.xlu0 %v971, 64
    %v1034 = vpop.permute.xlu0 %1033
    %v1036 = vmax.f32 %v971, %v1034
    %v1037 = vadd.f32 %v1036, %v497
    %v1038 = vmax.f32 %v1037, 0.0
    %1039 = vst.msk [vmem:[#allocation2 + $0xc0] sm:$0xff] %vm515, %v1038
    %v1040 = vld [vmem:[#allocation2] sm:$0xff]
    %v1041 = vld [vmem:[#allocation2 + $0x8] sm:$0xff]
    %v1042 = vld [vmem:[#allocation2 + $0x10] sm:$0xff]
    %v1043 = vld [vmem:[#allocation2 + $0x18] sm:$0xff]
    %v1044 = vld [vmem:[#allocation2 + $0x20] sm:$0xff]
    %v1045 = vld [vmem:[#allocation2 + $0x28] sm:$0xff]
    %v1046 = vld [vmem:[#allocation2 + $0x30] sm:$0xff]
    %v1047 = vld [vmem:[#allocation2 + $0x38] sm:$0xff]
    %v1048 = vld [vmem:[#allocation2 + $0x40] sm:$0xff]
    %v1049 = vld [vmem:[#allocation2 + $0x48] sm:$0xff]
    %v1050 = vld [vmem:[#allocation2 + $0x50] sm:$0xff]
    %v1051 = vld [vmem:[#allocation2 + $0x58] sm:$0xff]
    %v1052 = vld [vmem:[#allocation2 + $0x60] sm:$0xff]
    %v1053 = vld [vmem:[#allocation2 + $0x68] sm:$0xff]
    %v1054 = vld [vmem:[#allocation2 + $0x70] sm:$0xff]
    %v1055 = vld [vmem:[#allocation2 + $0x78] sm:$0xff]
    %v1056 = vld [vmem:[#allocation2 + $0x80] sm:$0xff]
    %v1057 = vld [vmem:[#allocation2 + $0x88] sm:$0xff]
    %v1058 = vld [vmem:[#allocation2 + $0x90] sm:$0xff]
    %v1059 = vld [vmem:[#allocation2 + $0x98] sm:$0xff]
    %v1060 = vld [vmem:[#allocation2 + $0xa0] sm:$0xff]
    %v1061 = vld [vmem:[#allocation2 + $0xa8] sm:$0xff]
    %v1062 = vld [vmem:[#allocation2 + $0xb0] sm:$0xff]
    %v1063 = vld [vmem:[#allocation2 + $0xb8] sm:$0xff]
    %v1064 = vld [vmem:[#allocation2 + $0xc0] sm:$0xff]
    %v1065 = vld [vmem:[#allocation2 + $0xc8] sm:$0xff]
    %v1066 = vpack.c.bf16 %v1040, %v1040
    %v1067 = vpack.c.bf16 %v1041, %v1041
    %v1068 = vpack.c.bf16 %v1042, %v1042
    %v1069 = vpack.c.bf16 %v1043, %v1043
    %v1070 = vpack.c.bf16 %v1044, %v1044
    %v1071 = vpack.c.bf16 %v1045, %v1045
    %v1072 = vpack.c.bf16 %v1046, %v1046
    %v1073 = vpack.c.bf16 %v1047, %v1047
    %v1074 = vpack.c.bf16 %v1048, %v1048
    %v1075 = vpack.c.bf16 %v1049, %v1049
    %v1076 = vpack.c.bf16 %v1050, %v1050
    %v1077 = vpack.c.bf16 %v1051, %v1051
    %v1078 = vpack.c.bf16 %v1052, %v1052
    %v1079 = vpack.c.bf16 %v1053, %v1053
    %v1080 = vpack.c.bf16 %v1054, %v1054
    %v1081 = vpack.c.bf16 %v1055, %v1055
    %v1082 = vpack.c.bf16 %v1056, %v1056
    %v1083 = vpack.c.bf16 %v1057, %v1057
    %v1084 = vpack.c.bf16 %v1058, %v1058
    %v1085 = vpack.c.bf16 %v1059, %v1059
    %v1086 = vpack.c.bf16 %v1060, %v1060
    %v1087 = vpack.c.bf16 %v1061, %v1061
    %v1088 = vpack.c.bf16 %v1062, %v1062
    %v1089 = vpack.c.bf16 %v1063, %v1063
    %v1090 = vpack.c.bf16 %v1064, %v1064
    %v1091 = vpack.c.bf16 %v1065, %v1065
    %v1092 = vld [vmem:[%s3] sm:$0xf]
    %v1093 = vld [vmem:[%s3 + $0x4] sm:$0xf]
    %v1094 = vld [vmem:[%s3 + $0x8] sm:$0xf]
    %v1095 = vld [vmem:[%s3 + $0xc] sm:$0xf]
    %v1096 = vld [vmem:[%s3 + $0x10] sm:$0xf]
    %v1097 = vld [vmem:[%s3 + $0x14] sm:$0xf]
    %v1098 = vld [vmem:[%s3 + $0x18] sm:$0xf]
    %v1099 = vld [vmem:[%s3 + $0x1c] sm:$0xf]
    %v1100 = vld [vmem:[%s3 + $0x20] sm:$0xf]
    %v1101 = vld [vmem:[%s3 + $0x24] sm:$0xf]
    %v1102 = vld [vmem:[%s3 + $0x28] sm:$0xf]
    %v1103 = vld [vmem:[%s3 + $0x2c] sm:$0xf]
    %v1104 = vld [vmem:[%s3 + $0x30] sm:$0xf]
    %v1105 = vld [vmem:[%s3 + $0x34] sm:$0xf]
    %v1106 = vld [vmem:[%s3 + $0x38] sm:$0xf]
    %v1107 = vld [vmem:[%s3 + $0x3c] sm:$0xf]
    %v1108 = vld [vmem:[%s3 + $0x40] sm:$0xf]
    %v1109 = vld [vmem:[%s3 + $0x44] sm:$0xf]
    %v1110 = vld [vmem:[%s3 + $0x48] sm:$0xf]
    %v1111 = vld [vmem:[%s3 + $0x4c] sm:$0xf]
    %v1112 = vld [vmem:[%s3 + $0x50] sm:$0xf]
    %v1113 = vld [vmem:[%s3 + $0x54] sm:$0xf]
    %v1114 = vld [vmem:[%s3 + $0x58] sm:$0xf]
    %v1115 = vld [vmem:[%s3 + $0x5c] sm:$0xf]
    %v1116 = vld [vmem:[%s3 + $0x60] sm:$0xf]
    %v1117 = vld [vmem:[%s3 + $0x64] sm:$0xf]
    %v1118 = vld [vmem:[%s3 + $0x68] sm:$0xf]
    %v1119 = vld [vmem:[%s3 + $0x6c] sm:$0xf]
    %v1120 = vld [vmem:[%s3 + $0x70] sm:$0xf]
    %v1121 = vld [vmem:[%s3 + $0x74] sm:$0xf]
    %v1122 = vld [vmem:[%s3 + $0x78] sm:$0xf]
    %v1123 = vld [vmem:[%s3 + $0x7c] sm:$0xf]
    %v1124 = vld [vmem:[%s3 + $0x80] sm:$0xf]
    %v1125 = vld [vmem:[%s3 + $0x84] sm:$0xf]
    %v1126 = vld [vmem:[%s3 + $0x88] sm:$0xf]
    %v1127 = vld [vmem:[%s3 + $0x8c] sm:$0xf]
    %v1128 = vld [vmem:[%s3 + $0x90] sm:$0xf]
    %v1129 = vld [vmem:[%s3 + $0x94] sm:$0xf]
    %v1130 = vld [vmem:[%s3 + $0x98] sm:$0xf]
    %v1131 = vld [vmem:[%s3 + $0x9c] sm:$0xf]
    %v1132 = vld [vmem:[%s3 + $0xa0] sm:$0xf]
    %v1133 = vld [vmem:[%s3 + $0xa4] sm:$0xf]
    %v1134 = vld [vmem:[%s3 + $0xa8] sm:$0xf]
    %v1135 = vld [vmem:[%s3 + $0xac] sm:$0xf]
    %v1136 = vld [vmem:[%s3 + $0xb0] sm:$0xf]
    %v1137 = vld [vmem:[%s3 + $0xb4] sm:$0xf]
    %v1138 = vld [vmem:[%s3 + $0xb8] sm:$0xf]
    %v1139 = vld [vmem:[%s3 + $0xbc] sm:$0xf]
    %v1140 = vld [vmem:[%s3 + $0xc0] sm:$0xf]
    %v1141 = vld [vmem:[%s3 + $0xc4] sm:$0xf]
    %v1142 = vld [vmem:[%s3 + $0xc8] sm:$0xf]
    %v1143 = vld [vmem:[%s3 + $0xcc] sm:$0xf]
    %v1144 = vld [vmem:[%s3 + $0xd0] sm:$0xf]
    %v1145 = vld [vmem:[%s3 + $0xd4] sm:$0xf]
    %v1146 = vld [vmem:[%s3 + $0xd8] sm:$0xf]
    %v1147 = vld [vmem:[%s3 + $0xdc] sm:$0xf]
    %v1148 = vld [vmem:[%s3 + $0xe0] sm:$0xf]
    %v1149 = vld [vmem:[%s3 + $0xe4] sm:$0xf]
    %v1150 = vld [vmem:[%s3 + $0xe8] sm:$0xf]
    %v1151 = vld [vmem:[%s3 + $0xec] sm:$0xf]
    %v1152 = vld [vmem:[%s3 + $0xf0] sm:$0xf]
    %v1153 = vld [vmem:[%s3 + $0xf4] sm:$0xf]
    %v1154 = vld [vmem:[%s3 + $0xf8] sm:$0xf]
    %v1155 = vld [vmem:[%s3 + $0xfc] sm:$0xf]
    %v1156 = vld [vmem:[%s3 + $0x100] sm:$0xf]
    %v1157 = vld [vmem:[%s3 + $0x104] sm:$0xf]
    %v1158 = vld [vmem:[%s3 + $0x108] sm:$0xf]
    %v1159 = vld [vmem:[%s3 + $0x10c] sm:$0xf]
    %v1160 = vld [vmem:[%s3 + $0x110] sm:$0xf]
    %v1161 = vld [vmem:[%s3 + $0x114] sm:$0xf]
    %v1162 = vld [vmem:[%s3 + $0x118] sm:$0xf]
    %v1163 = vld [vmem:[%s3 + $0x11c] sm:$0xf]
    %v1164 = vld [vmem:[%s3 + $0x120] sm:$0xf]
    %v1165 = vld [vmem:[%s3 + $0x124] sm:$0xf]
    %v1166 = vld [vmem:[%s3 + $0x128] sm:$0xf]
    %v1167 = vld [vmem:[%s3 + $0x12c] sm:$0xf]
    %v1168 = vld [vmem:[%s3 + $0x130] sm:$0xf]
    %v1169 = vld [vmem:[%s3 + $0x134] sm:$0xf]
    %v1170 = vld [vmem:[%s3 + $0x138] sm:$0xf]
    %v1171 = vld [vmem:[%s3 + $0x13c] sm:$0xf]
    %v1172 = vld [vmem:[%s3 + $0x140] sm:$0xf]
    %v1173 = vld [vmem:[%s3 + $0x144] sm:$0xf]
    %v1174 = vld [vmem:[%s3 + $0x148] sm:$0xf]
    %v1175 = vld [vmem:[%s3 + $0x14c] sm:$0xf]
    %v1176 = vld [vmem:[%s3 + $0x150] sm:$0xf]
    %v1177 = vld [vmem:[%s3 + $0x154] sm:$0xf]
    %v1178 = vld [vmem:[%s3 + $0x158] sm:$0xf]
    %v1179 = vld [vmem:[%s3 + $0x15c] sm:$0xf]
    %v1180 = vld [vmem:[%s3 + $0x160] sm:$0xf]
    %v1181 = vld [vmem:[%s3 + $0x164] sm:$0xf]
    %v1182 = vld [vmem:[%s3 + $0x168] sm:$0xf]
    %v1183 = vld [vmem:[%s3 + $0x16c] sm:$0xf]
    %v1184 = vld [vmem:[%s3 + $0x170] sm:$0xf]
    %v1185 = vld [vmem:[%s3 + $0x174] sm:$0xf]
    %v1186 = vld [vmem:[%s3 + $0x178] sm:$0xf]
    %v1187 = vld [vmem:[%s3 + $0x17c] sm:$0xf]
    %v1188 = vld [vmem:[%s3 + $0x180] sm:$0xf]
    %v1189 = vld [vmem:[%s3 + $0x184] sm:$0xf]
    %v1190 = vld [vmem:[%s3 + $0x188] sm:$0xf]
    %v1191 = vld [vmem:[%s3 + $0x18c] sm:$0xf]
    %v1192 = vld [vmem:[%s3 + $0x190] sm:$0xf]
    %v1193 = vld [vmem:[%s3 + $0x194] sm:$0xf]
    %v1194 = vld [vmem:[%s3 + $0x198] sm:$0xf]
    %v1195 = vld [vmem:[%s3 + $0x19c] sm:$0xf]
    %v1196 = vld [vmem:[%s3 + $0x1a0] sm:$0xf]
    %v1197 = vld [vmem:[%s3 + $0x1a4] sm:$0xf]
    %v1198 = vld [vmem:[%s3 + $0x1a8] sm:$0xf]
    %v1199 = vld [vmem:[%s3 + $0x1ac] sm:$0xf]
    %v1200 = vld [vmem:[%s3 + $0x1b0] sm:$0xf]
    %v1201 = vld [vmem:[%s3 + $0x1b4] sm:$0xf]
    %v1202 = vld [vmem:[%s3 + $0x1b8] sm:$0xf]
    %v1203 = vld [vmem:[%s3 + $0x1bc] sm:$0xf]
    %v1204 = vld [vmem:[%s3 + $0x1c0] sm:$0xf]
    %v1205 = vld [vmem:[%s3 + $0x1c4] sm:$0xf]
    %v1206 = vld [vmem:[%s3 + $0x1c8] sm:$0xf]
    %v1207 = vld [vmem:[%s3 + $0x1cc] sm:$0xf]
    %v1208 = vld [vmem:[%s3 + $0x1d0] sm:$0xf]
    %v1209 = vld [vmem:[%s3 + $0x1d4] sm:$0xf]
    %v1210 = vld [vmem:[%s3 + $0x1d8] sm:$0xf]
    %v1211 = vld [vmem:[%s3 + $0x1dc] sm:$0xf]
    %v1212 = vld [vmem:[%s3 + $0x1e0] sm:$0xf]
    %v1213 = vld [vmem:[%s3 + $0x1e4] sm:$0xf]
    %v1214 = vld [vmem:[%s3 + $0x1e8] sm:$0xf]
    %v1215 = vld [vmem:[%s3 + $0x1ec] sm:$0xf]
    %v1216 = vld [vmem:[%s3 + $0x1f0] sm:$0xf]
    %v1217 = vld [vmem:[%s3 + $0x1f4] sm:$0xf]
    %v1218 = vld [vmem:[%s3 + $0x1f8] sm:$0xf]
    %v1219 = vld [vmem:[%s3 + $0x1fc] sm:$0xf]
    %v1220 = vld [vmem:[%s3 + $0x200] sm:$0xf]
    %v1221 = vld [vmem:[%s3 + $0x204] sm:$0xf]
    %v1222 = vld [vmem:[%s3 + $0x208] sm:$0xf]
    %v1223 = vld [vmem:[%s3 + $0x20c] sm:$0xf]
    %v1224 = vld [vmem:[%s3 + $0x210] sm:$0xf]
    %v1225 = vld [vmem:[%s3 + $0x214] sm:$0xf]
    %v1226 = vld [vmem:[%s3 + $0x218] sm:$0xf]
    %v1227 = vld [vmem:[%s3 + $0x21c] sm:$0xf]
    %v1228 = vld [vmem:[%s3 + $0x220] sm:$0xf]
    %v1229 = vld [vmem:[%s3 + $0x224] sm:$0xf]
    %v1230 = vld [vmem:[%s3 + $0x228] sm:$0xf]
    %v1231 = vld [vmem:[%s3 + $0x22c] sm:$0xf]
    %v1232 = vld [vmem:[%s3 + $0x230] sm:$0xf]
    %v1233 = vld [vmem:[%s3 + $0x234] sm:$0xf]
    %v1234 = vld [vmem:[%s3 + $0x238] sm:$0xf]
    %v1235 = vld [vmem:[%s3 + $0x23c] sm:$0xf]
    %v1236 = vld [vmem:[%s3 + $0x240] sm:$0xf]
    %v1237 = vld [vmem:[%s3 + $0x244] sm:$0xf]
    %v1238 = vld [vmem:[%s3 + $0x248] sm:$0xf]
    %v1239 = vld [vmem:[%s3 + $0x24c] sm:$0xf]
    %v1240 = vld [vmem:[%s3 + $0x250] sm:$0xf]
    %v1241 = vld [vmem:[%s3 + $0x254] sm:$0xf]
    %v1242 = vld [vmem:[%s3 + $0x258] sm:$0xf]
    %v1243 = vld [vmem:[%s3 + $0x25c] sm:$0xf]
    %v1244 = vld [vmem:[%s3 + $0x260] sm:$0xf]
    %v1245 = vld [vmem:[%s3 + $0x264] sm:$0xf]
    %v1246 = vld [vmem:[%s3 + $0x268] sm:$0xf]
    %v1247 = vld [vmem:[%s3 + $0x26c] sm:$0xf]
    %v1248 = vld [vmem:[%s3 + $0x270] sm:$0xf]
    %v1249 = vld [vmem:[%s3 + $0x274] sm:$0xf]
    %v1250 = vld [vmem:[%s3 + $0x278] sm:$0xf]
    %v1251 = vld [vmem:[%s3 + $0x27c] sm:$0xf]
    %v1252 = vld [vmem:[%s3 + $0x280] sm:$0xf]
    %v1253 = vld [vmem:[%s3 + $0x284] sm:$0xf]
    %v1254 = vld [vmem:[%s3 + $0x288] sm:$0xf]
    %v1255 = vld [vmem:[%s3 + $0x28c] sm:$0xf]
    %v1256 = vld [vmem:[%s3 + $0x290] sm:$0xf]
    %v1257 = vld [vmem:[%s3 + $0x294] sm:$0xf]
    %v1258 = vld [vmem:[%s3 + $0x298] sm:$0xf]
    %v1259 = vld [vmem:[%s3 + $0x29c] sm:$0xf]
    %v1260 = vld [vmem:[%s3 + $0x2a0] sm:$0xf]
    %v1261 = vld [vmem:[%s3 + $0x2a4] sm:$0xf]
    %v1262 = vld [vmem:[%s3 + $0x2a8] sm:$0xf]
    %v1263 = vld [vmem:[%s3 + $0x2ac] sm:$0xf]
    %v1264 = vld [vmem:[%s3 + $0x2b0] sm:$0xf]
    %v1265 = vld [vmem:[%s3 + $0x2b4] sm:$0xf]
    %v1266 = vld [vmem:[%s3 + $0x2b8] sm:$0xf]
    %v1267 = vld [vmem:[%s3 + $0x2bc] sm:$0xf]
    %v1268 = vld [vmem:[%s3 + $0x2c0] sm:$0xf]
    %v1269 = vld [vmem:[%s3 + $0x2c4] sm:$0xf]
    %v1270 = vld [vmem:[%s3 + $0x2c8] sm:$0xf]
    %v1271 = vld [vmem:[%s3 + $0x2cc] sm:$0xf]
    %v1272 = vld [vmem:[%s3 + $0x2d0] sm:$0xf]
    %v1273 = vld [vmem:[%s3 + $0x2d4] sm:$0xf]
    %v1274 = vld [vmem:[%s3 + $0x2d8] sm:$0xf]
    %v1275 = vld [vmem:[%s3 + $0x2dc] sm:$0xf]
    %v1276 = vld [vmem:[%s3 + $0x2e0] sm:$0xf]
    %v1277 = vld [vmem:[%s3 + $0x2e4] sm:$0xf]
    %v1278 = vld [vmem:[%s3 + $0x2e8] sm:$0xf]
    %v1279 = vld [vmem:[%s3 + $0x2ec] sm:$0xf]
    %v1280 = vld [vmem:[%s3 + $0x2f0] sm:$0xf]
    %v1281 = vld [vmem:[%s3 + $0x2f4] sm:$0xf]
    %v1282 = vld [vmem:[%s3 + $0x2f8] sm:$0xf]
    %v1283 = vld [vmem:[%s3 + $0x2fc] sm:$0xf]
    %v1284 = vld [vmem:[%s3 + $0x300] sm:$0xf]
    %v1285 = vld [vmem:[%s3 + $0x304] sm:$0xf]
    %v1286 = vld [vmem:[%s3 + $0x308] sm:$0xf]
    %v1287 = vld [vmem:[%s3 + $0x30c] sm:$0xf]
    %v1288 = vld [vmem:[%s3 + $0x310] sm:$0xf]
    %v1289 = vld [vmem:[%s3 + $0x314] sm:$0xf]
    %v1290 = vld [vmem:[%s3 + $0x318] sm:$0xf]
    %v1291 = vld [vmem:[%s3 + $0x31c] sm:$0xf]
    %v1292 = vld [vmem:[%s3 + $0x320] sm:$0xf]
    %v1293 = vld [vmem:[%s3 + $0x324] sm:$0xf]
    %v1294 = vld [vmem:[%s3 + $0x328] sm:$0xf]
    %v1295 = vld [vmem:[%s3 + $0x32c] sm:$0xf]
    %v1296 = vld [vmem:[%s3 + $0x330] sm:$0xf]
    %v1297 = vld [vmem:[%s3 + $0x334] sm:$0xf]
    %v1298 = vld [vmem:[%s3 + $0x338] sm:$0xf]
    %v1299 = vld [vmem:[%s3 + $0x33c] sm:$0xf]
    %v1300 = vld [vmem:[%s3 + $0x340] sm:$0xf]
    %v1301 = vld [vmem:[%s3 + $0x344] sm:$0xf]
    %v1302 = vld [vmem:[%s3 + $0x348] sm:$0xf]
    %v1303 = vld [vmem:[%s3 + $0x34c] sm:$0xf]
    %v1304 = vld [vmem:[%s3 + $0x350] sm:$0xf]
    %v1305 = vld [vmem:[%s3 + $0x354] sm:$0xf]
    %v1306 = vld [vmem:[%s3 + $0x358] sm:$0xf]
    %v1307 = vld [vmem:[%s3 + $0x35c] sm:$0xf]
    %v1308 = vld [vmem:[%s3 + $0x360] sm:$0xf]
    %v1309 = vld [vmem:[%s3 + $0x364] sm:$0xf]
    %v1310 = vld [vmem:[%s3 + $0x368] sm:$0xf]
    %v1311 = vld [vmem:[%s3 + $0x36c] sm:$0xf]
    %v1312 = vld [vmem:[%s3 + $0x370] sm:$0xf]
    %v1313 = vld [vmem:[%s3 + $0x374] sm:$0xf]
    %v1314 = vld [vmem:[%s3 + $0x378] sm:$0xf]
    %v1315 = vld [vmem:[%s3 + $0x37c] sm:$0xf]
    %v1316 = vld [vmem:[%s3 + $0x380] sm:$0xf]
    %v1317 = vld [vmem:[%s3 + $0x384] sm:$0xf]
    %v1318 = vld [vmem:[%s3 + $0x388] sm:$0xf]
    %v1319 = vld [vmem:[%s3 + $0x38c] sm:$0xf]
    %v1320 = vld [vmem:[%s3 + $0x390] sm:$0xf]
    %v1321 = vld [vmem:[%s3 + $0x394] sm:$0xf]
    %v1322 = vld [vmem:[%s3 + $0x398] sm:$0xf]
    %v1323 = vld [vmem:[%s3 + $0x39c] sm:$0xf]
    %v1324 = vld [vmem:[%s3 + $0x3a0] sm:$0xf]
    %v1325 = vld [vmem:[%s3 + $0x3a4] sm:$0xf]
    %v1326 = vld [vmem:[%s3 + $0x3a8] sm:$0xf]
    %v1327 = vld [vmem:[%s3 + $0x3ac] sm:$0xf]
    %v1328 = vld [vmem:[%s3 + $0x3b0] sm:$0xf]
    %v1329 = vld [vmem:[%s3 + $0x3b4] sm:$0xf]
    %v1330 = vld [vmem:[%s3 + $0x3b8] sm:$0xf]
    %v1331 = vld [vmem:[%s3 + $0x3bc] sm:$0xf]
    %v1332 = vld [vmem:[%s3 + $0x3c0] sm:$0xf]
    %v1333 = vld [vmem:[%s3 + $0x3c4] sm:$0xf]
    %v1334 = vld [vmem:[%s3 + $0x3c8] sm:$0xf]
    %v1335 = vld [vmem:[%s3 + $0x3cc] sm:$0xf]
    %v1336 = vld [vmem:[%s3 + $0x3d0] sm:$0xf]
    %v1337 = vld [vmem:[%s3 + $0x3d4] sm:$0xf]
    %v1338 = vld [vmem:[%s3 + $0x3d8] sm:$0xf]
    %v1339 = vld [vmem:[%s3 + $0x3dc] sm:$0xf]
    %v1340 = vld [vmem:[%s3 + $0x3e0] sm:$0xf]
    %v1341 = vld [vmem:[%s3 + $0x3e4] sm:$0xf]
    %v1342 = vld [vmem:[%s3 + $0x3e8] sm:$0xf]
    %v1343 = vld [vmem:[%s3 + $0x3ec] sm:$0xf]
    %v1344 = vld [vmem:[%s3 + $0x3f0] sm:$0xf]
    %v1345 = vld [vmem:[%s3 + $0x3f4] sm:$0xf]
    %v1346 = vld [vmem:[%s3 + $0x3f8] sm:$0xf]
    %v1347 = vld [vmem:[%s3 + $0x3fc] sm:$0xf]
    %v1348 = vld [vmem:[%s3 + $0x400] sm:$0xf]
    %v1349 = vld [vmem:[%s3 + $0x404] sm:$0xf]
    %v1350 = vld [vmem:[%s3 + $0x408] sm:$0xf]
    %v1351 = vld [vmem:[%s3 + $0x40c] sm:$0xf]
    %v1352 = vld [vmem:[%s3 + $0x410] sm:$0xf]
    %v1353 = vld [vmem:[%s3 + $0x414] sm:$0xf]
    %v1354 = vld [vmem:[%s3 + $0x418] sm:$0xf]
    %v1355 = vld [vmem:[%s3 + $0x41c] sm:$0xf]
    %v1356 = vld [vmem:[%s3 + $0x420] sm:$0xf]
    %v1357 = vld [vmem:[%s3 + $0x424] sm:$0xf]
    %v1358 = vld [vmem:[%s3 + $0x428] sm:$0xf]
    %v1359 = vld [vmem:[%s3 + $0x42c] sm:$0xf]
    %v1360 = vld [vmem:[%s3 + $0x430] sm:$0xf]
    %v1361 = vld [vmem:[%s3 + $0x434] sm:$0xf]
    %v1362 = vld [vmem:[%s3 + $0x438] sm:$0xf]
    %v1363 = vld [vmem:[%s3 + $0x43c] sm:$0xf]
    %v1364 = vld [vmem:[%s3 + $0x440] sm:$0xf]
    %v1365 = vld [vmem:[%s3 + $0x444] sm:$0xf]
    %v1366 = vld [vmem:[%s3 + $0x448] sm:$0xf]
    %v1367 = vld [vmem:[%s3 + $0x44c] sm:$0xf]
    %v1368 = vld [vmem:[%s3 + $0x450] sm:$0xf]
    %v1369 = vld [vmem:[%s3 + $0x454] sm:$0xf]
    %v1370 = vld [vmem:[%s3 + $0x458] sm:$0xf]
    %v1371 = vld [vmem:[%s3 + $0x45c] sm:$0xf]
    %v1372 = vld [vmem:[%s3 + $0x460] sm:$0xf]
    %v1373 = vld [vmem:[%s3 + $0x464] sm:$0xf]
    %v1374 = vld [vmem:[%s3 + $0x468] sm:$0xf]
    %v1375 = vld [vmem:[%s3 + $0x46c] sm:$0xf]
    %v1376 = vld [vmem:[%s3 + $0x470] sm:$0xf]
    %v1377 = vld [vmem:[%s3 + $0x474] sm:$0xf]
    %v1378 = vld [vmem:[%s3 + $0x478] sm:$0xf]
    %v1379 = vld [vmem:[%s3 + $0x47c] sm:$0xf]
    %v1380 = vld [vmem:[%s3 + $0x480] sm:$0xf]
    %v1381 = vld [vmem:[%s3 + $0x484] sm:$0xf]
    %v1382 = vld [vmem:[%s3 + $0x488] sm:$0xf]
    %v1383 = vld [vmem:[%s3 + $0x48c] sm:$0xf]
    %v1384 = vld [vmem:[%s3 + $0x490] sm:$0xf]
    %v1385 = vld [vmem:[%s3 + $0x494] sm:$0xf]
    %v1386 = vld [vmem:[%s3 + $0x498] sm:$0xf]
    %v1387 = vld [vmem:[%s3 + $0x49c] sm:$0xf]
    %v1388 = vld [vmem:[%s3 + $0x4a0] sm:$0xf]
    %v1389 = vld [vmem:[%s3 + $0x4a4] sm:$0xf]
    %v1390 = vld [vmem:[%s3 + $0x4a8] sm:$0xf]
    %v1391 = vld [vmem:[%s3 + $0x4ac] sm:$0xf]
    %v1392 = vld [vmem:[%s3 + $0x4b0] sm:$0xf]
    %v1393 = vld [vmem:[%s3 + $0x4b4] sm:$0xf]
    %v1394 = vld [vmem:[%s3 + $0x4b8] sm:$0xf]
    %v1395 = vld [vmem:[%s3 + $0x4bc] sm:$0xf]
    %v1396 = vld [vmem:[%s3 + $0x4c0] sm:$0xf]
    %v1397 = vld [vmem:[%s3 + $0x4c4] sm:$0xf]
    %v1398 = vld [vmem:[%s3 + $0x4c8] sm:$0xf]
    %v1399 = vld [vmem:[%s3 + $0x4cc] sm:$0xf]
    %v1400 = vld [vmem:[%s3 + $0x4d0] sm:$0xf]
    %v1401 = vld [vmem:[%s3 + $0x4d4] sm:$0xf]
    %v1402 = vld [vmem:[%s3 + $0x4d8] sm:$0xf]
    %v1403 = vld [vmem:[%s3 + $0x4dc] sm:$0xf]
    %v1404 = vld [vmem:[%s3 + $0x4e0] sm:$0xf]
    %v1405 = vld [vmem:[%s3 + $0x4e4] sm:$0xf]
    %v1406 = vld [vmem:[%s3 + $0x4e8] sm:$0xf]
    %v1407 = vld [vmem:[%s3 + $0x4ec] sm:$0xf]
    %v1408 = vld [vmem:[%s3 + $0x4f0] sm:$0xf]
    %v1409 = vld [vmem:[%s3 + $0x4f4] sm:$0xf]
    %v1410 = vld [vmem:[%s3 + $0x4f8] sm:$0xf]
    %v1411 = vld [vmem:[%s3 + $0x4fc] sm:$0xf]
    %v1412 = vld [vmem:[%s3 + $0x500] sm:$0xf]
    %v1413 = vld [vmem:[%s3 + $0x504] sm:$0xf]
    %v1414 = vld [vmem:[%s3 + $0x508] sm:$0xf]
    %v1415 = vld [vmem:[%s3 + $0x50c] sm:$0xf]
    %v1416 = vld [vmem:[%s3 + $0x510] sm:$0xf]
    %v1417 = vld [vmem:[%s3 + $0x514] sm:$0xf]
    %v1418 = vld [vmem:[%s3 + $0x518] sm:$0xf]
    %v1419 = vld [vmem:[%s3 + $0x51c] sm:$0xf]
    %v1420 = vld [vmem:[%s3 + $0x520] sm:$0xf]
    %v1421 = vld [vmem:[%s3 + $0x524] sm:$0xf]
    %v1422 = vld [vmem:[%s3 + $0x528] sm:$0xf]
    %v1423 = vld [vmem:[%s3 + $0x52c] sm:$0xf]
    %v1424 = vld [vmem:[%s3 + $0x530] sm:$0xf]
    %v1425 = vld [vmem:[%s3 + $0x534] sm:$0xf]
    %v1426 = vld [vmem:[%s3 + $0x538] sm:$0xf]
    %v1427 = vld [vmem:[%s3 + $0x53c] sm:$0xf]
    %v1428 = vld [vmem:[%s3 + $0x540] sm:$0xf]
    %v1429 = vld [vmem:[%s3 + $0x544] sm:$0xf]
    %v1430 = vld [vmem:[%s3 + $0x548] sm:$0xf]
    %v1431 = vld [vmem:[%s3 + $0x54c] sm:$0xf]
    %v1432 = vld [vmem:[%s3 + $0x550] sm:$0xf]
    %v1433 = vld [vmem:[%s3 + $0x554] sm:$0xf]
    %v1434 = vld [vmem:[%s3 + $0x558] sm:$0xf]
    %v1435 = vld [vmem:[%s3 + $0x55c] sm:$0xf]
    %v1436 = vld [vmem:[%s3 + $0x560] sm:$0xf]
    %v1437 = vld [vmem:[%s3 + $0x564] sm:$0xf]
    %v1438 = vld [vmem:[%s3 + $0x568] sm:$0xf]
    %v1439 = vld [vmem:[%s3 + $0x56c] sm:$0xf]
    %v1440 = vld [vmem:[%s3 + $0x570] sm:$0xf]
    %v1441 = vld [vmem:[%s3 + $0x574] sm:$0xf]
    %v1442 = vld [vmem:[%s3 + $0x578] sm:$0xf]
    %v1443 = vld [vmem:[%s3 + $0x57c] sm:$0xf]
    %v1444 = vld [vmem:[%s3 + $0x580] sm:$0xf]
    %v1445 = vld [vmem:[%s3 + $0x584] sm:$0xf]
    %v1446 = vld [vmem:[%s3 + $0x588] sm:$0xf]
    %v1447 = vld [vmem:[%s3 + $0x58c] sm:$0xf]
    %v1448 = vld [vmem:[%s3 + $0x590] sm:$0xf]
    %v1449 = vld [vmem:[%s3 + $0x594] sm:$0xf]
    %v1450 = vld [vmem:[%s3 + $0x598] sm:$0xf]
    %v1451 = vld [vmem:[%s3 + $0x59c] sm:$0xf]
    %v1452 = vld [vmem:[%s3 + $0x5a0] sm:$0xf]
    %v1453 = vld [vmem:[%s3 + $0x5a4] sm:$0xf]
    %v1454 = vld [vmem:[%s3 + $0x5a8] sm:$0xf]
    %v1455 = vld [vmem:[%s3 + $0x5ac] sm:$0xf]
    %v1456 = vld [vmem:[%s3 + $0x5b0] sm:$0xf]
    %v1457 = vld [vmem:[%s3 + $0x5b4] sm:$0xf]
    %v1458 = vld [vmem:[%s3 + $0x5b8] sm:$0xf]
    %v1459 = vld [vmem:[%s3 + $0x5bc] sm:$0xf]
    %v1460 = vld [vmem:[%s3 + $0x5c0] sm:$0xf]
    %v1461 = vld [vmem:[%s3 + $0x5c4] sm:$0xf]
    %v1462 = vld [vmem:[%s3 + $0x5c8] sm:$0xf]
    %v1463 = vld [vmem:[%s3 + $0x5cc] sm:$0xf]
    %v1464 = vld [vmem:[%s3 + $0x5d0] sm:$0xf]
    %v1465 = vld [vmem:[%s3 + $0x5d4] sm:$0xf]
    %v1466 = vld [vmem:[%s3 + $0x5d8] sm:$0xf]
    %v1467 = vld [vmem:[%s3 + $0x5dc] sm:$0xf]
    %v1468 = vld [vmem:[%s3 + $0x5e0] sm:$0xf]
    %v1469 = vld [vmem:[%s3 + $0x5e4] sm:$0xf]
    %v1470 = vld [vmem:[%s3 + $0x5e8] sm:$0xf]
    %v1471 = vld [vmem:[%s3 + $0x5ec] sm:$0xf]
    %v1472 = vld [vmem:[%s3 + $0x5f0] sm:$0xf]
    %v1473 = vld [vmem:[%s3 + $0x5f4] sm:$0xf]
    %v1474 = vld [vmem:[%s3 + $0x5f8] sm:$0xf]
    %v1475 = vld [vmem:[%s3 + $0x5fc] sm:$0xf]
    %v1476 = vld [vmem:[%s3 + $0x600] sm:$0xf]
    %v1477 = vld [vmem:[%s3 + $0x604] sm:$0xf]
    %v1478 = vld [vmem:[%s3 + $0x608] sm:$0xf]
    %v1479 = vld [vmem:[%s3 + $0x60c] sm:$0xf]
    %v1480 = vld [vmem:[%s3 + $0x610] sm:$0xf]
    %v1481 = vld [vmem:[%s3 + $0x614] sm:$0xf]
    %v1482 = vld [vmem:[%s3 + $0x618] sm:$0xf]
    %v1483 = vld [vmem:[%s3 + $0x61c] sm:$0xf]
    %v1484 = vld [vmem:[%s3 + $0x620] sm:$0xf]
    %v1485 = vld [vmem:[%s3 + $0x624] sm:$0xf]
    %v1486 = vld [vmem:[%s3 + $0x628] sm:$0xf]
    %v1487 = vld [vmem:[%s3 + $0x62c] sm:$0xf]
    %v1488 = vld [vmem:[%s3 + $0x630] sm:$0xf]
    %v1489 = vld [vmem:[%s3 + $0x634] sm:$0xf]
    %v1490 = vld [vmem:[%s3 + $0x638] sm:$0xf]
    %v1491 = vld [vmem:[%s3 + $0x63c] sm:$0xf]
    %v1492 = vld [vmem:[%s3 + $0x640] sm:$0xf]
    %v1493 = vld [vmem:[%s3 + $0x644] sm:$0xf]
    %v1494 = vld [vmem:[%s3 + $0x648] sm:$0xf]
    %v1495 = vld [vmem:[%s3 + $0x64c] sm:$0xf]
    %v1496 = vld [vmem:[%s3 + $0x650] sm:$0xf]
    %v1497 = vld [vmem:[%s3 + $0x654] sm:$0xf]
    %v1498 = vld [vmem:[%s3 + $0x658] sm:$0xf]
    %v1499 = vld [vmem:[%s3 + $0x65c] sm:$0xf]
    %v1500 = vld [vmem:[%s3 + $0x660] sm:$0xf]
    %v1501 = vld [vmem:[%s3 + $0x664] sm:$0xf]
    %v1502 = vld [vmem:[%s3 + $0x668] sm:$0xf]
    %v1503 = vld [vmem:[%s3 + $0x66c] sm:$0xf]
    %v1504 = vld [vmem:[%s3 + $0x670] sm:$0xf]
    %v1505 = vld [vmem:[%s3 + $0x674] sm:$0xf]
    %v1506 = vld [vmem:[%s3 + $0x678] sm:$0xf]
    %v1507 = vld [vmem:[%s3 + $0x67c] sm:$0xf]
    %v1508 = vld [vmem:[%s4] sm:$0x1]
    %v1510 = vperm.slane %v1508, 0
    %v1928 = vunpack.c.l.b16 %v1092
    %v1929 = vunpack.c.l.b16 %v1093
    %v1930 = vunpack.c.l.b16 %v1094
    %v1931 = vunpack.c.l.b16 %v1095
    %v1932 = vunpack.c.l.b16 %v1096
    %v1933 = vunpack.c.l.b16 %v1097
    %v1934 = vunpack.c.l.b16 %v1098
    %v1935 = vunpack.c.l.b16 %v1099
    %v1936 = vunpack.c.l.b16 %v1100
    %v1937 = vunpack.c.l.b16 %v1101
    %v1938 = vunpack.c.l.b16 %v1102
    %v1939 = vunpack.c.l.b16 %v1103
    %v1940 = vunpack.c.l.b16 %v1104
    %v1941 = vunpack.c.l.b16 %v1105
    %v1942 = vunpack.c.l.b16 %v1106
    %v1943 = vunpack.c.l.b16 %v1107
    %v1944 = vunpack.c.l.b16 %v1108
    %v1945 = vunpack.c.l.b16 %v1109
    %v1946 = vunpack.c.l.b16 %v1110
    %v1947 = vunpack.c.l.b16 %v1111
    %v1948 = vunpack.c.l.b16 %v1112
    %v1949 = vunpack.c.l.b16 %v1113
    %v1950 = vunpack.c.l.b16 %v1114
    %v1951 = vunpack.c.l.b16 %v1115
    %v1952 = vunpack.c.l.b16 %v1116
    %v1953 = vunpack.c.l.b16 %v1117
    %v1954 = vunpack.c.l.b16 %v1118
    %v1955 = vunpack.c.l.b16 %v1119
    %v1956 = vunpack.c.l.b16 %v1120
    %v1957 = vunpack.c.l.b16 %v1121
    %v1958 = vunpack.c.l.b16 %v1122
    %v1959 = vunpack.c.l.b16 %v1123
    %v1960 = vunpack.c.l.b16 %v1124
    %v1961 = vunpack.c.l.b16 %v1125
    %v1962 = vunpack.c.l.b16 %v1126
    %v1963 = vunpack.c.l.b16 %v1127
    %v1964 = vunpack.c.l.b16 %v1128
    %v1965 = vunpack.c.l.b16 %v1129
    %v1966 = vunpack.c.l.b16 %v1130
    %v1967 = vunpack.c.l.b16 %v1131
    %v1968 = vunpack.c.l.b16 %v1132
    %v1969 = vunpack.c.l.b16 %v1133
    %v1970 = vunpack.c.l.b16 %v1134
    %v1971 = vunpack.c.l.b16 %v1135
    %v1972 = vunpack.c.l.b16 %v1136
    %v1973 = vunpack.c.l.b16 %v1137
    %v1974 = vunpack.c.l.b16 %v1138
    %v1975 = vunpack.c.l.b16 %v1139
    %v1976 = vunpack.c.l.b16 %v1140
    %v1977 = vunpack.c.l.b16 %v1141
    %v1978 = vunpack.c.l.b16 %v1142
    %v1979 = vunpack.c.l.b16 %v1143
    %v1980 = vunpack.c.l.b16 %v1144
    %v1981 = vunpack.c.l.b16 %v1145
    %v1982 = vunpack.c.l.b16 %v1146
    %v1983 = vunpack.c.l.b16 %v1147
    %v1984 = vunpack.c.l.b16 %v1148
    %v1985 = vunpack.c.l.b16 %v1149
    %v1986 = vunpack.c.l.b16 %v1150
    %v1987 = vunpack.c.l.b16 %v1151
    %v1988 = vunpack.c.l.b16 %v1152
    %v1989 = vunpack.c.l.b16 %v1153
    %v1990 = vunpack.c.l.b16 %v1154
    %v1991 = vunpack.c.l.b16 %v1155
    %v1992 = vunpack.c.l.b16 %v1156
    %v1993 = vunpack.c.l.b16 %v1157
    %v1994 = vunpack.c.l.b16 %v1158
    %v1995 = vunpack.c.l.b16 %v1159
    %v1996 = vunpack.c.l.b16 %v1160
    %v1997 = vunpack.c.l.b16 %v1161
    %v1998 = vunpack.c.l.b16 %v1162
    %v1999 = vunpack.c.l.b16 %v1163
    %v2000 = vunpack.c.l.b16 %v1164
    %v2001 = vunpack.c.l.b16 %v1165
    %v2002 = vunpack.c.l.b16 %v1166
    %v2003 = vunpack.c.l.b16 %v1167
    %v2004 = vunpack.c.l.b16 %v1168
    %v2005 = vunpack.c.l.b16 %v1169
    %v2006 = vunpack.c.l.b16 %v1170
    %v2007 = vunpack.c.l.b16 %v1171
    %v2008 = vunpack.c.l.b16 %v1172
    %v2009 = vunpack.c.l.b16 %v1173
    %v2010 = vunpack.c.l.b16 %v1174
    %v2011 = vunpack.c.l.b16 %v1175
    %v2012 = vunpack.c.l.b16 %v1176
    %v2013 = vunpack.c.l.b16 %v1177
    %v2014 = vunpack.c.l.b16 %v1178
    %v2015 = vunpack.c.l.b16 %v1179
    %v2016 = vunpack.c.l.b16 %v1180
    %v2017 = vunpack.c.l.b16 %v1181
    %v2018 = vunpack.c.l.b16 %v1182
    %v2019 = vunpack.c.l.b16 %v1183
    %v2020 = vunpack.c.l.b16 %v1184
    %v2021 = vunpack.c.l.b16 %v1185
    %v2022 = vunpack.c.l.b16 %v1186
    %v2023 = vunpack.c.l.b16 %v1187
    %v2024 = vunpack.c.l.b16 %v1188
    %v2025 = vunpack.c.l.b16 %v1189
    %v2026 = vunpack.c.l.b16 %v1190
    %v2027 = vunpack.c.l.b16 %v1191
    %v2028 = vunpack.c.l.b16 %v1192
    %v2029 = vunpack.c.l.b16 %v1193
    %v2030 = vunpack.c.l.b16 %v1194
    %v2031 = vunpack.c.l.b16 %v1195
    %v2032 = vunpack.c.l.b16 %v1196
    %v2033 = vunpack.c.l.b16 %v1197
    %v2034 = vunpack.c.l.b16 %v1198
    %v2035 = vunpack.c.l.b16 %v1199
    %v2036 = vunpack.c.l.b16 %v1200
    %v2037 = vunpack.c.l.b16 %v1201
    %v2038 = vunpack.c.l.b16 %v1202
    %v2039 = vunpack.c.l.b16 %v1203
    %v2040 = vunpack.c.l.b16 %v1204
    %v2041 = vunpack.c.l.b16 %v1205
    %v2042 = vunpack.c.l.b16 %v1206
    %v2043 = vunpack.c.l.b16 %v1207
    %v2044 = vunpack.c.l.b16 %v1208
    %v2045 = vunpack.c.l.b16 %v1209
    %v2046 = vunpack.c.l.b16 %v1210
    %v2047 = vunpack.c.l.b16 %v1211
    %v2048 = vunpack.c.l.b16 %v1212
    %v2049 = vunpack.c.l.b16 %v1213
    %v2050 = vunpack.c.l.b16 %v1214
    %v2051 = vunpack.c.l.b16 %v1215
    %v2052 = vunpack.c.l.b16 %v1216
    %v2053 = vunpack.c.l.b16 %v1217
    %v2054 = vunpack.c.l.b16 %v1218
    %v2055 = vunpack.c.l.b16 %v1219
    %v2056 = vunpack.c.l.b16 %v1220
    %v2057 = vunpack.c.l.b16 %v1221
    %v2058 = vunpack.c.l.b16 %v1222
    %v2059 = vunpack.c.l.b16 %v1223
    %v2060 = vunpack.c.l.b16 %v1224
    %v2061 = vunpack.c.l.b16 %v1225
    %v2062 = vunpack.c.l.b16 %v1226
    %v2063 = vunpack.c.l.b16 %v1227
    %v2064 = vunpack.c.l.b16 %v1228
    %v2065 = vunpack.c.l.b16 %v1229
    %v2066 = vunpack.c.l.b16 %v1230
    %v2067 = vunpack.c.l.b16 %v1231
    %v2068 = vunpack.c.l.b16 %v1232
    %v2069 = vunpack.c.l.b16 %v1233
    %v2070 = vunpack.c.l.b16 %v1234
    %v2071 = vunpack.c.l.b16 %v1235
    %v2072 = vunpack.c.l.b16 %v1236
    %v2073 = vunpack.c.l.b16 %v1237
    %v2074 = vunpack.c.l.b16 %v1238
    %v2075 = vunpack.c.l.b16 %v1239
    %v2076 = vunpack.c.l.b16 %v1240
    %v2077 = vunpack.c.l.b16 %v1241
    %v2078 = vunpack.c.l.b16 %v1242
    %v2079 = vunpack.c.l.b16 %v1243
    %v2080 = vunpack.c.l.b16 %v1244
    %v2081 = vunpack.c.l.b16 %v1245
    %v2082 = vunpack.c.l.b16 %v1246
    %v2083 = vunpack.c.l.b16 %v1247
    %v2084 = vunpack.c.l.b16 %v1248
    %v2085 = vunpack.c.l.b16 %v1249
    %v2086 = vunpack.c.l.b16 %v1250
    %v2087 = vunpack.c.l.b16 %v1251
    %v2088 = vunpack.c.l.b16 %v1252
    %v2089 = vunpack.c.l.b16 %v1253
    %v2090 = vunpack.c.l.b16 %v1254
    %v2091 = vunpack.c.l.b16 %v1255
    %v2092 = vunpack.c.l.b16 %v1256
    %v2093 = vunpack.c.l.b16 %v1257
    %v2094 = vunpack.c.l.b16 %v1258
    %v2095 = vunpack.c.l.b16 %v1259
    %v2096 = vunpack.c.l.b16 %v1260
    %v2097 = vunpack.c.l.b16 %v1261
    %v2098 = vunpack.c.l.b16 %v1262
    %v2099 = vunpack.c.l.b16 %v1263
    %v2100 = vunpack.c.l.b16 %v1264
    %v2101 = vunpack.c.l.b16 %v1265
    %v2102 = vunpack.c.l.b16 %v1266
    %v2103 = vunpack.c.l.b16 %v1267
    %v2104 = vunpack.c.l.b16 %v1268
    %v2105 = vunpack.c.l.b16 %v1269
    %v2106 = vunpack.c.l.b16 %v1270
    %v2107 = vunpack.c.l.b16 %v1271
    %v2108 = vunpack.c.l.b16 %v1272
    %v2109 = vunpack.c.l.b16 %v1273
    %v2110 = vunpack.c.l.b16 %v1274
    %v2111 = vunpack.c.l.b16 %v1275
    %v2112 = vunpack.c.l.b16 %v1276
    %v2113 = vunpack.c.l.b16 %v1277
    %v2114 = vunpack.c.l.b16 %v1278
    %v2115 = vunpack.c.l.b16 %v1279
    %v2116 = vunpack.c.l.b16 %v1280
    %v2117 = vunpack.c.l.b16 %v1281
    %v2118 = vunpack.c.l.b16 %v1282
    %v2119 = vunpack.c.l.b16 %v1283
    %v2120 = vunpack.c.l.b16 %v1284
    %v2121 = vunpack.c.l.b16 %v1285
    %v2122 = vunpack.c.l.b16 %v1286
    %v2123 = vunpack.c.l.b16 %v1287
    %v2124 = vunpack.c.l.b16 %v1288
    %v2125 = vunpack.c.l.b16 %v1289
    %v2126 = vunpack.c.l.b16 %v1290
    %v2127 = vunpack.c.l.b16 %v1291
    %v2128 = vunpack.c.l.b16 %v1292
    %v2129 = vunpack.c.l.b16 %v1293
    %v2130 = vunpack.c.l.b16 %v1294
    %v2131 = vunpack.c.l.b16 %v1295
    %v2132 = vunpack.c.l.b16 %v1296
    %v2133 = vunpack.c.l.b16 %v1297
    %v2134 = vunpack.c.l.b16 %v1298
    %v2135 = vunpack.c.l.b16 %v1299
    %v2136 = vunpack.c.l.b16 %v1300
    %v2137 = vunpack.c.l.b16 %v1301
    %v2138 = vunpack.c.l.b16 %v1302
    %v2139 = vunpack.c.l.b16 %v1303
    %v2140 = vunpack.c.l.b16 %v1304
    %v2141 = vunpack.c.l.b16 %v1305
    %v2142 = vunpack.c.l.b16 %v1306
    %v2143 = vunpack.c.l.b16 %v1307
    %v2144 = vunpack.c.l.b16 %v1308
    %v2145 = vunpack.c.l.b16 %v1309
    %v2146 = vunpack.c.l.b16 %v1310
    %v2147 = vunpack.c.l.b16 %v1311
    %v2148 = vunpack.c.l.b16 %v1312
    %v2149 = vunpack.c.l.b16 %v1313
    %v2150 = vunpack.c.l.b16 %v1314
    %v2151 = vunpack.c.l.b16 %v1315
    %v2152 = vunpack.c.l.b16 %v1316
    %v2153 = vunpack.c.l.b16 %v1317
    %v2154 = vunpack.c.l.b16 %v1318
    %v2155 = vunpack.c.l.b16 %v1319
    %v2156 = vunpack.c.l.b16 %v1320
    %v2157 = vunpack.c.l.b16 %v1321
    %v2158 = vunpack.c.l.b16 %v1322
    %v2159 = vunpack.c.l.b16 %v1323
    %v2160 = vunpack.c.l.b16 %v1324
    %v2161 = vunpack.c.l.b16 %v1325
    %v2162 = vunpack.c.l.b16 %v1326
    %v2163 = vunpack.c.l.b16 %v1327
    %v2164 = vunpack.c.l.b16 %v1328
    %v2165 = vunpack.c.l.b16 %v1329
    %v2166 = vunpack.c.l.b16 %v1330
    %v2167 = vunpack.c.l.b16 %v1331
    %v2168 = vunpack.c.l.b16 %v1332
    %v2169 = vunpack.c.l.b16 %v1333
    %v2170 = vunpack.c.l.b16 %v1334
    %v2171 = vunpack.c.l.b16 %v1335
    %v2172 = vunpack.c.l.b16 %v1336
    %v2173 = vunpack.c.l.b16 %v1337
    %v2174 = vunpack.c.l.b16 %v1338
    %v2175 = vunpack.c.l.b16 %v1339
    %v2176 = vunpack.c.l.b16 %v1340
    %v2177 = vunpack.c.l.b16 %v1341
    %v2178 = vunpack.c.l.b16 %v1342
    %v2179 = vunpack.c.l.b16 %v1343
    %v2180 = vunpack.c.l.b16 %v1344
    %v2181 = vunpack.c.l.b16 %v1345
    %v2182 = vunpack.c.l.b16 %v1346
    %v2183 = vunpack.c.l.b16 %v1347
    %v2184 = vunpack.c.l.b16 %v1348
    %v2185 = vunpack.c.l.b16 %v1349
    %v2186 = vunpack.c.l.b16 %v1350
    %v2187 = vunpack.c.l.b16 %v1351
    %v2188 = vunpack.c.l.b16 %v1352
    %v2189 = vunpack.c.l.b16 %v1353
    %v2190 = vunpack.c.l.b16 %v1354
    %v2191 = vunpack.c.l.b16 %v1355
    %v2192 = vunpack.c.l.b16 %v1356
    %v2193 = vunpack.c.l.b16 %v1357
    %v2194 = vunpack.c.l.b16 %v1358
    %v2195 = vunpack.c.l.b16 %v1359
    %v2196 = vunpack.c.l.b16 %v1360
    %v2197 = vunpack.c.l.b16 %v1361
    %v2198 = vunpack.c.l.b16 %v1362
    %v2199 = vunpack.c.l.b16 %v1363
    %v2200 = vunpack.c.l.b16 %v1364
    %v2201 = vunpack.c.l.b16 %v1365
    %v2202 = vunpack.c.l.b16 %v1366
    %v2203 = vunpack.c.l.b16 %v1367
    %v2204 = vunpack.c.l.b16 %v1368
    %v2205 = vunpack.c.l.b16 %v1369
    %v2206 = vunpack.c.l.b16 %v1370
    %v2207 = vunpack.c.l.b16 %v1371
    %v2208 = vunpack.c.l.b16 %v1372
    %v2209 = vunpack.c.l.b16 %v1373
    %v2210 = vunpack.c.l.b16 %v1374
    %v2211 = vunpack.c.l.b16 %v1375
    %v2212 = vunpack.c.l.b16 %v1376
    %v2213 = vunpack.c.l.b16 %v1377
    %v2214 = vunpack.c.l.b16 %v1378
    %v2215 = vunpack.c.l.b16 %v1379
    %v2216 = vunpack.c.l.b16 %v1380
    %v2217 = vunpack.c.l.b16 %v1381
    %v2218 = vunpack.c.l.b16 %v1382
    %v2219 = vunpack.c.l.b16 %v1383
    %v2220 = vunpack.c.l.b16 %v1384
    %v2221 = vunpack.c.l.b16 %v1385
    %v2222 = vunpack.c.l.b16 %v1386
    %v2223 = vunpack.c.l.b16 %v1387
    %v2224 = vunpack.c.l.b16 %v1388
    %v2225 = vunpack.c.l.b16 %v1389
    %v2226 = vunpack.c.l.b16 %v1390
    %v2227 = vunpack.c.l.b16 %v1391
    %v2228 = vunpack.c.l.b16 %v1392
    %v2229 = vunpack.c.l.b16 %v1393
    %v2230 = vunpack.c.l.b16 %v1394
    %v2231 = vunpack.c.l.b16 %v1395
    %v2232 = vunpack.c.l.b16 %v1396
    %v2233 = vunpack.c.l.b16 %v1397
    %v2234 = vunpack.c.l.b16 %v1398
    %v2235 = vunpack.c.l.b16 %v1399
    %v2236 = vunpack.c.l.b16 %v1400
    %v2237 = vunpack.c.l.b16 %v1401
    %v2238 = vunpack.c.l.b16 %v1402
    %v2239 = vunpack.c.l.b16 %v1403
    %v2240 = vunpack.c.l.b16 %v1404
    %v2241 = vunpack.c.l.b16 %v1405
    %v2242 = vunpack.c.l.b16 %v1406
    %v2243 = vunpack.c.l.b16 %v1407
    %v2244 = vunpack.c.l.b16 %v1408
    %v2245 = vunpack.c.l.b16 %v1409
    %v2246 = vunpack.c.l.b16 %v1410
    %v2247 = vunpack.c.l.b16 %v1411
    %v2248 = vunpack.c.l.b16 %v1412
    %v2249 = vunpack.c.l.b16 %v1413
    %v2250 = vunpack.c.l.b16 %v1414
    %v2251 = vunpack.c.l.b16 %v1415
    %v2252 = vunpack.c.l.b16 %v1416
    %v2253 = vunpack.c.l.b16 %v1417
    %v2254 = vunpack.c.l.b16 %v1418
    %v2255 = vunpack.c.l.b16 %v1419
    %v2256 = vunpack.c.l.b16 %v1420
    %v2257 = vunpack.c.l.b16 %v1421
    %v2258 = vunpack.c.l.b16 %v1422
    %v2259 = vunpack.c.l.b16 %v1423
    %v2260 = vunpack.c.l.b16 %v1424
    %v2261 = vunpack.c.l.b16 %v1425
    %v2262 = vunpack.c.l.b16 %v1426
    %v2263 = vunpack.c.l.b16 %v1427
    %v2264 = vunpack.c.l.b16 %v1428
    %v2265 = vunpack.c.l.b16 %v1429
    %v2266 = vunpack.c.l.b16 %v1430
    %v2267 = vunpack.c.l.b16 %v1431
    %v2268 = vunpack.c.l.b16 %v1432
    %v2269 = vunpack.c.l.b16 %v1433
    %v2270 = vunpack.c.l.b16 %v1434
    %v2271 = vunpack.c.l.b16 %v1435
    %v2272 = vunpack.c.l.b16 %v1436
    %v2273 = vunpack.c.l.b16 %v1437
    %v2274 = vunpack.c.l.b16 %v1438
    %v2275 = vunpack.c.l.b16 %v1439
    %v2276 = vunpack.c.l.b16 %v1440
    %v2277 = vunpack.c.l.b16 %v1441
    %v2278 = vunpack.c.l.b16 %v1442
    %v2279 = vunpack.c.l.b16 %v1443
    %v2280 = vunpack.c.l.b16 %v1444
    %v2281 = vunpack.c.l.b16 %v1445
    %v2282 = vunpack.c.l.b16 %v1446
    %v2283 = vunpack.c.l.b16 %v1447
    %v2284 = vunpack.c.l.b16 %v1448
    %v2285 = vunpack.c.l.b16 %v1449
    %v2286 = vunpack.c.l.b16 %v1450
    %v2287 = vunpack.c.l.b16 %v1451
    %v2288 = vunpack.c.l.b16 %v1452
    %v2289 = vunpack.c.l.b16 %v1453
    %v2290 = vunpack.c.l.b16 %v1454
    %v2291 = vunpack.c.l.b16 %v1455
    %v2292 = vunpack.c.l.b16 %v1456
    %v2293 = vunpack.c.l.b16 %v1457
    %v2294 = vunpack.c.l.b16 %v1458
    %v2295 = vunpack.c.l.b16 %v1459
    %v2296 = vunpack.c.l.b16 %v1460
    %v2297 = vunpack.c.l.b16 %v1461
    %v2298 = vunpack.c.l.b16 %v1462
    %v2299 = vunpack.c.l.b16 %v1463
    %v2300 = vunpack.c.l.b16 %v1464
    %v2301 = vunpack.c.l.b16 %v1465
    %v2302 = vunpack.c.l.b16 %v1466
    %v2303 = vunpack.c.l.b16 %v1467
    %v2304 = vunpack.c.l.b16 %v1468
    %v2305 = vunpack.c.l.b16 %v1469
    %v2306 = vunpack.c.l.b16 %v1470
    %v2307 = vunpack.c.l.b16 %v1471
    %v2308 = vunpack.c.l.b16 %v1472
    %v2309 = vunpack.c.l.b16 %v1473
    %v2310 = vunpack.c.l.b16 %v1474
    %v2311 = vunpack.c.l.b16 %v1475
    %v2312 = vunpack.c.l.b16 %v1476
    %v2313 = vunpack.c.l.b16 %v1477
    %v2314 = vunpack.c.l.b16 %v1478
    %v2315 = vunpack.c.l.b16 %v1479
    %v2316 = vunpack.c.l.b16 %v1480
    %v2317 = vunpack.c.l.b16 %v1481
    %v2318 = vunpack.c.l.b16 %v1482
    %v2319 = vunpack.c.l.b16 %v1483
    %v2320 = vunpack.c.l.b16 %v1484
    %v2321 = vunpack.c.l.b16 %v1485
    %v2322 = vunpack.c.l.b16 %v1486
    %v2323 = vunpack.c.l.b16 %v1487
    %v2324 = vunpack.c.l.b16 %v1488
    %v2325 = vunpack.c.l.b16 %v1489
    %v2326 = vunpack.c.l.b16 %v1490
    %v2327 = vunpack.c.l.b16 %v1491
    %v2328 = vunpack.c.l.b16 %v1492
    %v2329 = vunpack.c.l.b16 %v1493
    %v2330 = vunpack.c.l.b16 %v1494
    %v2331 = vunpack.c.l.b16 %v1495
    %v2332 = vunpack.c.l.b16 %v1496
    %v2333 = vunpack.c.l.b16 %v1497
    %v2334 = vunpack.c.l.b16 %v1498
    %v2335 = vunpack.c.l.b16 %v1499
    %v2336 = vunpack.c.l.b16 %v1500
    %v2337 = vunpack.c.l.b16 %v1501
    %v2338 = vunpack.c.l.b16 %v1502
    %v2339 = vunpack.c.l.b16 %v1503
    %v2340 = vunpack.c.l.b16 %v1504
    %v2341 = vunpack.c.l.b16 %v1505
    %v2342 = vunpack.c.l.b16 %v1506
    %v2343 = vunpack.c.l.b16 %v1507
    %v2344 = vpack.c.b16 %v1929, %v1928
    %v2345 = vpack.c.b16 %v1931, %v1930
    %v2346 = vpack.c.b16 %v1933, %v1932
    %v2347 = vpack.c.b16 %v1935, %v1934
    %v2348 = vpack.c.b16 %v1937, %v1936
    %v2349 = vpack.c.b16 %v1939, %v1938
    %v2350 = vpack.c.b16 %v1941, %v1940
    %v2351 = vpack.c.b16 %v1943, %v1942
    %v2352 = vpack.c.b16 %v1945, %v1944
    %v2353 = vpack.c.b16 %v1947, %v1946
    %v2354 = vpack.c.b16 %v1949, %v1948
    %v2355 = vpack.c.b16 %v1951, %v1950
    %v2356 = vpack.c.b16 %v1953, %v1952
    %v2357 = vpack.c.b16 %v1955, %v1954
    %v2358 = vpack.c.b16 %v1957, %v1956
    %v2359 = vpack.c.b16 %v1959, %v1958
    %v2360 = vpack.c.b16 %v1961, %v1960
    %v2361 = vpack.c.b16 %v1963, %v1962
    %v2362 = vpack.c.b16 %v1965, %v1964
    %v2363 = vpack.c.b16 %v1967, %v1966
    %v2364 = vpack.c.b16 %v1969, %v1968
    %v2365 = vpack.c.b16 %v1971, %v1970
    %v2366 = vpack.c.b16 %v1973, %v1972
    %v2367 = vpack.c.b16 %v1975, %v1974
    %v2368 = vpack.c.b16 %v1977, %v1976
    %v2369 = vpack.c.b16 %v1979, %v1978
    %v2370 = vpack.c.b16 %v1981, %v1980
    %v2371 = vpack.c.b16 %v1983, %v1982
    %v2372 = vpack.c.b16 %v1985, %v1984
    %v2373 = vpack.c.b16 %v1987, %v1986
    %v2374 = vpack.c.b16 %v1989, %v1988
    %v2375 = vpack.c.b16 %v1991, %v1990
    %v2376 = vpack.c.b16 %v1993, %v1992
    %v2377 = vpack.c.b16 %v1995, %v1994
    %v2378 = vpack.c.b16 %v1997, %v1996
    %v2379 = vpack.c.b16 %v1999, %v1998
    %v2380 = vpack.c.b16 %v2001, %v2000
    %v2381 = vpack.c.b16 %v2003, %v2002
    %v2382 = vpack.c.b16 %v2005, %v2004
    %v2383 = vpack.c.b16 %v2007, %v2006
    %v2384 = vpack.c.b16 %v2009, %v2008
    %v2385 = vpack.c.b16 %v2011, %v2010
    %v2386 = vpack.c.b16 %v2013, %v2012
    %v2387 = vpack.c.b16 %v2015, %v2014
    %v2388 = vpack.c.b16 %v2017, %v2016
    %v2389 = vpack.c.b16 %v2019, %v2018
    %v2390 = vpack.c.b16 %v2021, %v2020
    %v2391 = vpack.c.b16 %v2023, %v2022
    %v2392 = vpack.c.b16 %v2025, %v2024
    %v2393 = vpack.c.b16 %v2027, %v2026
    %v2394 = vpack.c.b16 %v2029, %v2028
    %v2395 = vpack.c.b16 %v2031, %v2030
    %v2396 = vpack.c.b16 %v2033, %v2032
    %v2397 = vpack.c.b16 %v2035, %v2034
    %v2398 = vpack.c.b16 %v2037, %v2036
    %v2399 = vpack.c.b16 %v2039, %v2038
    %v2400 = vpack.c.b16 %v2041, %v2040
    %v2401 = vpack.c.b16 %v2043, %v2042
    %v2402 = vpack.c.b16 %v2045, %v2044
    %v2403 = vpack.c.b16 %v2047, %v2046
    %v2404 = vpack.c.b16 %v2049, %v2048
    %v2405 = vpack.c.b16 %v2051, %v2050
    %v2406 = vpack.c.b16 %v2053, %v2052
    %v2407 = vpack.c.b16 %v2055, %v2054
    %v2408 = vpack.c.b16 %v2057, %v2056
    %v2409 = vpack.c.b16 %v2059, %v2058
    %v2410 = vpack.c.b16 %v2061, %v2060
    %v2411 = vpack.c.b16 %v2063, %v2062
    %v2412 = vpack.c.b16 %v2065, %v2064
    %v2413 = vpack.c.b16 %v2067, %v2066
    %v2414 = vpack.c.b16 %v2069, %v2068
    %v2415 = vpack.c.b16 %v2071, %v2070
    %v2416 = vpack.c.b16 %v2073, %v2072
    %v2417 = vpack.c.b16 %v2075, %v2074
    %v2418 = vpack.c.b16 %v2077, %v2076
    %v2419 = vpack.c.b16 %v2079, %v2078
    %v2420 = vpack.c.b16 %v2081, %v2080
    %v2421 = vpack.c.b16 %v2083, %v2082
    %v2422 = vpack.c.b16 %v2085, %v2084
    %v2423 = vpack.c.b16 %v2087, %v2086
    %v2424 = vpack.c.b16 %v2089, %v2088
    %v2425 = vpack.c.b16 %v2091, %v2090
    %v2426 = vpack.c.b16 %v2093, %v2092
    %v2427 = vpack.c.b16 %v2095, %v2094
    %v2428 = vpack.c.b16 %v2097, %v2096
    %v2429 = vpack.c.b16 %v2099, %v2098
    %v2430 = vpack.c.b16 %v2101, %v2100
    %v2431 = vpack.c.b16 %v2103, %v2102
    %v2432 = vpack.c.b16 %v2105, %v2104
    %v2433 = vpack.c.b16 %v2107, %v2106
    %v2434 = vpack.c.b16 %v2109, %v2108
    %v2435 = vpack.c.b16 %v2111, %v2110
    %v2436 = vpack.c.b16 %v2113, %v2112
    %v2437 = vpack.c.b16 %v2115, %v2114
    %v2438 = vpack.c.b16 %v2117, %v2116
    %v2439 = vpack.c.b16 %v2119, %v2118
    %v2440 = vpack.c.b16 %v2121, %v2120
    %v2441 = vpack.c.b16 %v2123, %v2122
    %v2442 = vpack.c.b16 %v2125, %v2124
    %v2443 = vpack.c.b16 %v2127, %v2126
    %v2444 = vpack.c.b16 %v2129, %v2128
    %v2445 = vpack.c.b16 %v2131, %v2130
    %v2446 = vpack.c.b16 %v2133, %v2132
    %v2447 = vpack.c.b16 %v2135, %v2134
    %v2448 = vpack.c.b16 %v2137, %v2136
    %v2449 = vpack.c.b16 %v2139, %v2138
    %v2450 = vpack.c.b16 %v2141, %v2140
    %v2451 = vpack.c.b16 %v2143, %v2142
    %v2452 = vpack.c.b16 %v2145, %v2144
    %v2453 = vpack.c.b16 %v2147, %v2146
    %v2454 = vpack.c.b16 %v2149, %v2148
    %v2455 = vpack.c.b16 %v2151, %v2150
    %v2456 = vpack.c.b16 %v2153, %v2152
    %v2457 = vpack.c.b16 %v2155, %v2154
    %v2458 = vpack.c.b16 %v2157, %v2156
    %v2459 = vpack.c.b16 %v2159, %v2158
    %v2460 = vpack.c.b16 %v2161, %v2160
    %v2461 = vpack.c.b16 %v2163, %v2162
    %v2462 = vpack.c.b16 %v2165, %v2164
    %v2463 = vpack.c.b16 %v2167, %v2166
    %v2464 = vpack.c.b16 %v2169, %v2168
    %v2465 = vpack.c.b16 %v2171, %v2170
    %v2466 = vpack.c.b16 %v2173, %v2172
    %v2467 = vpack.c.b16 %v2175, %v2174
    %v2468 = vpack.c.b16 %v2177, %v2176
    %v2469 = vpack.c.b16 %v2179, %v2178
    %v2470 = vpack.c.b16 %v2181, %v2180
    %v2471 = vpack.c.b16 %v2183, %v2182
    %v2472 = vpack.c.b16 %v2185, %v2184
    %v2473 = vpack.c.b16 %v2187, %v2186
    %v2474 = vpack.c.b16 %v2189, %v2188
    %v2475 = vpack.c.b16 %v2191, %v2190
    %v2476 = vpack.c.b16 %v2193, %v2192
    %v2477 = vpack.c.b16 %v2195, %v2194
    %v2478 = vpack.c.b16 %v2197, %v2196
    %v2479 = vpack.c.b16 %v2199, %v2198
    %v2480 = vpack.c.b16 %v2201, %v2200
    %v2481 = vpack.c.b16 %v2203, %v2202
    %v2482 = vpack.c.b16 %v2205, %v2204
    %v2483 = vpack.c.b16 %v2207, %v2206
    %v2484 = vpack.c.b16 %v2209, %v2208
    %v2485 = vpack.c.b16 %v2211, %v2210
    %v2486 = vpack.c.b16 %v2213, %v2212
    %v2487 = vpack.c.b16 %v2215, %v2214
    %v2488 = vpack.c.b16 %v2217, %v2216
    %v2489 = vpack.c.b16 %v2219, %v2218
    %v2490 = vpack.c.b16 %v2221, %v2220
    %v2491 = vpack.c.b16 %v2223, %v2222
    %v2492 = vpack.c.b16 %v2225, %v2224
    %v2493 = vpack.c.b16 %v2227, %v2226
    %v2494 = vpack.c.b16 %v2229, %v2228
    %v2495 = vpack.c.b16 %v2231, %v2230
    %v2496 = vpack.c.b16 %v2233, %v2232
    %v2497 = vpack.c.b16 %v2235, %v2234
    %v2498 = vpack.c.b16 %v2237, %v2236
    %v2499 = vpack.c.b16 %v2239, %v2238
    %v2500 = vpack.c.b16 %v2241, %v2240
    %v2501 = vpack.c.b16 %v2243, %v2242
    %v2502 = vpack.c.b16 %v2245, %v2244
    %v2503 = vpack.c.b16 %v2247, %v2246
    %v2504 = vpack.c.b16 %v2249, %v2248
    %v2505 = vpack.c.b16 %v2251, %v2250
    %v2506 = vpack.c.b16 %v2253, %v2252
    %v2507 = vpack.c.b16 %v2255, %v2254
    %v2508 = vpack.c.b16 %v2257, %v2256
    %v2509 = vpack.c.b16 %v2259, %v2258
    %v2510 = vpack.c.b16 %v2261, %v2260
    %v2511 = vpack.c.b16 %v2263, %v2262
    %v2512 = vpack.c.b16 %v2265, %v2264
    %v2513 = vpack.c.b16 %v2267, %v2266
    %v2514 = vpack.c.b16 %v2269, %v2268
    %v2515 = vpack.c.b16 %v2271, %v2270
    %v2516 = vpack.c.b16 %v2273, %v2272
    %v2517 = vpack.c.b16 %v2275, %v2274
    %v2518 = vpack.c.b16 %v2277, %v2276
    %v2519 = vpack.c.b16 %v2279, %v2278
    %v2520 = vpack.c.b16 %v2281, %v2280
    %v2521 = vpack.c.b16 %v2283, %v2282
    %v2522 = vpack.c.b16 %v2285, %v2284
    %v2523 = vpack.c.b16 %v2287, %v2286
    %v2524 = vpack.c.b16 %v2289, %v2288
    %v2525 = vpack.c.b16 %v2291, %v2290
    %v2526 = vpack.c.b16 %v2293, %v2292
    %v2527 = vpack.c.b16 %v2295, %v2294
    %v2528 = vpack.c.b16 %v2297, %v2296
    %v2529 = vpack.c.b16 %v2299, %v2298
    %v2530 = vpack.c.b16 %v2301, %v2300
    %v2531 = vpack.c.b16 %v2303, %v2302
    %v2532 = vpack.c.b16 %v2305, %v2304
    %v2533 = vpack.c.b16 %v2307, %v2306
    %v2534 = vpack.c.b16 %v2309, %v2308
    %v2535 = vpack.c.b16 %v2311, %v2310
    %v2536 = vpack.c.b16 %v2313, %v2312
    %v2537 = vpack.c.b16 %v2315, %v2314
    %v2538 = vpack.c.b16 %v2317, %v2316
    %v2539 = vpack.c.b16 %v2319, %v2318
    %v2540 = vpack.c.b16 %v2321, %v2320
    %v2541 = vpack.c.b16 %v2323, %v2322
    %v2542 = vpack.c.b16 %v2325, %v2324
    %v2543 = vpack.c.b16 %v2327, %v2326
    %v2544 = vpack.c.b16 %v2329, %v2328
    %v2545 = vpack.c.b16 %v2331, %v2330
    %v2546 = vpack.c.b16 %v2333, %v2332
    %v2547 = vpack.c.b16 %v2335, %v2334
    %v2548 = vpack.c.b16 %v2337, %v2336
    %v2549 = vpack.c.b16 %v2339, %v2338
    %v2550 = vpack.c.b16 %v2341, %v2340
    %v2551 = vpack.c.b16 %v2343, %v2342
    %2760 = vmatpush.bf16.msra.mxu0 %v2351
    %2761 = vmatpush.bf16.msra.mxu0 %v2350
    %2762 = vmatpush.bf16.msra.mxu0 %v2349
    %2763 = vmatpush.bf16.msra.mxu0 %v2348
    %2764 = vmatpush.bf16.msra.mxu0 %v2347
    %2765 = vmatpush.bf16.msra.mxu0 %v2346
    %2766 = vmatpush.bf16.msra.mxu0 %v2345
    %2767 = vmatpush.bf16.msra.mxu0 %v2344
    %2768 = vmatmul.bf16.gmra.mxu0 %v1066
    %v2769 = vpop.f32.mrf.mxu0
    %v2770 = vadd.f32 %v1510, %v2769
    %v2771 = vpop.f32.mrf.mxu0
    %2772 = vdwg.mxu0
    %2773 = vmatpush.bf16.msra.mxu0 %v2359
    %2774 = vmatpush.bf16.msra.mxu0 %v2358
    %2775 = vmatpush.bf16.msra.mxu0 %v2357
    %2776 = vmatpush.bf16.msra.mxu0 %v2356
    %2777 = vmatpush.bf16.msra.mxu0 %v2355
    %2778 = vmatpush.bf16.msra.mxu0 %v2354
    %2779 = vmatpush.bf16.msra.mxu0 %v2353
    %2780 = vmatpush.bf16.msra.mxu0 %v2352
    %2781 = vmatmul.bf16.gmra.mxu0 %v1067
    %v2782 = vpop.f32.mrf.mxu0
    %v2783 = vadd.f32 %v2770, %v2782
    %v2784 = vpop.f32.mrf.mxu0
    %2785 = vdwg.mxu0
    %2786 = vmatpush.bf16.msra.mxu0 %v2367
    %2787 = vmatpush.bf16.msra.mxu0 %v2366
    %2788 = vmatpush.bf16.msra.mxu0 %v2365
    %2789 = vmatpush.bf16.msra.mxu0 %v2364
    %2790 = vmatpush.bf16.msra.mxu0 %v2363
    %2791 = vmatpush.bf16.msra.mxu0 %v2362
    %2792 = vmatpush.bf16.msra.mxu0 %v2361
    %2793 = vmatpush.bf16.msra.mxu0 %v2360
    %2794 = vmatmul.bf16.gmra.mxu0 %v1068
    %v2795 = vpop.f32.mrf.mxu0
    %v2796 = vadd.f32 %v2783, %v2795
    %v2797 = vpop.f32.mrf.mxu0
    %2798 = vdwg.mxu0
    %2799 = vmatpush.bf16.msra.mxu0 %v2375
    %2800 = vmatpush.bf16.msra.mxu0 %v2374
    %2801 = vmatpush.bf16.msra.mxu0 %v2373
    %2802 = vmatpush.bf16.msra.mxu0 %v2372
    %2803 = vmatpush.bf16.msra.mxu0 %v2371
    %2804 = vmatpush.bf16.msra.mxu0 %v2370
    %2805 = vmatpush.bf16.msra.mxu0 %v2369
    %2806 = vmatpush.bf16.msra.mxu0 %v2368
    %2807 = vmatmul.bf16.gmra.mxu0 %v1069
    %v2808 = vpop.f32.mrf.mxu0
    %v2809 = vadd.f32 %v2796, %v2808
    %v2810 = vpop.f32.mrf.mxu0
    %2811 = vdwg.mxu0
    %2812 = vmatpush.bf16.msra.mxu0 %v2383
    %2813 = vmatpush.bf16.msra.mxu0 %v2382
    %2814 = vmatpush.bf16.msra.mxu0 %v2381
    %2815 = vmatpush.bf16.msra.mxu0 %v2380
    %2816 = vmatpush.bf16.msra.mxu0 %v2379
    %2817 = vmatpush.bf16.msra.mxu0 %v2378
    %2818 = vmatpush.bf16.msra.mxu0 %v2377
    %2819 = vmatpush.bf16.msra.mxu0 %v2376
    %2820 = vmatmul.bf16.gmra.mxu0 %v1070
    %v2821 = vpop.f32.mrf.mxu0
    %v2822 = vadd.f32 %v2809, %v2821
    %v2823 = vpop.f32.mrf.mxu0
    %2824 = vdwg.mxu0
    %2825 = vmatpush.bf16.msra.mxu0 %v2391
    %2826 = vmatpush.bf16.msra.mxu0 %v2390
    %2827 = vmatpush.bf16.msra.mxu0 %v2389
    %2828 = vmatpush.bf16.msra.mxu0 %v2388
    %2829 = vmatpush.bf16.msra.mxu0 %v2387
    %2830 = vmatpush.bf16.msra.mxu0 %v2386
    %2831 = vmatpush.bf16.msra.mxu0 %v2385
    %2832 = vmatpush.bf16.msra.mxu0 %v2384
    %2833 = vmatmul.bf16.gmra.mxu0 %v1071
    %v2834 = vpop.f32.mrf.mxu0
    %v2835 = vadd.f32 %v2822, %v2834
    %v2836 = vpop.f32.mrf.mxu0
    %2837 = vdwg.mxu0
    %2838 = vmatpush.bf16.msra.mxu0 %v2399
    %2839 = vmatpush.bf16.msra.mxu0 %v2398
    %2840 = vmatpush.bf16.msra.mxu0 %v2397
    %2841 = vmatpush.bf16.msra.mxu0 %v2396
    %2842 = vmatpush.bf16.msra.mxu0 %v2395
    %2843 = vmatpush.bf16.msra.mxu0 %v2394
    %2844 = vmatpush.bf16.msra.mxu0 %v2393
    %2845 = vmatpush.bf16.msra.mxu0 %v2392
    %2846 = vmatmul.bf16.gmra.mxu0 %v1072
    %v2847 = vpop.f32.mrf.mxu0
    %v2848 = vadd.f32 %v2835, %v2847
    %v2849 = vpop.f32.mrf.mxu0
    %2850 = vdwg.mxu0
    %2851 = vmatpush.bf16.msra.mxu0 %v2407
    %2852 = vmatpush.bf16.msra.mxu0 %v2406
    %2853 = vmatpush.bf16.msra.mxu0 %v2405
    %2854 = vmatpush.bf16.msra.mxu0 %v2404
    %2855 = vmatpush.bf16.msra.mxu0 %v2403
    %2856 = vmatpush.bf16.msra.mxu0 %v2402
    %2857 = vmatpush.bf16.msra.mxu0 %v2401
    %2858 = vmatpush.bf16.msra.mxu0 %v2400
    %2859 = vmatmul.bf16.gmra.mxu0 %v1073
    %v2860 = vpop.f32.mrf.mxu0
    %v2861 = vadd.f32 %v2848, %v2860
    %v2862 = vpop.f32.mrf.mxu0
    %2863 = vdwg.mxu0
    %2864 = vmatpush.bf16.msra.mxu0 %v2415
    %2865 = vmatpush.bf16.msra.mxu0 %v2414
    %2866 = vmatpush.bf16.msra.mxu0 %v2413
    %2867 = vmatpush.bf16.msra.mxu0 %v2412
    %2868 = vmatpush.bf16.msra.mxu0 %v2411
    %2869 = vmatpush.bf16.msra.mxu0 %v2410
    %2870 = vmatpush.bf16.msra.mxu0 %v2409
    %2871 = vmatpush.bf16.msra.mxu0 %v2408
    %2872 = vmatmul.bf16.gmra.mxu0 %v1074
    %v2873 = vpop.f32.mrf.mxu0
    %v2874 = vadd.f32 %v2861, %v2873
    %v2875 = vpop.f32.mrf.mxu0
    %2876 = vdwg.mxu0
    %2877 = vmatpush.bf16.msra.mxu0 %v2423
    %2878 = vmatpush.bf16.msra.mxu0 %v2422
    %2879 = vmatpush.bf16.msra.mxu0 %v2421
    %2880 = vmatpush.bf16.msra.mxu0 %v2420
    %2881 = vmatpush.bf16.msra.mxu0 %v2419
    %2882 = vmatpush.bf16.msra.mxu0 %v2418
    %2883 = vmatpush.bf16.msra.mxu0 %v2417
    %2884 = vmatpush.bf16.msra.mxu0 %v2416
    %2885 = vmatmul.bf16.gmra.mxu0 %v1075
    %v2886 = vpop.f32.mrf.mxu0
    %v2887 = vadd.f32 %v2874, %v2886
    %v2888 = vpop.f32.mrf.mxu0
    %2889 = vdwg.mxu0
    %2890 = vmatpush.bf16.msra.mxu0 %v2431
    %2891 = vmatpush.bf16.msra.mxu0 %v2430
    %2892 = vmatpush.bf16.msra.mxu0 %v2429
    %2893 = vmatpush.bf16.msra.mxu0 %v2428
    %2894 = vmatpush.bf16.msra.mxu0 %v2427
    %2895 = vmatpush.bf16.msra.mxu0 %v2426
    %2896 = vmatpush.bf16.msra.mxu0 %v2425
    %2897 = vmatpush.bf16.msra.mxu0 %v2424
    %2898 = vmatmul.bf16.gmra.mxu0 %v1076
    %v2899 = vpop.f32.mrf.mxu0
    %v2900 = vadd.f32 %v2887, %v2899
    %v2901 = vpop.f32.mrf.mxu0
    %2902 = vdwg.mxu0
    %2903 = vmatpush.bf16.msra.mxu0 %v2439
    %2904 = vmatpush.bf16.msra.mxu0 %v2438
    %2905 = vmatpush.bf16.msra.mxu0 %v2437
    %2906 = vmatpush.bf16.msra.mxu0 %v2436
    %2907 = vmatpush.bf16.msra.mxu0 %v2435
    %2908 = vmatpush.bf16.msra.mxu0 %v2434
    %2909 = vmatpush.bf16.msra.mxu0 %v2433
    %2910 = vmatpush.bf16.msra.mxu0 %v2432
    %2911 = vmatmul.bf16.gmra.mxu0 %v1077
    %v2912 = vpop.f32.mrf.mxu0
    %v2913 = vadd.f32 %v2900, %v2912
    %v2914 = vpop.f32.mrf.mxu0
    %2915 = vdwg.mxu0
    %2916 = vmatpush.bf16.msra.mxu0 %v2447
    %2917 = vmatpush.bf16.msra.mxu0 %v2446
    %2918 = vmatpush.bf16.msra.mxu0 %v2445
    %2919 = vmatpush.bf16.msra.mxu0 %v2444
    %2920 = vmatpush.bf16.msra.mxu0 %v2443
    %2921 = vmatpush.bf16.msra.mxu0 %v2442
    %2922 = vmatpush.bf16.msra.mxu0 %v2441
    %2923 = vmatpush.bf16.msra.mxu0 %v2440
    %2924 = vmatmul.bf16.gmra.mxu0 %v1078
    %v2925 = vpop.f32.mrf.mxu0
    %v2926 = vadd.f32 %v2913, %v2925
    %v2927 = vpop.f32.mrf.mxu0
    %2928 = vdwg.mxu0
    %2929 = vmatpush.bf16.msra.mxu0 %v2455
    %2930 = vmatpush.bf16.msra.mxu0 %v2454
    %2931 = vmatpush.bf16.msra.mxu0 %v2453
    %2932 = vmatpush.bf16.msra.mxu0 %v2452
    %2933 = vmatpush.bf16.msra.mxu0 %v2451
    %2934 = vmatpush.bf16.msra.mxu0 %v2450
    %2935 = vmatpush.bf16.msra.mxu0 %v2449
    %2936 = vmatpush.bf16.msra.mxu0 %v2448
    %2937 = vmatmul.bf16.gmra.mxu0 %v1079
    %v2938 = vpop.f32.mrf.mxu0
    %v2939 = vadd.f32 %v2926, %v2938
    %v2940 = vpop.f32.mrf.mxu0
    %2941 = vdwg.mxu0
    %2942 = vmatpush.bf16.msra.mxu0 %v2463
    %2943 = vmatpush.bf16.msra.mxu0 %v2462
    %2944 = vmatpush.bf16.msra.mxu0 %v2461
    %2945 = vmatpush.bf16.msra.mxu0 %v2460
    %2946 = vmatpush.bf16.msra.mxu0 %v2459
    %2947 = vmatpush.bf16.msra.mxu0 %v2458
    %2948 = vmatpush.bf16.msra.mxu0 %v2457
    %2949 = vmatpush.bf16.msra.mxu0 %v2456
    %2950 = vmatmul.bf16.gmra.mxu0 %v1080
    %v2951 = vpop.f32.mrf.mxu0
    %v2952 = vadd.f32 %v2939, %v2951
    %v2953 = vpop.f32.mrf.mxu0
    %2954 = vdwg.mxu0
    %2955 = vmatpush.bf16.msra.mxu0 %v2471
    %2956 = vmatpush.bf16.msra.mxu0 %v2470
    %2957 = vmatpush.bf16.msra.mxu0 %v2469
    %2958 = vmatpush.bf16.msra.mxu0 %v2468
    %2959 = vmatpush.bf16.msra.mxu0 %v2467
    %2960 = vmatpush.bf16.msra.mxu0 %v2466
    %2961 = vmatpush.bf16.msra.mxu0 %v2465
    %2962 = vmatpush.bf16.msra.mxu0 %v2464
    %2963 = vmatmul.bf16.gmra.mxu0 %v1081
    %v2964 = vpop.f32.mrf.mxu0
    %v2965 = vadd.f32 %v2952, %v2964
    %v2966 = vpop.f32.mrf.mxu0
    %2967 = vdwg.mxu0
    %2968 = vmatpush.bf16.msra.mxu0 %v2479
    %2969 = vmatpush.bf16.msra.mxu0 %v2478
    %2970 = vmatpush.bf16.msra.mxu0 %v2477
    %2971 = vmatpush.bf16.msra.mxu0 %v2476
    %2972 = vmatpush.bf16.msra.mxu0 %v2475
    %2973 = vmatpush.bf16.msra.mxu0 %v2474
    %2974 = vmatpush.bf16.msra.mxu0 %v2473
    %2975 = vmatpush.bf16.msra.mxu0 %v2472
    %2976 = vmatmul.bf16.gmra.mxu0 %v1082
    %v2977 = vpop.f32.mrf.mxu0
    %v2978 = vadd.f32 %v2965, %v2977
    %v2979 = vpop.f32.mrf.mxu0
    %2980 = vdwg.mxu0
    %2981 = vmatpush.bf16.msra.mxu0 %v2487
    %2982 = vmatpush.bf16.msra.mxu0 %v2486
    %2983 = vmatpush.bf16.msra.mxu0 %v2485
    %2984 = vmatpush.bf16.msra.mxu0 %v2484
    %2985 = vmatpush.bf16.msra.mxu0 %v2483
    %2986 = vmatpush.bf16.msra.mxu0 %v2482
    %2987 = vmatpush.bf16.msra.mxu0 %v2481
    %2988 = vmatpush.bf16.msra.mxu0 %v2480
    %2989 = vmatmul.bf16.gmra.mxu0 %v1083
    %v2990 = vpop.f32.mrf.mxu0
    %v2991 = vadd.f32 %v2978, %v2990
    %v2992 = vpop.f32.mrf.mxu0
    %2993 = vdwg.mxu0
    %2994 = vmatpush.bf16.msra.mxu0 %v2495
    %2995 = vmatpush.bf16.msra.mxu0 %v2494
    %2996 = vmatpush.bf16.msra.mxu0 %v2493
    %2997 = vmatpush.bf16.msra.mxu0 %v2492
    %2998 = vmatpush.bf16.msra.mxu0 %v2491
    %2999 = vmatpush.bf16.msra.mxu0 %v2490
    %3000 = vmatpush.bf16.msra.mxu0 %v2489
    %3001 = vmatpush.bf16.msra.mxu0 %v2488
    %3002 = vmatmul.bf16.gmra.mxu0 %v1084
    %v3003 = vpop.f32.mrf.mxu0
    %v3004 = vadd.f32 %v2991, %v3003
    %v3005 = vpop.f32.mrf.mxu0
    %3006 = vdwg.mxu0
    %3007 = vmatpush.bf16.msra.mxu0 %v2503
    %3008 = vmatpush.bf16.msra.mxu0 %v2502
    %3009 = vmatpush.bf16.msra.mxu0 %v2501
    %3010 = vmatpush.bf16.msra.mxu0 %v2500
    %3011 = vmatpush.bf16.msra.mxu0 %v2499
    %3012 = vmatpush.bf16.msra.mxu0 %v2498
    %3013 = vmatpush.bf16.msra.mxu0 %v2497
    %3014 = vmatpush.bf16.msra.mxu0 %v2496
    %3015 = vmatmul.bf16.gmra.mxu0 %v1085
    %v3016 = vpop.f32.mrf.mxu0
    %v3017 = vadd.f32 %v3004, %v3016
    %v3018 = vpop.f32.mrf.mxu0
    %3019 = vdwg.mxu0
    %3020 = vmatpush.bf16.msra.mxu0 %v2511
    %3021 = vmatpush.bf16.msra.mxu0 %v2510
    %3022 = vmatpush.bf16.msra.mxu0 %v2509
    %3023 = vmatpush.bf16.msra.mxu0 %v2508
    %3024 = vmatpush.bf16.msra.mxu0 %v2507
    %3025 = vmatpush.bf16.msra.mxu0 %v2506
    %3026 = vmatpush.bf16.msra.mxu0 %v2505
    %3027 = vmatpush.bf16.msra.mxu0 %v2504
    %3028 = vmatmul.bf16.gmra.mxu0 %v1086
    %v3029 = vpop.f32.mrf.mxu0
    %v3030 = vadd.f32 %v3017, %v3029
    %v3031 = vpop.f32.mrf.mxu0
    %3032 = vdwg.mxu0
    %3033 = vmatpush.bf16.msra.mxu0 %v2519
    %3034 = vmatpush.bf16.msra.mxu0 %v2518
    %3035 = vmatpush.bf16.msra.mxu0 %v2517
    %3036 = vmatpush.bf16.msra.mxu0 %v2516
    %3037 = vmatpush.bf16.msra.mxu0 %v2515
    %3038 = vmatpush.bf16.msra.mxu0 %v2514
    %3039 = vmatpush.bf16.msra.mxu0 %v2513
    %3040 = vmatpush.bf16.msra.mxu0 %v2512
    %3041 = vmatmul.bf16.gmra.mxu0 %v1087
    %v3042 = vpop.f32.mrf.mxu0
    %v3043 = vadd.f32 %v3030, %v3042
    %v3044 = vpop.f32.mrf.mxu0
    %3045 = vdwg.mxu0
    %3046 = vmatpush.bf16.msra.mxu0 %v2527
    %3047 = vmatpush.bf16.msra.mxu0 %v2526
    %3048 = vmatpush.bf16.msra.mxu0 %v2525
    %3049 = vmatpush.bf16.msra.mxu0 %v2524
    %3050 = vmatpush.bf16.msra.mxu0 %v2523
    %3051 = vmatpush.bf16.msra.mxu0 %v2522
    %3052 = vmatpush.bf16.msra.mxu0 %v2521
    %3053 = vmatpush.bf16.msra.mxu0 %v2520
    %3054 = vmatmul.bf16.gmra.mxu0 %v1088
    %v3055 = vpop.f32.mrf.mxu0
    %v3056 = vadd.f32 %v3043, %v3055
    %v3057 = vpop.f32.mrf.mxu0
    %3058 = vdwg.mxu0
    %3059 = vmatpush.bf16.msra.mxu0 %v2535
    %3060 = vmatpush.bf16.msra.mxu0 %v2534
    %3061 = vmatpush.bf16.msra.mxu0 %v2533
    %3062 = vmatpush.bf16.msra.mxu0 %v2532
    %3063 = vmatpush.bf16.msra.mxu0 %v2531
    %3064 = vmatpush.bf16.msra.mxu0 %v2530
    %3065 = vmatpush.bf16.msra.mxu0 %v2529
    %3066 = vmatpush.bf16.msra.mxu0 %v2528
    %3067 = vmatmul.bf16.gmra.mxu0 %v1089
    %v3068 = vpop.f32.mrf.mxu0
    %v3069 = vadd.f32 %v3056, %v3068
    %v3070 = vpop.f32.mrf.mxu0
    %3071 = vdwg.mxu0
    %3072 = vmatpush.bf16.msra.mxu0 %v2543
    %3073 = vmatpush.bf16.msra.mxu0 %v2542
    %3074 = vmatpush.bf16.msra.mxu0 %v2541
    %3075 = vmatpush.bf16.msra.mxu0 %v2540
    %3076 = vmatpush.bf16.msra.mxu0 %v2539
    %3077 = vmatpush.bf16.msra.mxu0 %v2538
    %3078 = vmatpush.bf16.msra.mxu0 %v2537
    %3079 = vmatpush.bf16.msra.mxu0 %v2536
    %3080 = vmatmul.bf16.gmra.mxu0 %v1090
    %v3081 = vpop.f32.mrf.mxu0
    %v3082 = vadd.f32 %v3069, %v3081
    %v3083 = vpop.f32.mrf.mxu0
    %3084 = vdwg.mxu0
    %3085 = vmatpush.bf16.msra.mxu0 %v2551
    %3086 = vmatpush.bf16.msra.mxu0 %v2550
    %3087 = vmatpush.bf16.msra.mxu0 %v2549
    %3088 = vmatpush.bf16.msra.mxu0 %v2548
    %3089 = vmatpush.bf16.msra.mxu0 %v2547
    %3090 = vmatpush.bf16.msra.mxu0 %v2546
    %3091 = vmatpush.bf16.msra.mxu0 %v2545
    %3092 = vmatpush.bf16.msra.mxu0 %v2544
    %3093 = vmatmul.bf16.gmra.mxu0 %v1091
    %v3094 = vpop.f32.mrf.mxu0
    %v3095 = vadd.f32 %v3082, %v3094
    %v3096 = vpop.f32.mrf.mxu0
    %3097 = vdwg.mxu0
    %v3098 = vmax.f32 %v3095, 0.0
    %v3099 = vpack.c.bf16 %v3098, %v3098
    %v3100 = vld [vmem:[%s5] sm:$0xf]
    %v3101 = vld [vmem:[%s5 + $0x4] sm:$0xf]
    %v3102 = vld [vmem:[%s5 + $0x8] sm:$0xf]
    %v3103 = vld [vmem:[%s5 + $0xc] sm:$0xf]
    %v3104 = vld [vmem:[%s5 + $0x10] sm:$0xf]
    %v3105 = vld [vmem:[%s5 + $0x14] sm:$0xf]
    %v3106 = vld [vmem:[%s5 + $0x18] sm:$0xf]
    %v3107 = vld [vmem:[%s5 + $0x1c] sm:$0xf]
    %v3108 = vld [vmem:[%s6] sm:$0x1]
    %v3110 = vperm.slane %v3108, 0
    %v3120 = vunpack.c.l.b16 %v3100
    %v3121 = vunpack.c.l.b16 %v3101
    %v3122 = vunpack.c.l.b16 %v3102
    %v3123 = vunpack.c.l.b16 %v3103
    %v3124 = vunpack.c.l.b16 %v3104
    %v3125 = vunpack.c.l.b16 %v3105
    %v3126 = vunpack.c.l.b16 %v3106
    %v3127 = vunpack.c.l.b16 %v3107
    %v3128 = vpack.c.b16 %v3121, %v3120
    %v3129 = vpack.c.b16 %v3123, %v3122
    %v3130 = vpack.c.b16 %v3125, %v3124
    %v3131 = vpack.c.b16 %v3127, %v3126
    %v3137 = vsel %vm515, %v3099, 0
    %3139 = vmatpush.bf16.msra.mxu0 0
    %3140 = vmatpush.bf16.msra.mxu0 0
    %3141 = vmatpush.bf16.msra.mxu0 0
    %3142 = vmatpush.bf16.msra.mxu0 0
    %3143 = vmatpush.bf16.msra.mxu0 %v3131
    %3144 = vmatpush.bf16.msra.mxu0 %v3130
    %3145 = vmatpush.bf16.msra.mxu0 %v3129
    %3146 = vmatpush.bf16.msra.mxu0 %v3128
    %3147 = vmatmul.bf16.gmra.mxu0 %v3137
    %v3148 = vpop.f32.mrf.mxu0
    %v3149 = vadd.f32 %v3110, %v3148
    %v3150 = vpop.f32.mrf.mxu0
    %3151 = vdwg.mxu0
    %3152 = vst [vmem:[#allocation3] sm:$0xff] %v3149
    // Predicated region
    $region30: #{tpu_custom_call.1} parent=1 // pred_check
      _
    $region31: #{tpu_custom_call.1} parent=1 // pred_check_branch
      %3154 = sbr.rel (0) target = $region33
    $region32: #{tpu_custom_call.1} parent=1 // pred_region
      %3156 = vsyncadd [#allocation4], 0
      %s3158 = sshll.u32 [#allocation3], 4
      %s3159 = int_to_ptr.vmem [resolvable:$true] %s3158
      %s3160 = sshll.u32 %s7, 4
      %s3161 = int_to_ptr.hbm [resolvable:$true] %s3160
      %3163 = dma.vmem_to_hbm [thread:$0]  %s3159, 128, %s3161, [#allocation4]
    $region33: #{tpu_custom_call.1} parent=1 // pred_fallthru
      _
    // Predicated region
    $region34: #{tpu_custom_call.1} parent=1 // pred_check
      _
    $region35: #{tpu_custom_call.1} parent=1 // pred_check_branch
      %3165 = sbr.rel (0) target = $region37
    $region36: #{tpu_custom_call.1} parent=1 // pred_region
      %3167 = dma.done [#allocation4], 128
    $region37: #{tpu_custom_call.1} parent=1 // pred_fallthru
      _
    %3168 = vsyncpa [#allocation4], 1

</llo_original>
